<compile_context>
chip_gen: v6e
topology: v6e:2x2x1
jax: 0.10.0
libtpu: 0.0.40
codegen_flags: <defaults>
</compile_context>

<pallas_src>
import functools
import math

import jax
import jax.numpy as jnp
from jax.experimental import pallas as pl
from jax.experimental.pallas import tpu as pltpu

VMEM_SPEC = pl.BlockSpec(memory_space=pltpu.MemorySpace.VMEM)


# ----------------------------------------------------------------------------
# Fused kernel: whole combiner forward in one pallas_call
# ----------------------------------------------------------------------------
def _combiner_kernel(comb_ref, params_ref, out_ref, *, index, B, N, T):
    f32 = jnp.float32

    def get(name):
        off, din, dout = index[name]
        return params_ref[off:off + din, :dout]

    def mm(a, b):
        return jnp.dot(a, b, preferred_element_type=f32)

    def silu(y):
        # y * sigmoid(y); sigmoid via a single EUP tanh.
        return y * (0.5 * jnp.tanh(0.5 * y) + 0.5)

    def lin(x, name, act=False):
        y = mm(x, get(name + '_w')) + get(name + '_b')
        return silu(y) if act else y

    def layernorm(x, g, b):
        mu = jnp.mean(x, axis=-1, keepdims=True)
        xc = x - mu
        var = jnp.mean(xc * xc, axis=-1, keepdims=True)
        return xc * jax.lax.rsqrt(var + 1e-5) * g + b

    def group_reduce(x, op):                 # (B*N, D) -> (B, D), reduce over conformers
        return jnp.concatenate(
            [op(x[b * N:(b + 1) * N, :], axis=0, keepdims=True) for b in range(B)],
            axis=0)

    def group_mean(x):
        return group_reduce(x, jnp.mean)

    def group_sum(x):
        return group_reduce(x, jnp.sum)

    def emit(slot, chunk):                   # (B, T) chunk at a 128-aligned column base
        out_ref[:, slot * 128:slot * 128 + T] = chunk

    comb = comb_ref[...]                     # (B*N, T) = [scalar | flattened vector]

    # ---- 1) mean pooling ----------------------------------------------------
    emit(0, group_mean(comb))

    # ---- 2) DeepSets (scalar/vector branches fused block-diagonally) --------
    h = lin(lin(comb, 'ds_phi1', True), 'ds_phi2', True)
    emit(1, lin(lin(group_mean(h), 'ds_rho1', True), 'ds_rho2'))

    # ---- 3) SelfAttention (per-channel softmax over conformers) -------------
    scores = lin(comb, 'sa_attn')
    values = lin(comb, 'sa_value')
    m = jnp.max(scores, axis=0, keepdims=True)     # global per-channel max: exact
    e = jnp.exp(scores - m)
    attended = group_sum(e * values) / group_sum(e)
    emit(2, lin(lin(attended, 'sa_out1', True), 'sa_out2'))

    # ---- 4) ImprovedDeepSets -------------------------------------------------
    h = lin(lin(lin(comb, 'ids_phi1', True), 'ids_phi2', True), 'ids_phi3', True)
    seg = get('segnorm')                     # (T, T) per-segment mean matrix
    mu = mm(h, seg)
    xc = h - mu
    var = mm(xc * xc, seg)
    h = xc * jax.lax.rsqrt(var + 1e-5) * get('ids_ln_g') + get('ids_ln_b')
    emit(3, lin(lin(lin(group_mean(h), 'ids_rho1', True), 'ids_rho2', True), 'ids_rho3'))

    # ---- 5) ImprovedSelfAttention (MHA: seq axis = molecules B, batch = N) --
    q = lin(comb, 'isa_wq')                  # 1/sqrt(dh) folded into Wq/bq at pack time
    k = lin(comb, 'isa_wk')
    v = lin(comb, 'isa_wv')
    hmask = get('head_mask')                 # (T, H)
    hmask_t = get('head_mask_t')             # (H, T)

    qb = [q[i * N:(i + 1) * N, :] for i in range(B)]
    kb = [k[j * N:(j + 1) * N, :] for j in range(B)]
    vb = [v[j * N:(j + 1) * N, :] for j in range(B)]

    # All (i, j) query-key products stacked -> ONE head-reduce matmul.
    prod = jnp.concatenate([qb[i] * kb[j] for i in range(B) for j in range(B)], axis=0)
    s_h = mm(prod, hmask)                    # (B*B*N, H) per-head scores

    w_blocks = []
    for i in range(B):                       # softmax over key position j (B tiny, static)
        sij = [s_h[(i * B + j) * N:(i * B + j + 1) * N, :] for j in range(B)]
        m_i = sij[0]
        for s in sij[1:]:
            m_i = jnp.maximum(m_i, s)
        eij = [jnp.exp(s - m_i) for s in sij]
        den = eij[0]
        for ev in eij[1:]:
            den = den + ev
        inv = 1.0 / den
        w_blocks.extend([ev * inv for ev in eij])
    w_stack = jnp.concatenate(w_blocks, axis=0)          # (B*B*N, H)

    # ONE expansion matmul back to channels, weight the values, reduce over j.
    contrib = mm(w_stack, hmask_t) * jnp.concatenate(
        [vb[j] for _ in range(B) for j in range(B)], axis=0)
    attn_rows = []
    for i in range(B):
        o_i = contrib[(i * B) * N:(i * B) * N + N, :]
        for j in range(1, B):
            o_i = o_i + contrib[(i * B + j) * N:(i * B + j + 1) * N, :]
        attn_rows.append(o_i)
    attn = jnp.concatenate(attn_rows, axis=0)            # (B*N, T)

    attn_out = lin(attn, 'isa_wo')
    x1 = layernorm(attn_out + comb, get('isa_ln1_g'), get('isa_ln1_b'))
    f = lin(lin(x1, 'isa_ffn1', True), 'isa_ffn2')
    y = layernorm(f + x1, get('isa_ln2_g'), get('isa_ln2_b'))
    emit(4, lin(lin(group_mean(y), 'isa_out1', True), 'isa_out2'))


# ----------------------------------------------------------------------------
# Parameter packing: one contiguous, lane-dense, 8-row-aligned f32 buffer
# ----------------------------------------------------------------------------
class _Packer:
    def __init__(self):
        self.items = []

    def add(self, name, arr):
        arr = jnp.asarray(arr, jnp.float32)
        if arr.ndim == 1:
            arr = arr.reshape(1, -1)
        self.items.append((name, arr))

    def add_linear(self, name, wb):
        w, b = wb
        self.add(name + '_w', w)
        self.add(name + '_b', jnp.reshape(b, (1, -1)))

    def pack(self):
        width = max(a.shape[1] for _, a in self.items)
        width = ((width + 127) // 128) * 128
        index, blocks, off = {}, [], 0
        for name, a in self.items:
            din, dout = a.shape
            rows = ((din + 7) // 8) * 8      # keep every param 8-sublane aligned
            blk = jnp.zeros((rows, width), jnp.float32).at[:din, :dout].set(a)
            index[name] = (off, din, dout)
            blocks.append(blk)
            off += rows
        return jnp.concatenate(blocks, axis=0), index


def _blockdiag(wb_a, wb_b):
    (wa, ba), (wb_, bb) = wb_a, wb_b
    w = jnp.zeros((wa.shape[0] + wb_.shape[0], wa.shape[1] + wb_.shape[1]), jnp.float32)
    w = w.at[:wa.shape[0], :wa.shape[1]].set(wa)
    w = w.at[wa.shape[0]:, wa.shape[1]:].set(wb_)
    return w, jnp.concatenate([ba, bb])


def _colconcat(wb_a, wb_b):
    (wa, ba), (wb_, bb) = wb_a, wb_b
    return jnp.concatenate([wa, wb_], axis=1), jnp.concatenate([ba, bb])


def pack_params(p, S, V, H):
    """Fuses/packs raw (din, dout)-layout params into one kernel buffer.

    NOTE: weights are in x @ W + b layout. A real PyTorch checkpoint must be
    transposed (and nn.MultiheadAttention's packed in_proj split into Wq/Wk/Wv)
    before packing, otherwise results will be silently wrong.
    """
    V3 = 3 * V
    T = S + V3
    dh = T // H
    pk = _Packer()

    # constants used by the kernel
    head_mask = jnp.repeat(jnp.eye(H, dtype=jnp.float32), dh, axis=0)   # (T, H)
    pk.add('head_mask', head_mask)
    pk.add('head_mask_t', head_mask.T)
    seg = jnp.zeros((T, T), jnp.float32)
    seg = seg.at[:S, :S].set(1.0 / S)
    seg = seg.at[S:, S:].set(1.0 / V3)
    pk.add('segnorm', seg)

    ds = p['deep_sets']
    pk.add_linear('ds_phi1', _blockdiag(ds['phi_s1'], ds['phi_v1']))
    pk.add_linear('ds_phi2', _blockdiag(ds['phi_s2'], ds['phi_v2']))
    pk.add_linear('ds_rho1', _blockdiag(ds['rho_s1'], ds['rho_v1']))
    pk.add_linear('ds_rho2', _blockdiag(ds['rho_s2'], ds['rho_v2']))

    sa = p['self_attention']
    pk.add_linear('sa_attn', sa['attention'])
    pk.add_linear('sa_value', sa['value'])
    pk.add_linear('sa_out1', _colconcat(sa['out_s1'], sa['out_v1']))
    pk.add_linear('sa_out2', _blockdiag(sa['out_s2'], sa['out_v2']))

    ids = p['improved_deep_sets']
    pk.add_linear('ids_phi1', _blockdiag(ids['phi_s1'], ids['phi_v1']))
    pk.add_linear('ids_phi2', _blockdiag(ids['phi_s2'], ids['phi_v2']))
    pk.add_linear('ids_phi3', _blockdiag(ids['phi_s3'], ids['phi_v3']))
    pk.add('ids_ln_g', jnp.concatenate([ids['ln_s'][0], ids['ln_v'][0]]))
    pk.add('ids_ln_b', jnp.concatenate([ids['ln_s'][1], ids['ln_v'][1]]))
    pk.add_linear('ids_rho1', _blockdiag(ids['rho_s1'], ids['rho_v1']))
    pk.add_linear('ids_rho2', _blockdiag(ids['rho_s2'], ids['rho_v2']))
    pk.add_linear('ids_rho3', _blockdiag(ids['rho_s3'], ids['rho_v3']))

    isa = p['improved_self_attention']
    scale = 1.0 / math.sqrt(dh)
    wq, bq = isa['wq']
    pk.add_linear('isa_wq', (wq * scale, bq * scale))    # fold attention scale into Wq/bq
    pk.add_linear('isa_wk', isa['wk'])
    pk.add_linear('isa_wv', isa['wv'])
    pk.add_linear('isa_wo', isa['wo'])
    pk.add('isa_ln1_g', isa['ln1'][0]); pk.add('isa_ln1_b', isa['ln1'][1])
    pk.add('isa_ln2_g', isa['ln2'][0]); pk.add('isa_ln2_b', isa['ln2'][1])
    pk.add_linear('isa_ffn1', isa['ffn1'])
    pk.add_linear('isa_ffn2', isa['ffn2'])
    pk.add_linear('isa_out1', _colconcat(isa['out_s1'], isa['out_v1']))
    pk.add_linear('isa_out2', _blockdiag(isa['out_s2'], isa['out_v2']))

    return pk.pack()


# ----------------------------------------------------------------------------
# JAX wrapper
# ----------------------------------------------------------------------------
def build_combiner(index, B, N, S, V, H):
    V3 = 3 * V
    T = S + V3
    assert T % H == 0

    kernel = functools.partial(_combiner_kernel, index=index, B=B, N=N, T=T)
    call = pl.pallas_call(
        kernel,
        out_shape=jax.ShapeDtypeStruct((B, 5 * 128), jnp.float32),   # lane-dense slab
        in_specs=[VMEM_SPEC, VMEM_SPEC],
        out_specs=VMEM_SPEC,
    )

    @jax.jit
    def forward(packed, scalar, vector):
        comb = jnp.concatenate(
            [scalar.reshape(B * N, S), vector.reshape(B * N, V3)], axis=-1
        ).astype(jnp.float32)
        slab = call(comb, packed)

        def split(slot):
            base = slot * 128
            return (slab[:, base:base + S],
                    slab[:, base + S:base + T].reshape(B, V, 3))

        return {
            'mean_pooling': split(0),
            'deep_sets': split(1),
            'self_attention': split(2),
            'improved_deep_sets': split(3),
            'improved_self_attention': split(4),
        }

    return forward


# ----------------------------------------------------------------------------
# Deterministic synthetic parameters (x @ W + b layout) + pure-JAX reference
# ----------------------------------------------------------------------------
def _init_linear(key, din, dout):
    k1, k2 = jax.random.split(key)
    bound = 1.0 / math.sqrt(din)
    w = jax.random.uniform(k1, (din, dout), jnp.float32, -bound, bound)
    b = jax.random.uniform(k2, (dout,), jnp.float32, -bound, bound)
    return w, b


def make_params(key, S, V, H):
    V3 = 3 * V
    T = S + V3
    keys = iter(jax.random.split(key, 48))
    nk = lambda: next(keys)
    ln = lambda d: (jnp.ones((d,), jnp.float32), jnp.zeros((d,), jnp.float32))
    p = {}
    p['deep_sets'] = {
        'phi_s1': _init_linear(nk(), S, S), 'phi_s2': _init_linear(nk(), S, S),
        'rho_s1': _init_linear(nk(), S, S), 'rho_s2': _init_linear(nk(), S, S),
        'phi_v1': _init_linear(nk(), V3, V3), 'phi_v2': _init_linear(nk(), V3, V3),
        'rho_v1': _init_linear(nk(), V3, V3), 'rho_v2': _init_linear(nk(), V3, V3),
    }
    p['self_attention'] = {
        'attention': _init_linear(nk(), T, T), 'value': _init_linear(nk(), T, T),
        'out_s1': _init_linear(nk(), T, S), 'out_s2': _init_linear(nk(), S, S),
        'out_v1': _init_linear(nk(), T, V3), 'out_v2': _init_linear(nk(), V3, V3),
    }
    p['improved_deep_sets'] = {
        'phi_s1': _init_linear(nk(), S, 2 * S), 'phi_s2': _init_linear(nk(), 2 * S, 2 * S),
        'phi_s3': _init_linear(nk(), 2 * S, S), 'ln_s': ln(S),
        'rho_s1': _init_linear(nk(), S, 2 * S), 'rho_s2': _init_linear(nk(), 2 * S, 2 * S),
        'rho_s3': _init_linear(nk(), 2 * S, S),
        'phi_v1': _init_linear(nk(), V3, 2 * V3), 'phi_v2': _init_linear(nk(), 2 * V3, 2 * V3),
        'phi_v3': _init_linear(nk(), 2 * V3, V3), 'ln_v': ln(V3),
        'rho_v1': _init_linear(nk(), V3, 2 * V3), 'rho_v2': _init_linear(nk(), 2 * V3, 2 * V3),
        'rho_v3': _init_linear(nk(), 2 * V3, V3),
    }
    p['improved_self_attention'] = {
        'wq': _init_linear(nk(), T, T), 'wk': _init_linear(nk(), T, T),
        'wv': _init_linear(nk(), T, T), 'wo': _init_linear(nk(), T, T),
        'ln1': ln(T), 'ln2': ln(T),
        'ffn1': _init_linear(nk(), T, 4 * T), 'ffn2': _init_linear(nk(), 4 * T, T),
        'out_s1': _init_linear(nk(), T, 2 * S), 'out_s2': _init_linear(nk(), 2 * S, S),
        'out_v1': _init_linear(nk(), T, 6 * V), 'out_v2': _init_linear(nk(), 6 * V, V3),
    }
    return p


def reference_forward(p, scalar, vector, H):
    """Pure-JAX mirror of the PyTorch module (for correctness checking)."""
    B, N, S = scalar.shape
    V = vector.shape[2]
    V3 = 3 * V
    T = S + V3
    silu = jax.nn.silu

    def lin(x, wb):
        w, b = wb
        return x @ w + b

    def ln(x, gb):
        g, b = gb
        mu = x.mean(-1, keepdims=True)
        var = ((x - mu) ** 2).mean(-1, keepdims=True)
        return (x - mu) / jnp.sqrt(var + 1e-5) * g + b

    vec = vector.reshape(B, N, V3)
    comb = jnp.concatenate([scalar, vec], axis=-1)
    out = {'mean_pooling': (scalar.mean(1), vector.mean(1))}

    ds = p['deep_sets']
    hs = silu(lin(silu(lin(scalar, ds['phi_s1'])), ds['phi_s2']))
    so = lin(silu(lin(hs.mean(1), ds['rho_s1'])), ds['rho_s2'])
    hv = silu(lin(silu(lin(vec, ds['phi_v1'])), ds['phi_v2']))
    vo = lin(silu(lin(hv.mean(1), ds['rho_v1'])), ds['rho_v2'])
    out['deep_sets'] = (so, vo.reshape(B, V, 3))

    sa = p['self_attention']
    w = jax.nn.softmax(lin(comb, sa['attention']), axis=1)
    attended = (w * lin(comb, sa['value'])).sum(1)
    so = lin(silu(lin(attended, sa['out_s1'])), sa['out_s2'])
    vo = lin(silu(lin(attended, sa['out_v1'])), sa['out_v2'])
    out['self_attention'] = (so, vo.reshape(B, V, 3))

    ids = p['improved_deep_sets']
    hs = silu(lin(silu(lin(silu(lin(scalar, ids['phi_s1'])), ids['phi_s2'])), ids['phi_s3']))
    hs = ln(hs, ids['ln_s'])
    so = lin(silu(lin(silu(lin(hs.mean(1), ids['rho_s1'])), ids['rho_s2'])), ids['rho_s3'])
    hv = silu(lin(silu(lin(silu(lin(vec, ids['phi_v1'])), ids['phi_v2'])), ids['phi_v3']))
    hv = ln(hv, ids['ln_v'])
    vo = lin(silu(lin(silu(lin(hv.mean(1), ids['rho_v1'])), ids['rho_v2'])), ids['rho_v3'])
    out['improved_deep_sets'] = (so, vo.reshape(B, V, 3))

    isa = p['improved_self_attention']
    dh = T // H
    q = lin(comb, isa['wq']).reshape(B, N, H, dh)
    k = lin(comb, isa['wk']).reshape(B, N, H, dh)
    v = lin(comb, isa['wv']).reshape(B, N, H, dh)
    scores = jnp.einsum('inhd,jnhd->nhij', q, k) / math.sqrt(dh)
    aw = jax.nn.softmax(scores, axis=-1)
    attn = jnp.einsum('nhij,jnhd->inhd', aw, v).reshape(B, N, T)
    attn = lin(attn, isa['wo'])
    x1 = ln(attn + comb, isa['ln1'])
    f = lin(silu(lin(x1, isa['ffn1'])), isa['ffn2'])
    y = ln(f + x1, isa['ln2'])
    pooled = y.mean(1)
    so = lin(silu(lin(pooled, isa['out_s1'])), isa['out_s2'])
    vo = lin(silu(lin(pooled, isa['out_v1'])), isa['out_v2'])
    out['improved_self_attention'] = (so, vo.reshape(B, V, 3))
    return out


# ----------------------------------------------------------------------------
# Demo
# ----------------------------------------------------------------------------
if __name__ == "__main__":
    S, V, H = 16, 8, 4          # scalar_dim, vector_dim, num_heads (T = 40, dh = 10)
    B, N = 2, 8                 # ensembles, conformers per ensemble

    key = jax.random.PRNGKey(0)
    kp, ks, kv = jax.random.split(key, 3)
    raw_params = make_params(kp, S, V, H)
    packed, index = pack_params(raw_params, S, V, H)

    scalar = jax.random.normal(ks, (B, N, S), jnp.float32)
    vector = jax.random.normal(kv, (B, N, V, 3), jnp.float32)

    forward = build_combiner(index, B, N, S, V, H)
    out = jax.block_until_ready(forward(packed, scalar, vector))

    # shape contract of the PyTorch module
    for name in ('mean_pooling', 'deep_sets', 'self_attention',
                 'improved_deep_sets', 'improved_self_attention'):
        assert out[name][0].shape == (B, S), name
        assert out[name][1].shape == (B, V, 3), name

    # numerical check against the pure-JAX reference of the PyTorch module
    ref = reference_forward(raw_params, scalar, vector, H)
    assert float(jnp.max(jnp.abs(out['mean_pooling'][0] - scalar.mean(1)))) < 1e-4
    for name in ref:
        for got, want in zip(out[name], ref[name]):
            err = float(jnp.max(jnp.abs(got - want)))
            assert err < 5e-2, (name, err)   # loose bound: default bf16 MXU matmuls

    print("KERNEL_OK")
</pallas_src>

<mosaic_0001>
module attributes {stable_mosaic.version = 11 : i64} {
  func.func @_combiner_kernel(%arg0: memref<16x40xf32, #tpu.memory_space<vmem>>, %arg1: memref<1512x256xf32, #tpu.memory_space<vmem>>, %arg2: memref<2x640xf32, #tpu.memory_space<vmem>>) attributes {dimension_semantics = [], scalar_prefetch = 0 : i64, scratch_operands = 0 : i64, tpu.core_type = #tpu.core_type<tc>} {
    %c0 = arith.constant 0 : index
    %c0_0 = arith.constant 0 : index
    %0 = vector.load %arg0[%c0, %c0_0] : memref<16x40xf32, #tpu.memory_space<vmem>>, vector<16x40xf32>
    %1 = vector.extract_strided_slice %0 {offsets = [0, 0], sizes = [8, 40], strides = [1, 1]} : vector<16x40xf32> to vector<8x40xf32>
    %cst = arith.constant dense<0.000000e+00> : vector<40xf32>
    %2 = vector.multi_reduction <add>, %1, %cst [0] : vector<8x40xf32> to vector<40xf32>
    %3 = vector.shape_cast %2 : vector<40xf32> to vector<1x40xf32>
    %cst_1 = arith.constant 8.000000e+00 : f32
    %4 = vector.broadcast %cst_1 : f32 to vector<1x40xf32>
    %5 = arith.divf %3, %4 : vector<1x40xf32>
    %6 = vector.extract_strided_slice %0 {offsets = [8, 0], sizes = [8, 40], strides = [1, 1]} : vector<16x40xf32> to vector<8x40xf32>
    %cst_2 = arith.constant dense<0.000000e+00> : vector<40xf32>
    %7 = vector.multi_reduction <add>, %6, %cst_2 [0] : vector<8x40xf32> to vector<40xf32>
    %8 = vector.shape_cast %7 : vector<40xf32> to vector<1x40xf32>
    %cst_3 = arith.constant 8.000000e+00 : f32
    %9 = vector.broadcast %cst_3 : f32 to vector<1x40xf32>
    %10 = arith.divf %8, %9 : vector<1x40xf32>
    %11 = tpu.concatenate %5, %10 in 0 : vector<1x40xf32>, vector<1x40xf32> -> vector<2x40xf32>
    %c0_4 = arith.constant 0 : index
    %c0_5 = arith.constant 0 : index
    %12 = vector.load %arg2[%c0_4, %c0_5] : memref<2x640xf32, #tpu.memory_space<vmem>>, vector<2x40xf32>
    tpu.vector_store %arg2[%c0_4, %c0_5], %11 {strides = array<i32>} : memref<2x640xf32, #tpu.memory_space<vmem>>, vector<2x40xf32>,
    %c88 = arith.constant 88 : index
    %c0_6 = arith.constant 0 : index
    %13 = vector.load %arg1[%c88, %c0_6] : memref<1512x256xf32, #tpu.memory_space<vmem>>, vector<40x40xf32>
    %cst_7 = arith.constant dense<0.000000e+00> : vector<16x40xf32>
    %14 = tpu.matmul %0, %13, %cst_7 {dimension_numbers = #tpu.dot_dimension_numbers<[1], [0], [0], [1], [0, 0, 1, 1], [], []>} : vector<16x40xf32>, vector<40x40xf32>, vector<16x40xf32> -> vector<16x40xf32>
    %c128 = arith.constant 128 : index
    %c0_8 = arith.constant 0 : index
    %15 = vector.load %arg1[%c128, %c0_8] : memref<1512x256xf32, #tpu.memory_space<vmem>>, vector<1x40xf32>
    %16 = vector.broadcast %15 : vector<1x40xf32> to vector<16x40xf32>
    %17 = arith.addf %14, %16 : vector<16x40xf32>
    %cst_9 = arith.constant 5.000000e-01 : f32
    %18 = vector.broadcast %cst_9 : f32 to vector<16x40xf32>
    %19 = arith.mulf %18, %17 : vector<16x40xf32>
    %20 = math.tanh %19 : vector<16x40xf32>
    %cst_10 = arith.constant 5.000000e-01 : f32
    %21 = vector.broadcast %cst_10 : f32 to vector<16x40xf32>
    %22 = arith.mulf %21, %20 : vector<16x40xf32>
    %cst_11 = arith.constant 5.000000e-01 : f32
    %23 = vector.broadcast %cst_11 : f32 to vector<16x40xf32>
    %24 = arith.addf %22, %23 : vector<16x40xf32>
    %25 = arith.mulf %17, %24 : vector<16x40xf32>
    %c136 = arith.constant 136 : index
    %c0_12 = arith.constant 0 : index
    %26 = vector.load %arg1[%c136, %c0_12] : memref<1512x256xf32, #tpu.memory_space<vmem>>, vector<40x40xf32>
    %cst_13 = arith.constant dense<0.000000e+00> : vector<16x40xf32>
    %27 = tpu.matmul %25, %26, %cst_13 {dimension_numbers = #tpu.dot_dimension_numbers<[1], [0], [0], [1], [0, 0, 1, 1], [], []>} : vector<16x40xf32>, vector<40x40xf32>, vector<16x40xf32> -> vector<16x40xf32>
    %c176 = arith.constant 176 : index
    %c0_14 = arith.constant 0 : index
    %28 = vector.load %arg1[%c176, %c0_14] : memref<1512x256xf32, #tpu.memory_space<vmem>>, vector<1x40xf32>
    %29 = vector.broadcast %28 : vector<1x40xf32> to vector<16x40xf32>
    %30 = arith.addf %27, %29 : vector<16x40xf32>
    %cst_15 = arith.constant 5.000000e-01 : f32
    %31 = vector.broadcast %cst_15 : f32 to vector<16x40xf32>
    %32 = arith.mulf %31, %30 : vector<16x40xf32>
    %33 = math.tanh %32 : vector<16x40xf32>
    %cst_16 = arith.constant 5.000000e-01 : f32
    %34 = vector.broadcast %cst_16 : f32 to vector<16x40xf32>
    %35 = arith.mulf %34, %33 : vector<16x40xf32>
    %cst_17 = arith.constant 5.000000e-01 : f32
    %36 = vector.broadcast %cst_17 : f32 to vector<16x40xf32>
    %37 = arith.addf %35, %36 : vector<16x40xf32>
    %38 = arith.mulf %30, %37 : vector<16x40xf32>
    %39 = vector.extract_strided_slice %38 {offsets = [0, 0], sizes = [8, 40], strides = [1, 1]} : vector<16x40xf32> to vector<8x40xf32>
    %cst_18 = arith.constant dense<0.000000e+00> : vector<40xf32>
    %40 = vector.multi_reduction <add>, %39, %cst_18 [0] : vector<8x40xf32> to vector<40xf32>
    %41 = vector.shape_cast %40 : vector<40xf32> to vector<1x40xf32>
    %cst_19 = arith.constant 8.000000e+00 : f32
    %42 = vector.broadcast %cst_19 : f32 to vector<1x40xf32>
    %43 = arith.divf %41, %42 : vector<1x40xf32>
    %44 = vector.extract_strided_slice %38 {offsets = [8, 0], sizes = [8, 40], strides = [1, 1]} : vector<16x40xf32> to vector<8x40xf32>
    %cst_20 = arith.constant dense<0.000000e+00> : vector<40xf32>
    %45 = vector.multi_reduction <add>, %44, %cst_20 [0] : vector<8x40xf32> to vector<40xf32>
    %46 = vector.shape_cast %45 : vector<40xf32> to vector<1x40xf32>
    %cst_21 = arith.constant 8.000000e+00 : f32
    %47 = vector.broadcast %cst_21 : f32 to vector<1x40xf32>
    %48 = arith.divf %46, %47 : vector<1x40xf32>
    %49 = tpu.concatenate %43, %48 in 0 : vector<1x40xf32>, vector<1x40xf32> -> vector<2x40xf32>
    %c184 = arith.constant 184 : index
    %c0_22 = arith.constant 0 : index
    %50 = vector.load %arg1[%c184, %c0_22] : memref<1512x256xf32, #tpu.memory_space<vmem>>, vector<40x40xf32>
    %cst_23 = arith.constant dense<0.000000e+00> : vector<2x40xf32>
    %51 = tpu.matmul %49, %50, %cst_23 {dimension_numbers = #tpu.dot_dimension_numbers<[1], [0], [0], [1], [0, 0, 1, 1], [], []>} : vector<2x40xf32>, vector<40x40xf32>, vector<2x40xf32> -> vector<2x40xf32>
    %c224 = arith.constant 224 : index
    %c0_24 = arith.constant 0 : index
    %52 = vector.load %arg1[%c224, %c0_24] : memref<1512x256xf32, #tpu.memory_space<vmem>>, vector<1x40xf32>
    %53 = vector.broadcast %52 : vector<1x40xf32> to vector<2x40xf32>
    %54 = arith.addf %51, %53 : vector<2x40xf32>
    %cst_25 = arith.constant 5.000000e-01 : f32
    %55 = vector.broadcast %cst_25 : f32 to vector<2x40xf32>
    %56 = arith.mulf %55, %54 : vector<2x40xf32>
    %57 = math.tanh %56 : vector<2x40xf32>
    %cst_26 = arith.constant 5.000000e-01 : f32
    %58 = vector.broadcast %cst_26 : f32 to vector<2x40xf32>
    %59 = arith.mulf %58, %57 : vector<2x40xf32>
    %cst_27 = arith.constant 5.000000e-01 : f32
    %60 = vector.broadcast %cst_27 : f32 to vector<2x40xf32>
    %61 = arith.addf %59, %60 : vector<2x40xf32>
    %62 = arith.mulf %54, %61 : vector<2x40xf32>
    %c232 = arith.constant 232 : index
    %c0_28 = arith.constant 0 : index
    %63 = vector.load %arg1[%c232, %c0_28] : memref<1512x256xf32, #tpu.memory_space<vmem>>, vector<40x40xf32>
    %cst_29 = arith.constant dense<0.000000e+00> : vector<2x40xf32>
    %64 = tpu.matmul %62, %63, %cst_29 {dimension_numbers = #tpu.dot_dimension_numbers<[1], [0], [0], [1], [0, 0, 1, 1], [], []>} : vector<2x40xf32>, vector<40x40xf32>, vector<2x40xf32> -> vector<2x40xf32>
    %c272 = arith.constant 272 : index
    %c0_30 = arith.constant 0 : index
    %65 = vector.load %arg1[%c272, %c0_30] : memref<1512x256xf32, #tpu.memory_space<vmem>>, vector<1x40xf32>
    %66 = vector.broadcast %65 : vector<1x40xf32> to vector<2x40xf32>
    %67 = arith.addf %64, %66 : vector<2x40xf32>
    %c0_31 = arith.constant 0 : index
    %c128_32 = arith.constant 128 : index
    %68 = vector.load %arg2[%c0_31, %c128_32] : memref<2x640xf32, #tpu.memory_space<vmem>>, vector<2x40xf32>
    tpu.vector_store %arg2[%c0_31, %c128_32], %67 {strides = array<i32>} : memref<2x640xf32, #tpu.memory_space<vmem>>, vector<2x40xf32>,
    %c280 = arith.constant 280 : index
    %c0_33 = arith.constant 0 : index
    %69 = vector.load %arg1[%c280, %c0_33] : memref<1512x256xf32, #tpu.memory_space<vmem>>, vector<40x40xf32>
    %cst_34 = arith.constant dense<0.000000e+00> : vector<16x40xf32>
    %70 = tpu.matmul %0, %69, %cst_34 {dimension_numbers = #tpu.dot_dimension_numbers<[1], [0], [0], [1], [0, 0, 1, 1], [], []>} : vector<16x40xf32>, vector<40x40xf32>, vector<16x40xf32> -> vector<16x40xf32>
    %c320 = arith.constant 320 : index
    %c0_35 = arith.constant 0 : index
    %71 = vector.load %arg1[%c320, %c0_35] : memref<1512x256xf32, #tpu.memory_space<vmem>>, vector<1x40xf32>
    %72 = vector.broadcast %71 : vector<1x40xf32> to vector<16x40xf32>
    %73 = arith.addf %70, %72 : vector<16x40xf32>
    %c328 = arith.constant 328 : index
    %c0_36 = arith.constant 0 : index
    %74 = vector.load %arg1[%c328, %c0_36] : memref<1512x256xf32, #tpu.memory_space<vmem>>, vector<40x40xf32>
    %cst_37 = arith.constant dense<0.000000e+00> : vector<16x40xf32>
    %75 = tpu.matmul %0, %74, %cst_37 {dimension_numbers = #tpu.dot_dimension_numbers<[1], [0], [0], [1], [0, 0, 1, 1], [], []>} : vector<16x40xf32>, vector<40x40xf32>, vector<16x40xf32> -> vector<16x40xf32>
    %c368 = arith.constant 368 : index
    %c0_38 = arith.constant 0 : index
    %76 = vector.load %arg1[%c368, %c0_38] : memref<1512x256xf32, #tpu.memory_space<vmem>>, vector<1x40xf32>
    %77 = vector.broadcast %76 : vector<1x40xf32> to vector<16x40xf32>
    %78 = arith.addf %75, %77 : vector<16x40xf32>
    %cst_39 = arith.constant dense<0xFF800000> : vector<40xf32>
    %79 = vector.multi_reduction <maximumf>, %73, %cst_39 [0] : vector<16x40xf32> to vector<40xf32>
    %80 = vector.shape_cast %79 : vector<40xf32> to vector<1x40xf32>
    %81 = vector.broadcast %80 : vector<1x40xf32> to vector<16x40xf32>
    %82 = arith.subf %73, %81 : vector<16x40xf32>
    %83 = math.exp %82 : vector<16x40xf32>
    %84 = arith.mulf %83, %78 : vector<16x40xf32>
    %85 = vector.extract_strided_slice %84 {offsets = [0, 0], sizes = [8, 40], strides = [1, 1]} : vector<16x40xf32> to vector<8x40xf32>
    %cst_40 = arith.constant dense<0.000000e+00> : vector<40xf32>
    %86 = vector.multi_reduction <add>, %85, %cst_40 [0] : vector<8x40xf32> to vector<40xf32>
    %87 = vector.shape_cast %86 : vector<40xf32> to vector<1x40xf32>
    %88 = vector.extract_strided_slice %84 {offsets = [8, 0], sizes = [8, 40], strides = [1, 1]} : vector<16x40xf32> to vector<8x40xf32>
    %cst_41 = arith.constant dense<0.000000e+00> : vector<40xf32>
    %89 = vector.multi_reduction <add>, %88, %cst_41 [0] : vector<8x40xf32> to vector<40xf32>
    %90 = vector.shape_cast %89 : vector<40xf32> to vector<1x40xf32>
    %91 = tpu.concatenate %87, %90 in 0 : vector<1x40xf32>, vector<1x40xf32> -> vector<2x40xf32>
    %92 = vector.extract_strided_slice %83 {offsets = [0, 0], sizes = [8, 40], strides = [1, 1]} : vector<16x40xf32> to vector<8x40xf32>
    %cst_42 = arith.constant dense<0.000000e+00> : vector<40xf32>
    %93 = vector.multi_reduction <add>, %92, %cst_42 [0] : vector<8x40xf32> to vector<40xf32>
    %94 = vector.shape_cast %93 : vector<40xf32> to vector<1x40xf32>
    %95 = vector.extract_strided_slice %83 {offsets = [8, 0], sizes = [8, 40], strides = [1, 1]} : vector<16x40xf32> to vector<8x40xf32>
    %cst_43 = arith.constant dense<0.000000e+00> : vector<40xf32>
    %96 = vector.multi_reduction <add>, %95, %cst_43 [0] : vector<8x40xf32> to vector<40xf32>
    %97 = vector.shape_cast %96 : vector<40xf32> to vector<1x40xf32>
    %98 = tpu.concatenate %94, %97 in 0 : vector<1x40xf32>, vector<1x40xf32> -> vector<2x40xf32>
    %99 = arith.divf %91, %98 : vector<2x40xf32>
    %c376 = arith.constant 376 : index
    %c0_44 = arith.constant 0 : index
    %100 = vector.load %arg1[%c376, %c0_44] : memref<1512x256xf32, #tpu.memory_space<vmem>>, vector<40x40xf32>
    %cst_45 = arith.constant dense<0.000000e+00> : vector<2x40xf32>
    %101 = tpu.matmul %99, %100, %cst_45 {dimension_numbers = #tpu.dot_dimension_numbers<[1], [0], [0], [1], [0, 0, 1, 1], [], []>} : vector<2x40xf32>, vector<40x40xf32>, vector<2x40xf32> -> vector<2x40xf32>
    %c416 = arith.constant 416 : index
    %c0_46 = arith.constant 0 : index
    %102 = vector.load %arg1[%c416, %c0_46] : memref<1512x256xf32, #tpu.memory_space<vmem>>, vector<1x40xf32>
    %103 = vector.broadcast %102 : vector<1x40xf32> to vector<2x40xf32>
    %104 = arith.addf %101, %103 : vector<2x40xf32>
    %cst_47 = arith.constant 5.000000e-01 : f32
    %105 = vector.broadcast %cst_47 : f32 to vector<2x40xf32>
    %106 = arith.mulf %105, %104 : vector<2x40xf32>
    %107 = math.tanh %106 : vector<2x40xf32>
    %cst_48 = arith.constant 5.000000e-01 : f32
    %108 = vector.broadcast %cst_48 : f32 to vector<2x40xf32>
    %109 = arith.mulf %108, %107 : vector<2x40xf32>
    %cst_49 = arith.constant 5.000000e-01 : f32
    %110 = vector.broadcast %cst_49 : f32 to vector<2x40xf32>
    %111 = arith.addf %109, %110 : vector<2x40xf32>
    %112 = arith.mulf %104, %111 : vector<2x40xf32>
    %c424 = arith.constant 424 : index
    %c0_50 = arith.constant 0 : index
    %113 = vector.load %arg1[%c424, %c0_50] : memref<1512x256xf32, #tpu.memory_space<vmem>>, vector<40x40xf32>
    %cst_51 = arith.constant dense<0.000000e+00> : vector<2x40xf32>
    %114 = tpu.matmul %112, %113, %cst_51 {dimension_numbers = #tpu.dot_dimension_numbers<[1], [0], [0], [1], [0, 0, 1, 1], [], []>} : vector<2x40xf32>, vector<40x40xf32>, vector<2x40xf32> -> vector<2x40xf32>
    %c464 = arith.constant 464 : index
    %c0_52 = arith.constant 0 : index
    %115 = vector.load %arg1[%c464, %c0_52] : memref<1512x256xf32, #tpu.memory_space<vmem>>, vector<1x40xf32>
    %116 = vector.broadcast %115 : vector<1x40xf32> to vector<2x40xf32>
    %117 = arith.addf %114, %116 : vector<2x40xf32>
    %c0_53 = arith.constant 0 : index
    %c256 = arith.constant 256 : index
    %118 = vector.load %arg2[%c0_53, %c256] : memref<2x640xf32, #tpu.memory_space<vmem>>, vector<2x40xf32>
    tpu.vector_store %arg2[%c0_53, %c256], %117 {strides = array<i32>} : memref<2x640xf32, #tpu.memory_space<vmem>>, vector<2x40xf32>,
    %c472 = arith.constant 472 : index
    %c0_54 = arith.constant 0 : index
    %119 = vector.load %arg1[%c472, %c0_54] : memref<1512x256xf32, #tpu.memory_space<vmem>>, vector<40x80xf32>
    %cst_55 = arith.constant dense<0.000000e+00> : vector<16x80xf32>
    %120 = tpu.matmul %0, %119, %cst_55 {dimension_numbers = #tpu.dot_dimension_numbers<[1], [0], [0], [1], [0, 0, 1, 1], [], []>} : vector<16x40xf32>, vector<40x80xf32>, vector<16x80xf32> -> vector<16x80xf32>
    %c512 = arith.constant 512 : index
    %c0_56 = arith.constant 0 : index
    %121 = vector.load %arg1[%c512, %c0_56] : memref<1512x256xf32, #tpu.memory_space<vmem>>, vector<1x80xf32>
    %122 = vector.broadcast %121 : vector<1x80xf32> to vector<16x80xf32>
    %123 = arith.addf %120, %122 : vector<16x80xf32>
    %cst_57 = arith.constant 5.000000e-01 : f32
    %124 = vector.broadcast %cst_57 : f32 to vector<16x80xf32>
    %125 = arith.mulf %124, %123 : vector<16x80xf32>
    %126 = math.tanh %125 : vector<16x80xf32>
    %cst_58 = arith.constant 5.000000e-01 : f32
    %127 = vector.broadcast %cst_58 : f32 to vector<16x80xf32>
    %128 = arith.mulf %127, %126 : vector<16x80xf32>
    %cst_59 = arith.constant 5.000000e-01 : f32
    %129 = vector.broadcast %cst_59 : f32 to vector<16x80xf32>
    %130 = arith.addf %128, %129 : vector<16x80xf32>
    %131 = arith.mulf %123, %130 : vector<16x80xf32>
    %c520 = arith.constant 520 : index
    %c0_60 = arith.constant 0 : index
    %132 = vector.load %arg1[%c520, %c0_60] : memref<1512x256xf32, #tpu.memory_space<vmem>>, vector<80x80xf32>
    %cst_61 = arith.constant dense<0.000000e+00> : vector<16x80xf32>
    %133 = tpu.matmul %131, %132, %cst_61 {dimension_numbers = #tpu.dot_dimension_numbers<[1], [0], [0], [1], [0, 0, 1, 1], [], []>} : vector<16x80xf32>, vector<80x80xf32>, vector<16x80xf32> -> vector<16x80xf32>
    %c600 = arith.constant 600 : index
    %c0_62 = arith.constant 0 : index
    %134 = vector.load %arg1[%c600, %c0_62] : memref<1512x256xf32, #tpu.memory_space<vmem>>, vector<1x80xf32>
    %135 = vector.broadcast %134 : vector<1x80xf32> to vector<16x80xf32>
    %136 = arith.addf %133, %135 : vector<16x80xf32>
    %cst_63 = arith.constant 5.000000e-01 : f32
    %137 = vector.broadcast %cst_63 : f32 to vector<16x80xf32>
    %138 = arith.mulf %137, %136 : vector<16x80xf32>
    %139 = math.tanh %138 : vector<16x80xf32>
    %cst_64 = arith.constant 5.000000e-01 : f32
    %140 = vector.broadcast %cst_64 : f32 to vector<16x80xf32>
    %141 = arith.mulf %140, %139 : vector<16x80xf32>
    %cst_65 = arith.constant 5.000000e-01 : f32
    %142 = vector.broadcast %cst_65 : f32 to vector<16x80xf32>
    %143 = arith.addf %141, %142 : vector<16x80xf32>
    %144 = arith.mulf %136, %143 : vector<16x80xf32>
    %c608 = arith.constant 608 : index
    %c0_66 = arith.constant 0 : index
    %145 = vector.load %arg1[%c608, %c0_66] : memref<1512x256xf32, #tpu.memory_space<vmem>>, vector<80x40xf32>
    %cst_67 = arith.constant dense<0.000000e+00> : vector<16x40xf32>
    %146 = tpu.matmul %144, %145, %cst_67 {dimension_numbers = #tpu.dot_dimension_numbers<[1], [0], [0], [1], [0, 0, 1, 1], [], []>} : vector<16x80xf32>, vector<80x40xf32>, vector<16x40xf32> -> vector<16x40xf32>
    %c688 = arith.constant 688 : index
    %c0_68 = arith.constant 0 : index
    %147 = vector.load %arg1[%c688, %c0_68] : memref<1512x256xf32, #tpu.memory_space<vmem>>, vector<1x40xf32>
    %148 = vector.broadcast %147 : vector<1x40xf32> to vector<16x40xf32>
    %149 = arith.addf %146, %148 : vector<16x40xf32>
    %cst_69 = arith.constant 5.000000e-01 : f32
    %150 = vector.broadcast %cst_69 : f32 to vector<16x40xf32>
    %151 = arith.mulf %150, %149 : vector<16x40xf32>
    %152 = math.tanh %151 : vector<16x40xf32>
    %cst_70 = arith.constant 5.000000e-01 : f32
    %153 = vector.broadcast %cst_70 : f32 to vector<16x40xf32>
    %154 = arith.mulf %153, %152 : vector<16x40xf32>
    %cst_71 = arith.constant 5.000000e-01 : f32
    %155 = vector.broadcast %cst_71 : f32 to vector<16x40xf32>
    %156 = arith.addf %154, %155 : vector<16x40xf32>
    %157 = arith.mulf %149, %156 : vector<16x40xf32>
    %c48 = arith.constant 48 : index
    %c0_72 = arith.constant 0 : index
    %158 = vector.load %arg1[%c48, %c0_72] : memref<1512x256xf32, #tpu.memory_space<vmem>>, vector<40x40xf32>
    %cst_73 = arith.constant dense<0.000000e+00> : vector<16x40xf32>
    %159 = tpu.matmul %157, %158, %cst_73 {dimension_numbers = #tpu.dot_dimension_numbers<[1], [0], [0], [1], [0, 0, 1, 1], [], []>} : vector<16x40xf32>, vector<40x40xf32>, vector<16x40xf32> -> vector<16x40xf32>
    %160 = arith.subf %157, %159 : vector<16x40xf32>
    %161 = arith.mulf %160, %160 : vector<16x40xf32>
    %cst_74 = arith.constant dense<0.000000e+00> : vector<16x40xf32>
    %162 = tpu.matmul %161, %158, %cst_74 {dimension_numbers = #tpu.dot_dimension_numbers<[1], [0], [0], [1], [0, 0, 1, 1], [], []>} : vector<16x40xf32>, vector<40x40xf32>, vector<16x40xf32> -> vector<16x40xf32>
    %cst_75 = arith.constant 9.99999974E-6 : f32
    %163 = vector.broadcast %cst_75 : f32 to vector<16x40xf32>
    %164 = arith.addf %162, %163 : vector<16x40xf32>
    %165 = math.rsqrt %164 : vector<16x40xf32>
    %166 = arith.mulf %160, %165 : vector<16x40xf32>
    %c696 = arith.constant 696 : index
    %c0_76 = arith.constant 0 : index
    %167 = vector.load %arg1[%c696, %c0_76] : memref<1512x256xf32, #tpu.memory_space<vmem>>, vector<1x40xf32>
    %168 = vector.broadcast %167 : vector<1x40xf32> to vector<16x40xf32>
    %169 = arith.mulf %166, %168 : vector<16x40xf32>
    %c704 = arith.constant 704 : index
    %c0_77 = arith.constant 0 : index
    %170 = vector.load %arg1[%c704, %c0_77] : memref<1512x256xf32, #tpu.memory_space<vmem>>, vector<1x40xf32>
    %171 = vector.broadcast %170 : vector<1x40xf32> to vector<16x40xf32>
    %172 = arith.addf %169, %171 : vector<16x40xf32>
    %173 = vector.extract_strided_slice %172 {offsets = [0, 0], sizes = [8, 40], strides = [1, 1]} : vector<16x40xf32> to vector<8x40xf32>
    %cst_78 = arith.constant dense<0.000000e+00> : vector<40xf32>
    %174 = vector.multi_reduction <add>, %173, %cst_78 [0] : vector<8x40xf32> to vector<40xf32>
    %175 = vector.shape_cast %174 : vector<40xf32> to vector<1x40xf32>
    %cst_79 = arith.constant 8.000000e+00 : f32
    %176 = vector.broadcast %cst_79 : f32 to vector<1x40xf32>
    %177 = arith.divf %175, %176 : vector<1x40xf32>
    %178 = vector.extract_strided_slice %172 {offsets = [8, 0], sizes = [8, 40], strides = [1, 1]} : vector<16x40xf32> to vector<8x40xf32>
    %cst_80 = arith.constant dense<0.000000e+00> : vector<40xf32>
    %179 = vector.multi_reduction <add>, %178, %cst_80 [0] : vector<8x40xf32> to vector<40xf32>
    %180 = vector.shape_cast %179 : vector<40xf32> to vector<1x40xf32>
    %cst_81 = arith.constant 8.000000e+00 : f32
    %181 = vector.broadcast %cst_81 : f32 to vector<1x40xf32>
    %182 = arith.divf %180, %181 : vector<1x40xf32>
    %183 = tpu.concatenate %177, %182 in 0 : vector<1x40xf32>, vector<1x40xf32> -> vector<2x40xf32>
    %c712 = arith.constant 712 : index
    %c0_82 = arith.constant 0 : index
    %184 = vector.load %arg1[%c712, %c0_82] : memref<1512x256xf32, #tpu.memory_space<vmem>>, vector<40x80xf32>
    %cst_83 = arith.constant dense<0.000000e+00> : vector<2x80xf32>
    %185 = tpu.matmul %183, %184, %cst_83 {dimension_numbers = #tpu.dot_dimension_numbers<[1], [0], [0], [1], [0, 0, 1, 1], [], []>} : vector<2x40xf32>, vector<40x80xf32>, vector<2x80xf32> -> vector<2x80xf32>
    %c752 = arith.constant 752 : index
    %c0_84 = arith.constant 0 : index
    %186 = vector.load %arg1[%c752, %c0_84] : memref<1512x256xf32, #tpu.memory_space<vmem>>, vector<1x80xf32>
    %187 = vector.broadcast %186 : vector<1x80xf32> to vector<2x80xf32>
    %188 = arith.addf %185, %187 : vector<2x80xf32>
    %cst_85 = arith.constant 5.000000e-01 : f32
    %189 = vector.broadcast %cst_85 : f32 to vector<2x80xf32>
    %190 = arith.mulf %189, %188 : vector<2x80xf32>
    %191 = math.tanh %190 : vector<2x80xf32>
    %cst_86 = arith.constant 5.000000e-01 : f32
    %192 = vector.broadcast %cst_86 : f32 to vector<2x80xf32>
    %193 = arith.mulf %192, %191 : vector<2x80xf32>
    %cst_87 = arith.constant 5.000000e-01 : f32
    %194 = vector.broadcast %cst_87 : f32 to vector<2x80xf32>
    %195 = arith.addf %193, %194 : vector<2x80xf32>
    %196 = arith.mulf %188, %195 : vector<2x80xf32>
    %c760 = arith.constant 760 : index
    %c0_88 = arith.constant 0 : index
    %197 = vector.load %arg1[%c760, %c0_88] : memref<1512x256xf32, #tpu.memory_space<vmem>>, vector<80x80xf32>
    %cst_89 = arith.constant dense<0.000000e+00> : vector<2x80xf32>
    %198 = tpu.matmul %196, %197, %cst_89 {dimension_numbers = #tpu.dot_dimension_numbers<[1], [0], [0], [1], [0, 0, 1, 1], [], []>} : vector<2x80xf32>, vector<80x80xf32>, vector<2x80xf32> -> vector<2x80xf32>
    %c840 = arith.constant 840 : index
    %c0_90 = arith.constant 0 : index
    %199 = vector.load %arg1[%c840, %c0_90] : memref<1512x256xf32, #tpu.memory_space<vmem>>, vector<1x80xf32>
    %200 = vector.broadcast %199 : vector<1x80xf32> to vector<2x80xf32>
    %201 = arith.addf %198, %200 : vector<2x80xf32>
    %cst_91 = arith.constant 5.000000e-01 : f32
    %202 = vector.broadcast %cst_91 : f32 to vector<2x80xf32>
    %203 = arith.mulf %202, %201 : vector<2x80xf32>
    %204 = math.tanh %203 : vector<2x80xf32>
    %cst_92 = arith.constant 5.000000e-01 : f32
    %205 = vector.broadcast %cst_92 : f32 to vector<2x80xf32>
    %206 = arith.mulf %205, %204 : vector<2x80xf32>
    %cst_93 = arith.constant 5.000000e-01 : f32
    %207 = vector.broadcast %cst_93 : f32 to vector<2x80xf32>
    %208 = arith.addf %206, %207 : vector<2x80xf32>
    %209 = arith.mulf %201, %208 : vector<2x80xf32>
    %c848 = arith.constant 848 : index
    %c0_94 = arith.constant 0 : index
    %210 = vector.load %arg1[%c848, %c0_94] : memref<1512x256xf32, #tpu.memory_space<vmem>>, vector<80x40xf32>
    %cst_95 = arith.constant dense<0.000000e+00> : vector<2x40xf32>
    %211 = tpu.matmul %209, %210, %cst_95 {dimension_numbers = #tpu.dot_dimension_numbers<[1], [0], [0], [1], [0, 0, 1, 1], [], []>} : vector<2x80xf32>, vector<80x40xf32>, vector<2x40xf32> -> vector<2x40xf32>
    %c928 = arith.constant 928 : index
    %c0_96 = arith.constant 0 : index
    %212 = vector.load %arg1[%c928, %c0_96] : memref<1512x256xf32, #tpu.memory_space<vmem>>, vector<1x40xf32>
    %213 = vector.broadcast %212 : vector<1x40xf32> to vector<2x40xf32>
    %214 = arith.addf %211, %213 : vector<2x40xf32>
    %c0_97 = arith.constant 0 : index
    %c384 = arith.constant 384 : index
    %215 = vector.load %arg2[%c0_97, %c384] : memref<2x640xf32, #tpu.memory_space<vmem>>, vector<2x40xf32>
    tpu.vector_store %arg2[%c0_97, %c384], %214 {strides = array<i32>} : memref<2x640xf32, #tpu.memory_space<vmem>>, vector<2x40xf32>,
    %c936 = arith.constant 936 : index
    %c0_98 = arith.constant 0 : index
    %216 = vector.load %arg1[%c936, %c0_98] : memref<1512x256xf32, #tpu.memory_space<vmem>>, vector<40x40xf32>
    %cst_99 = arith.constant dense<0.000000e+00> : vector<16x40xf32>
    %217 = tpu.matmul %0, %216, %cst_99 {dimension_numbers = #tpu.dot_dimension_numbers<[1], [0], [0], [1], [0, 0, 1, 1], [], []>} : vector<16x40xf32>, vector<40x40xf32>, vector<16x40xf32> -> vector<16x40xf32>
    %c976 = arith.constant 976 : index
    %c0_100 = arith.constant 0 : index
    %218 = vector.load %arg1[%c976, %c0_100] : memref<1512x256xf32, #tpu.memory_space<vmem>>, vector<1x40xf32>
    %219 = vector.broadcast %218 : vector<1x40xf32> to vector<16x40xf32>
    %220 = arith.addf %217, %219 : vector<16x40xf32>
    %c984 = arith.constant 984 : index
    %c0_101 = arith.constant 0 : index
    %221 = vector.load %arg1[%c984, %c0_101] : memref<1512x256xf32, #tpu.memory_space<vmem>>, vector<40x40xf32>
    %cst_102 = arith.constant dense<0.000000e+00> : vector<16x40xf32>
    %222 = tpu.matmul %0, %221, %cst_102 {dimension_numbers = #tpu.dot_dimension_numbers<[1], [0], [0], [1], [0, 0, 1, 1], [], []>} : vector<16x40xf32>, vector<40x40xf32>, vector<16x40xf32> -> vector<16x40xf32>
    %c1024 = arith.constant 1024 : index
    %c0_103 = arith.constant 0 : index
    %223 = vector.load %arg1[%c1024, %c0_103] : memref<1512x256xf32, #tpu.memory_space<vmem>>, vector<1x40xf32>
    %224 = vector.broadcast %223 : vector<1x40xf32> to vector<16x40xf32>
    %225 = arith.addf %222, %224 : vector<16x40xf32>
    %c1032 = arith.constant 1032 : index
    %c0_104 = arith.constant 0 : index
    %226 = vector.load %arg1[%c1032, %c0_104] : memref<1512x256xf32, #tpu.memory_space<vmem>>, vector<40x40xf32>
    %cst_105 = arith.constant dense<0.000000e+00> : vector<16x40xf32>
    %227 = tpu.matmul %0, %226, %cst_105 {dimension_numbers = #tpu.dot_dimension_numbers<[1], [0], [0], [1], [0, 0, 1, 1], [], []>} : vector<16x40xf32>, vector<40x40xf32>, vector<16x40xf32> -> vector<16x40xf32>
    %c1072 = arith.constant 1072 : index
    %c0_106 = arith.constant 0 : index
    %228 = vector.load %arg1[%c1072, %c0_106] : memref<1512x256xf32, #tpu.memory_space<vmem>>, vector<1x40xf32>
    %229 = vector.broadcast %228 : vector<1x40xf32> to vector<16x40xf32>
    %230 = arith.addf %227, %229 : vector<16x40xf32>
    %c0_107 = arith.constant 0 : index
    %c0_108 = arith.constant 0 : index
    %231 = vector.load %arg1[%c0_107, %c0_108] : memref<1512x256xf32, #tpu.memory_space<vmem>>, vector<40x4xf32>
    %c40 = arith.constant 40 : index
    %c0_109 = arith.constant 0 : index
    %232 = vector.load %arg1[%c40, %c0_109] : memref<1512x256xf32, #tpu.memory_space<vmem>>, vector<4x40xf32>
    %233 = vector.extract_strided_slice %220 {offsets = [0, 0], sizes = [8, 40], strides = [1, 1]} : vector<16x40xf32> to vector<8x40xf32>
    %234 = vector.extract_strided_slice %220 {offsets = [8, 0], sizes = [8, 40], strides = [1, 1]} : vector<16x40xf32> to vector<8x40xf32>
    %235 = vector.extract_strided_slice %225 {offsets = [0, 0], sizes = [8, 40], strides = [1, 1]} : vector<16x40xf32> to vector<8x40xf32>
    %236 = vector.extract_strided_slice %225 {offsets = [8, 0], sizes = [8, 40], strides = [1, 1]} : vector<16x40xf32> to vector<8x40xf32>
    %237 = vector.extract_strided_slice %230 {offsets = [0, 0], sizes = [8, 40], strides = [1, 1]} : vector<16x40xf32> to vector<8x40xf32>
    %238 = vector.extract_strided_slice %230 {offsets = [8, 0], sizes = [8, 40], strides = [1, 1]} : vector<16x40xf32> to vector<8x40xf32>
    %239 = arith.mulf %233, %235 : vector<8x40xf32>
    %240 = arith.mulf %233, %236 : vector<8x40xf32>
    %241 = arith.mulf %234, %235 : vector<8x40xf32>
    %242 = arith.mulf %234, %236 : vector<8x40xf32>
    %243 = tpu.concatenate %239, %240, %241, %242 in 0 : vector<8x40xf32>, vector<8x40xf32>, vector<8x40xf32>, vector<8x40xf32> -> vector<32x40xf32>
    %cst_110 = arith.constant dense<0.000000e+00> : vector<32x4xf32>
    %244 = tpu.matmul %243, %231, %cst_110 {dimension_numbers = #tpu.dot_dimension_numbers<[1], [0], [0], [1], [0, 0, 1, 1], [], []>} : vector<32x40xf32>, vector<40x4xf32>, vector<32x4xf32> -> vector<32x4xf32>
    %245 = vector.extract_strided_slice %244 {offsets = [0, 0], sizes = [8, 4], strides = [1, 1]} : vector<32x4xf32> to vector<8x4xf32>
    %246 = vector.extract_strided_slice %244 {offsets = [8, 0], sizes = [8, 4], strides = [1, 1]} : vector<32x4xf32> to vector<8x4xf32>
    %247 = arith.maximumf %245, %246 : vector<8x4xf32>
    %248 = arith.subf %245, %247 : vector<8x4xf32>
    %249 = math.exp %248 : vector<8x4xf32>
    %250 = arith.subf %246, %247 : vector<8x4xf32>
    %251 = math.exp %250 : vector<8x4xf32>
    %252 = arith.addf %249, %251 : vector<8x4xf32>
    %cst_111 = arith.constant 1.000000e+00 : f32
    %253 = vector.broadcast %cst_111 : f32 to vector<8x4xf32>
    %254 = arith.divf %253, %252 : vector<8x4xf32>
    %255 = arith.mulf %249, %254 : vector<8x4xf32>
    %256 = arith.mulf %251, %254 : vector<8x4xf32>
    %257 = vector.extract_strided_slice %244 {offsets = [16, 0], sizes = [8, 4], strides = [1, 1]} : vector<32x4xf32> to vector<8x4xf32>
    %258 = vector.extract_strided_slice %244 {offsets = [24, 0], sizes = [8, 4], strides = [1, 1]} : vector<32x4xf32> to vector<8x4xf32>
    %259 = arith.maximumf %257, %258 : vector<8x4xf32>
    %260 = arith.subf %257, %259 : vector<8x4xf32>
    %261 = math.exp %260 : vector<8x4xf32>
    %262 = arith.subf %258, %259 : vector<8x4xf32>
    %263 = math.exp %262 : vector<8x4xf32>
    %264 = arith.addf %261, %263 : vector<8x4xf32>
    %cst_112 = arith.constant 1.000000e+00 : f32
    %265 = vector.broadcast %cst_112 : f32 to vector<8x4xf32>
    %266 = arith.divf %265, %264 : vector<8x4xf32>
    %267 = arith.mulf %261, %266 : vector<8x4xf32>
    %268 = arith.mulf %263, %266 : vector<8x4xf32>
    %269 = tpu.concatenate %255, %256, %267, %268 in 0 : vector<8x4xf32>, vector<8x4xf32>, vector<8x4xf32>, vector<8x4xf32> -> vector<32x4xf32>
    %cst_113 = arith.constant dense<0.000000e+00> : vector<32x40xf32>
    %270 = tpu.matmul %269, %232, %cst_113 {dimension_numbers = #tpu.dot_dimension_numbers<[1], [0], [0], [1], [0, 0, 1, 1], [], []>} : vector<32x4xf32>, vector<4x40xf32>, vector<32x40xf32> -> vector<32x40xf32>
    %271 = tpu.concatenate %237, %238, %237, %238 in 0 : vector<8x40xf32>, vector<8x40xf32>, vector<8x40xf32>, vector<8x40xf32> -> vector<32x40xf32>
    %272 = arith.mulf %270, %271 : vector<32x40xf32>
    %273 = vector.extract_strided_slice %272 {offsets = [0, 0], sizes = [8, 40], strides = [1, 1]} : vector<32x40xf32> to vector<8x40xf32>
    %274 = vector.extract_strided_slice %272 {offsets = [8, 0], sizes = [8, 40], strides = [1, 1]} : vector<32x40xf32> to vector<8x40xf32>
    %275 = arith.addf %273, %274 : vector<8x40xf32>
    %276 = vector.extract_strided_slice %272 {offsets = [16, 0], sizes = [8, 40], strides = [1, 1]} : vector<32x40xf32> to vector<8x40xf32>
    %277 = vector.extract_strided_slice %272 {offsets = [24, 0], sizes = [8, 40], strides = [1, 1]} : vector<32x40xf32> to vector<8x40xf32>
    %278 = arith.addf %276, %277 : vector<8x40xf32>
    %279 = tpu.concatenate %275, %278 in 0 : vector<8x40xf32>, vector<8x40xf32> -> vector<16x40xf32>
    %c1080 = arith.constant 1080 : index
    %c0_114 = arith.constant 0 : index
    %280 = vector.load %arg1[%c1080, %c0_114] : memref<1512x256xf32, #tpu.memory_space<vmem>>, vector<40x40xf32>
    %cst_115 = arith.constant dense<0.000000e+00> : vector<16x40xf32>
    %281 = tpu.matmul %279, %280, %cst_115 {dimension_numbers = #tpu.dot_dimension_numbers<[1], [0], [0], [1], [0, 0, 1, 1], [], []>} : vector<16x40xf32>, vector<40x40xf32>, vector<16x40xf32> -> vector<16x40xf32>
    %c1120 = arith.constant 1120 : index
    %c0_116 = arith.constant 0 : index
    %282 = vector.load %arg1[%c1120, %c0_116] : memref<1512x256xf32, #tpu.memory_space<vmem>>, vector<1x40xf32>
    %283 = vector.broadcast %282 : vector<1x40xf32> to vector<16x40xf32>
    %284 = arith.addf %281, %283 : vector<16x40xf32>
    %285 = arith.addf %284, %0 : vector<16x40xf32>
    %c1128 = arith.constant 1128 : index
    %c0_117 = arith.constant 0 : index
    %286 = vector.load %arg1[%c1128, %c0_117] : memref<1512x256xf32, #tpu.memory_space<vmem>>, vector<1x40xf32>
    %c1136 = arith.constant 1136 : index
    %c0_118 = arith.constant 0 : index
    %287 = vector.load %arg1[%c1136, %c0_118] : memref<1512x256xf32, #tpu.memory_space<vmem>>, vector<1x40xf32>
    %cst_119 = arith.constant dense<0.000000e+00> : vector<16xf32>
    %288 = vector.multi_reduction <add>, %285, %cst_119 [1] : vector<16x40xf32> to vector<16xf32>
    %289 = vector.shape_cast %288 : vector<16xf32> to vector<16x1xf32>
    %cst_120 = arith.constant 4.000000e+01 : f32
    %290 = vector.broadcast %cst_120 : f32 to vector<16x1xf32>
    %291 = arith.divf %289, %290 : vector<16x1xf32>
    %292 = vector.broadcast %291 : vector<16x1xf32> to vector<16x40xf32>
    %293 = arith.subf %285, %292 : vector<16x40xf32>
    %294 = arith.mulf %293, %293 : vector<16x40xf32>
    %cst_121 = arith.constant dense<0.000000e+00> : vector<16xf32>
    %295 = vector.multi_reduction <add>, %294, %cst_121 [1] : vector<16x40xf32> to vector<16xf32>
    %296 = vector.shape_cast %295 : vector<16xf32> to vector<16x1xf32>
    %cst_122 = arith.constant 4.000000e+01 : f32
    %297 = vector.broadcast %cst_122 : f32 to vector<16x1xf32>
    %298 = arith.divf %296, %297 : vector<16x1xf32>
    %cst_123 = arith.constant 9.99999974E-6 : f32
    %299 = vector.broadcast %cst_123 : f32 to vector<16x1xf32>
    %300 = arith.addf %298, %299 : vector<16x1xf32>
    %301 = math.rsqrt %300 : vector<16x1xf32>
    %302 = vector.broadcast %301 : vector<16x1xf32> to vector<16x40xf32>
    %303 = arith.mulf %293, %302 : vector<16x40xf32>
    %304 = vector.broadcast %286 : vector<1x40xf32> to vector<16x40xf32>
    %305 = arith.mulf %303, %304 : vector<16x40xf32>
    %306 = vector.broadcast %287 : vector<1x40xf32> to vector<16x40xf32>
    %307 = arith.addf %305, %306 : vector<16x40xf32>
    %c1160 = arith.constant 1160 : index
    %c0_124 = arith.constant 0 : index
    %308 = vector.load %arg1[%c1160, %c0_124] : memref<1512x256xf32, #tpu.memory_space<vmem>>, vector<40x160xf32>
    %cst_125 = arith.constant dense<0.000000e+00> : vector<16x160xf32>
    %309 = tpu.matmul %307, %308, %cst_125 {dimension_numbers = #tpu.dot_dimension_numbers<[1], [0], [0], [1], [0, 0, 1, 1], [], []>} : vector<16x40xf32>, vector<40x160xf32>, vector<16x160xf32> -> vector<16x160xf32>
    %c1200 = arith.constant 1200 : index
    %c0_126 = arith.constant 0 : index
    %310 = vector.load %arg1[%c1200, %c0_126] : memref<1512x256xf32, #tpu.memory_space<vmem>>, vector<1x160xf32>
    %311 = vector.broadcast %310 : vector<1x160xf32> to vector<16x160xf32>
    %312 = arith.addf %309, %311 : vector<16x160xf32>
    %cst_127 = arith.constant 5.000000e-01 : f32
    %313 = vector.broadcast %cst_127 : f32 to vector<16x160xf32>
    %314 = arith.mulf %313, %312 : vector<16x160xf32>
    %315 = math.tanh %314 : vector<16x160xf32>
    %cst_128 = arith.constant 5.000000e-01 : f32
    %316 = vector.broadcast %cst_128 : f32 to vector<16x160xf32>
    %317 = arith.mulf %316, %315 : vector<16x160xf32>
    %cst_129 = arith.constant 5.000000e-01 : f32
    %318 = vector.broadcast %cst_129 : f32 to vector<16x160xf32>
    %319 = arith.addf %317, %318 : vector<16x160xf32>
    %320 = arith.mulf %312, %319 : vector<16x160xf32>
    %c1208 = arith.constant 1208 : index
    %c0_130 = arith.constant 0 : index
    %321 = vector.load %arg1[%c1208, %c0_130] : memref<1512x256xf32, #tpu.memory_space<vmem>>, vector<160x40xf32>
    %cst_131 = arith.constant dense<0.000000e+00> : vector<16x40xf32>
    %322 = tpu.matmul %320, %321, %cst_131 {dimension_numbers = #tpu.dot_dimension_numbers<[1], [0], [0], [1], [0, 0, 1, 1], [], []>} : vector<16x160xf32>, vector<160x40xf32>, vector<16x40xf32> -> vector<16x40xf32>
    %c1368 = arith.constant 1368 : index
    %c0_132 = arith.constant 0 : index
    %323 = vector.load %arg1[%c1368, %c0_132] : memref<1512x256xf32, #tpu.memory_space<vmem>>, vector<1x40xf32>
    %324 = vector.broadcast %323 : vector<1x40xf32> to vector<16x40xf32>
    %325 = arith.addf %322, %324 : vector<16x40xf32>
    %326 = arith.addf %325, %307 : vector<16x40xf32>
    %c1144 = arith.constant 1144 : index
    %c0_133 = arith.constant 0 : index
    %327 = vector.load %arg1[%c1144, %c0_133] : memref<1512x256xf32, #tpu.memory_space<vmem>>, vector<1x40xf32>
    %c1152 = arith.constant 1152 : index
    %c0_134 = arith.constant 0 : index
    %328 = vector.load %arg1[%c1152, %c0_134] : memref<1512x256xf32, #tpu.memory_space<vmem>>, vector<1x40xf32>
    %cst_135 = arith.constant dense<0.000000e+00> : vector<16xf32>
    %329 = vector.multi_reduction <add>, %326, %cst_135 [1] : vector<16x40xf32> to vector<16xf32>
    %330 = vector.shape_cast %329 : vector<16xf32> to vector<16x1xf32>
    %cst_136 = arith.constant 4.000000e+01 : f32
    %331 = vector.broadcast %cst_136 : f32 to vector<16x1xf32>
    %332 = arith.divf %330, %331 : vector<16x1xf32>
    %333 = vector.broadcast %332 : vector<16x1xf32> to vector<16x40xf32>
    %334 = arith.subf %326, %333 : vector<16x40xf32>
    %335 = arith.mulf %334, %334 : vector<16x40xf32>
    %cst_137 = arith.constant dense<0.000000e+00> : vector<16xf32>
    %336 = vector.multi_reduction <add>, %335, %cst_137 [1] : vector<16x40xf32> to vector<16xf32>
    %337 = vector.shape_cast %336 : vector<16xf32> to vector<16x1xf32>
    %cst_138 = arith.constant 4.000000e+01 : f32
    %338 = vector.broadcast %cst_138 : f32 to vector<16x1xf32>
    %339 = arith.divf %337, %338 : vector<16x1xf32>
    %cst_139 = arith.constant 9.99999974E-6 : f32
    %340 = vector.broadcast %cst_139 : f32 to vector<16x1xf32>
    %341 = arith.addf %339, %340 : vector<16x1xf32>
    %342 = math.rsqrt %341 : vector<16x1xf32>
    %343 = vector.broadcast %342 : vector<16x1xf32> to vector<16x40xf32>
    %344 = arith.mulf %334, %343 : vector<16x40xf32>
    %345 = vector.broadcast %327 : vector<1x40xf32> to vector<16x40xf32>
    %346 = arith.mulf %344, %345 : vector<16x40xf32>
    %347 = vector.broadcast %328 : vector<1x40xf32> to vector<16x40xf32>
    %348 = arith.addf %346, %347 : vector<16x40xf32>
    %349 = vector.extract_strided_slice %348 {offsets = [0, 0], sizes = [8, 40], strides = [1, 1]} : vector<16x40xf32> to vector<8x40xf32>
    %cst_140 = arith.constant dense<0.000000e+00> : vector<40xf32>
    %350 = vector.multi_reduction <add>, %349, %cst_140 [0] : vector<8x40xf32> to vector<40xf32>
    %351 = vector.shape_cast %350 : vector<40xf32> to vector<1x40xf32>
    %cst_141 = arith.constant 8.000000e+00 : f32
    %352 = vector.broadcast %cst_141 : f32 to vector<1x40xf32>
    %353 = arith.divf %351, %352 : vector<1x40xf32>
    %354 = vector.extract_strided_slice %348 {offsets = [8, 0], sizes = [8, 40], strides = [1, 1]} : vector<16x40xf32> to vector<8x40xf32>
    %cst_142 = arith.constant dense<0.000000e+00> : vector<40xf32>
    %355 = vector.multi_reduction <add>, %354, %cst_142 [0] : vector<8x40xf32> to vector<40xf32>
    %356 = vector.shape_cast %355 : vector<40xf32> to vector<1x40xf32>
    %cst_143 = arith.constant 8.000000e+00 : f32
    %357 = vector.broadcast %cst_143 : f32 to vector<1x40xf32>
    %358 = arith.divf %356, %357 : vector<1x40xf32>
    %359 = tpu.concatenate %353, %358 in 0 : vector<1x40xf32>, vector<1x40xf32> -> vector<2x40xf32>
    %c1376 = arith.constant 1376 : index
    %c0_144 = arith.constant 0 : index
    %360 = vector.load %arg1[%c1376, %c0_144] : memref<1512x256xf32, #tpu.memory_space<vmem>>, vector<40x80xf32>
    %cst_145 = arith.constant dense<0.000000e+00> : vector<2x80xf32>
    %361 = tpu.matmul %359, %360, %cst_145 {dimension_numbers = #tpu.dot_dimension_numbers<[1], [0], [0], [1], [0, 0, 1, 1], [], []>} : vector<2x40xf32>, vector<40x80xf32>, vector<2x80xf32> -> vector<2x80xf32>
    %c1416 = arith.constant 1416 : index
    %c0_146 = arith.constant 0 : index
    %362 = vector.load %arg1[%c1416, %c0_146] : memref<1512x256xf32, #tpu.memory_space<vmem>>, vector<1x80xf32>
    %363 = vector.broadcast %362 : vector<1x80xf32> to vector<2x80xf32>
    %364 = arith.addf %361, %363 : vector<2x80xf32>
    %cst_147 = arith.constant 5.000000e-01 : f32
    %365 = vector.broadcast %cst_147 : f32 to vector<2x80xf32>
    %366 = arith.mulf %365, %364 : vector<2x80xf32>
    %367 = math.tanh %366 : vector<2x80xf32>
    %cst_148 = arith.constant 5.000000e-01 : f32
    %368 = vector.broadcast %cst_148 : f32 to vector<2x80xf32>
    %369 = arith.mulf %368, %367 : vector<2x80xf32>
    %cst_149 = arith.constant 5.000000e-01 : f32
    %370 = vector.broadcast %cst_149 : f32 to vector<2x80xf32>
    %371 = arith.addf %369, %370 : vector<2x80xf32>
    %372 = arith.mulf %364, %371 : vector<2x80xf32>
    %c1424 = arith.constant 1424 : index
    %c0_150 = arith.constant 0 : index
    %373 = vector.load %arg1[%c1424, %c0_150] : memref<1512x256xf32, #tpu.memory_space<vmem>>, vector<80x40xf32>
    %cst_151 = arith.constant dense<0.000000e+00> : vector<2x40xf32>
    %374 = tpu.matmul %372, %373, %cst_151 {dimension_numbers = #tpu.dot_dimension_numbers<[1], [0], [0], [1], [0, 0, 1, 1], [], []>} : vector<2x80xf32>, vector<80x40xf32>, vector<2x40xf32> -> vector<2x40xf32>
    %c1504 = arith.constant 1504 : index
    %c0_152 = arith.constant 0 : index
    %375 = vector.load %arg1[%c1504, %c0_152] : memref<1512x256xf32, #tpu.memory_space<vmem>>, vector<1x40xf32>
    %376 = vector.broadcast %375 : vector<1x40xf32> to vector<2x40xf32>
    %377 = arith.addf %374, %376 : vector<2x40xf32>
    %c0_153 = arith.constant 0 : index
    %c512_154 = arith.constant 512 : index
    %378 = vector.load %arg2[%c0_153, %c512_154] : memref<2x640xf32, #tpu.memory_space<vmem>>, vector<2x40xf32>
    tpu.vector_store %arg2[%c0_153, %c512_154], %377 {strides = array<i32>} : memref<2x640xf32, #tpu.memory_space<vmem>>, vector<2x40xf32>,
    return
  }
}

</mosaic_0001>

<llo_original>
// kernel: forward.1
$region0: #{forward.1}
  #allocation0 [shape = 'u32[]', space=smem, size = 0x4, offset = 0x4, fixed_abs, tag = 'smem constant byte address 0x4 - core index']
  #allocation1 [shape = 'u32[144,128]{1,0:T(1,128)}', space=vmem, size = 0x12000, scoped, tag = 'internal scratch']
  %s0 = inlined_call_operand.vmem [shape: f32[16,40], index: 0, kind: input, shape index: {}]
  %s1 = inlined_call_operand.hbm [shape: f32[1512,256], index: 1, kind: input, shape index: {}]
  %s2 = inlined_call_operand.vmem [shape: f32[2,640], index: 2, kind: output, shape index: {}]
  %s3 = sld [smem:[#allocation0]]
  $region22: #{forward.1} parent=0
    _
  %s5 = ssub.s32 1, %s3
  %s6 = scalar_select 0, %s5, %s3
  $region1: #{forward.1} parent=0
    #allocation2 [shape = 'u8[1548288]{0}', space=vmem, size = 0x17a000, scoped, tag = 'input window, operand 1, single buffered']
    #allocation3 [shape = 's32[1]{0}', space=sflag, size = 0x4, scoped, tag = 'scoped memory for forward.1']
    %7 = vsyncpa [#allocation3], 0
    // Predicated region
    $region2: #{forward.1} parent=1 // pred_check
      _
    $region3: #{forward.1} parent=1 // pred_check_branch
      %9 = sbr.rel (0) target = $region5
    $region4: #{forward.1} parent=1 // pred_region
      _
    $region5: #{forward.1} parent=1 // pred_fallthru
      _
    // Predicated region
    $region6: #{forward.1} parent=1 // pred_check
      _
    $region7: #{forward.1} parent=1 // pred_check_branch
      %11 = sbr.rel (0) target = $region9
    $region8: #{forward.1} parent=1 // pred_region
      %s13 = ssub.s32 48384, 48384
      %14 = vsyncadd [#allocation3], %s13
      %s15 = sshll.u32 [#allocation2], 4
      %s16 = int_to_ptr.vmem [resolvable:$true] %s15
      %21 = dma.hbm_to_vmem [thread:$0]  %s1, 48384, %s16, [#allocation3], 256, 256, 16
    $region9: #{forward.1} parent=1 // pred_fallthru
      _
    // Predicated region
    $region10: #{forward.1} parent=1 // pred_check
      _
    $region11: #{forward.1} parent=1 // pred_check_branch
      %23 = sbr.rel (0) target = $region13
    $region12: #{forward.1} parent=1 // pred_region
      %24 = dma.done [#allocation3], 48384
    $region13: #{forward.1} parent=1 // pred_fallthru
      _
    %v25 = vld [vmem:[%s0] sm:$0xff]
    %v26 = vld [vmem:[%s0 + $0x8] sm:$0xff]
    %vm27 = vcmask 326656
    %v28 = vsel %vm27, %v25, 0.0
    %v29 = vrot.slane %v28, 4
    %v30 = vadd.f32 %v28, %v29
    %v31 = vrot.slane %v30, 2
    %v32 = vadd.f32 %v30, %v31
    %v33 = vrot.slane %v32, 1
    %v34 = vadd.f32 %v32, %v33
    %v35 = vrcp.pop 8.0
    %v36 = vmul.f32 %v34, %v35
    %v37 = vsel %vm27, %v26, 0.0
    %v38 = vrot.slane %v37, 4
    %v39 = vadd.f32 %v37, %v38
    %v40 = vrot.slane %v39, 2
    %v41 = vadd.f32 %v39, %v40
    %v42 = vrot.slane %v41, 1
    %v43 = vadd.f32 %v41, %v42
    %v44 = vmul.f32 %v43, %v35
    %vm45 = vcmask 1040384
    %v46 = vsel %vm45, %v36, %v44
    %vm47 = vcmask 320512
    %48 = vst.msk [vmem:[%s2] sm:$0x3] %vm47, %v46
    %v49 = vld [vmem:[#allocation2 + $0xb0] sm:$0xff]
    %v50 = vld [vmem:[#allocation2 + $0xc0] sm:$0xff]
    %v51 = vld [vmem:[#allocation2 + $0xd0] sm:$0xff]
    %v52 = vld [vmem:[#allocation2 + $0xe0] sm:$0xff]
    %v53 = vld [vmem:[#allocation2 + $0xf0] sm:$0xff]
    %v54 = vld [vmem:[#allocation2 + $0x100] ss:$0 sm:$0xff]
    %v56 = vsel %vm27, %v25, 0
    %v59 = vsel %vm27, %v26, 0
    %61 = vmatprep.subr.mxu0 0.0
    %62 = vmatpush1.msra.mxu0 0.0
    %63 = vmatprep.subr.mxu0 0.0
    %64 = vmatpush1.msra.mxu0 0.0
    %65 = vmatprep.subr.mxu0 0.0
    %66 = vmatpush1.msra.mxu0 0.0
    %67 = vmatprep.subr.mxu0 0.0
    %68 = vmatpush1.msra.mxu0 0.0
    %69 = vmatprep.subr.mxu0 0.0
    %70 = vmatpush1.msra.mxu0 0.0
    %71 = vmatprep.subr.mxu0 0.0
    %72 = vmatpush1.msra.mxu0 0.0
    %73 = vmatprep.subr.mxu0 0.0
    %74 = vmatpush1.msra.mxu0 0.0
    %75 = vmatprep.subr.mxu0 0.0
    %76 = vmatpush1.msra.mxu0 0.0
    %77 = vmatprep.subr.mxu0 0.0
    %78 = vmatpush1.msra.mxu0 0.0
    %79 = vmatprep.subr.mxu0 0.0
    %80 = vmatpush1.msra.mxu0 0.0
    %81 = vmatprep.subr.mxu0 0.0
    %82 = vmatpush1.msra.mxu0 0.0
    %83 = vmatprep.subr.mxu0 0.0
    %84 = vmatpush1.msra.mxu0 %v53
    %85 = vmatprep.subr.mxu0 0.0
    %86 = vmatpush1.msra.mxu0 %v52
    %87 = vmatprep.subr.mxu0 0.0
    %88 = vmatpush1.msra.mxu0 %v51
    %89 = vmatprep.subr.mxu0 0.0
    %90 = vmatpush1.msra.mxu0 %v50
    %91 = vmatprep.subr.mxu0 0.0
    %92 = vmatpush1.msra.mxu0 %v49
    %93 = vmatprep.subr.mxu0 0.0
    %94 = vmatpush2.msra.mxu0 0.0
    %95 = vmatprep.subr.mxu0 0.0
    %96 = vmatpush2.msra.mxu0 0.0
    %97 = vmatprep.subr.mxu0 0.0
    %98 = vmatpush2.msra.mxu0 0.0
    %99 = vmatprep.subr.mxu0 0.0
    %100 = vmatpush2.msra.mxu0 0.0
    %101 = vmatprep.subr.mxu0 0.0
    %102 = vmatpush2.msra.mxu0 0.0
    %103 = vmatprep.subr.mxu0 0.0
    %104 = vmatpush2.msra.mxu0 0.0
    %105 = vmatprep.subr.mxu0 0.0
    %106 = vmatpush2.msra.mxu0 0.0
    %107 = vmatprep.subr.mxu0 0.0
    %108 = vmatpush2.msra.mxu0 0.0
    %109 = vmatprep.subr.mxu0 0.0
    %110 = vmatpush2.msra.mxu0 0.0
    %111 = vmatprep.subr.mxu0 0.0
    %112 = vmatpush2.msra.mxu0 0.0
    %113 = vmatprep.subr.mxu0 0.0
    %114 = vmatpush2.msra.mxu0 0.0
    %115 = vmatprep.subr.mxu0 0.0
    %116 = vmatpush2.msra.mxu0 0.0
    %117 = vmatprep.subr.mxu0 0.0
    %118 = vmatpush2.msra.mxu0 0.0
    %119 = vmatprep.subr.mxu0 0.0
    %120 = vmatpush2.msra.mxu0 0.0
    %121 = vmatprep.subr.mxu0 0.0
    %122 = vmatpush2.msra.mxu0 0.0
    %123 = vmatprep.subr.mxu0 0.0
    %124 = vmatpush2.msra.mxu0 0.0
    %125 = vmatprep.mubr.f32.mxu0 0.0
    %126 = vmatmul.mubr.f32.gmra.mxu0 %v56
    %v127 = vpop.f32.mrf.mxu0
    %v128 = vadd.f32 %v54, %v127
    %v129 = vpop.f32.mrf.mxu0
    %130 = vmatprep.mubr.f32.mxu0 0.0
    %131 = vmatmul.mubr.f32.gmra.mxu0 %v59
    %v132 = vpop.f32.mrf.mxu0
    %v133 = vadd.f32 %v54, %v132
    %v134 = vpop.f32.mrf.mxu0
    %135 = vdwg.mxu0
    %v136 = vmul.f32 %v128, 0.5
    %v137 = vmul.f32 %v133, 0.5
    %v138 = vtanh.pop %v136
    %v139 = vtanh.pop %v137
    %v140 = vmul.f32 %v138, 0.5
    %v141 = vmul.f32 %v139, 0.5
    %v142 = vadd.f32 %v140, 0.5
    %v143 = vadd.f32 %v141, 0.5
    %v144 = vmul.f32 %v128, %v142
    %v145 = vmul.f32 %v133, %v143
    %v146 = vld [vmem:[#allocation2 + $0x110] sm:$0xff]
    %v147 = vld [vmem:[#allocation2 + $0x120] sm:$0xff]
    %v148 = vld [vmem:[#allocation2 + $0x130] sm:$0xff]
    %v149 = vld [vmem:[#allocation2 + $0x140] sm:$0xff]
    %v150 = vld [vmem:[#allocation2 + $0x150] sm:$0xff]
    %v151 = vld [vmem:[#allocation2 + $0x160] ss:$0 sm:$0xff]
    %v153 = vsel %vm27, %v144, 0
    %v156 = vsel %vm27, %v145, 0
    %158 = vmatprep.subr.mxu0 0.0
    %159 = vmatpush1.msra.mxu0 0.0
    %160 = vmatprep.subr.mxu0 0.0
    %161 = vmatpush1.msra.mxu0 0.0
    %162 = vmatprep.subr.mxu0 0.0
    %163 = vmatpush1.msra.mxu0 0.0
    %164 = vmatprep.subr.mxu0 0.0
    %165 = vmatpush1.msra.mxu0 0.0
    %166 = vmatprep.subr.mxu0 0.0
    %167 = vmatpush1.msra.mxu0 0.0
    %168 = vmatprep.subr.mxu0 0.0
    %169 = vmatpush1.msra.mxu0 0.0
    %170 = vmatprep.subr.mxu0 0.0
    %171 = vmatpush1.msra.mxu0 0.0
    %172 = vmatprep.subr.mxu0 0.0
    %173 = vmatpush1.msra.mxu0 0.0
    %174 = vmatprep.subr.mxu0 0.0
    %175 = vmatpush1.msra.mxu0 0.0
    %176 = vmatprep.subr.mxu0 0.0
    %177 = vmatpush1.msra.mxu0 0.0
    %178 = vmatprep.subr.mxu0 0.0
    %179 = vmatpush1.msra.mxu0 0.0
    %180 = vmatprep.subr.mxu0 0.0
    %181 = vmatpush1.msra.mxu0 %v150
    %182 = vmatprep.subr.mxu0 0.0
    %183 = vmatpush1.msra.mxu0 %v149
    %184 = vmatprep.subr.mxu0 0.0
    %185 = vmatpush1.msra.mxu0 %v148
    %186 = vmatprep.subr.mxu0 0.0
    %187 = vmatpush1.msra.mxu0 %v147
    %188 = vmatprep.subr.mxu0 0.0
    %189 = vmatpush1.msra.mxu0 %v146
    %190 = vmatprep.subr.mxu0 0.0
    %191 = vmatpush2.msra.mxu0 0.0
    %192 = vmatprep.subr.mxu0 0.0
    %193 = vmatpush2.msra.mxu0 0.0
    %194 = vmatprep.subr.mxu0 0.0
    %195 = vmatpush2.msra.mxu0 0.0
    %196 = vmatprep.subr.mxu0 0.0
    %197 = vmatpush2.msra.mxu0 0.0
    %198 = vmatprep.subr.mxu0 0.0
    %199 = vmatpush2.msra.mxu0 0.0
    %200 = vmatprep.subr.mxu0 0.0
    %201 = vmatpush2.msra.mxu0 0.0
    %202 = vmatprep.subr.mxu0 0.0
    %203 = vmatpush2.msra.mxu0 0.0
    %204 = vmatprep.subr.mxu0 0.0
    %205 = vmatpush2.msra.mxu0 0.0
    %206 = vmatprep.subr.mxu0 0.0
    %207 = vmatpush2.msra.mxu0 0.0
    %208 = vmatprep.subr.mxu0 0.0
    %209 = vmatpush2.msra.mxu0 0.0
    %210 = vmatprep.subr.mxu0 0.0
    %211 = vmatpush2.msra.mxu0 0.0
    %212 = vmatprep.subr.mxu0 0.0
    %213 = vmatpush2.msra.mxu0 0.0
    %214 = vmatprep.subr.mxu0 0.0
    %215 = vmatpush2.msra.mxu0 0.0
    %216 = vmatprep.subr.mxu0 0.0
    %217 = vmatpush2.msra.mxu0 0.0
    %218 = vmatprep.subr.mxu0 0.0
    %219 = vmatpush2.msra.mxu0 0.0
    %220 = vmatprep.subr.mxu0 0.0
    %221 = vmatpush2.msra.mxu0 0.0
    %222 = vmatprep.mubr.f32.mxu0 0.0
    %223 = vmatmul.mubr.f32.gmra.mxu0 %v153
    %v224 = vpop.f32.mrf.mxu0
    %v225 = vadd.f32 %v151, %v224
    %v226 = vpop.f32.mrf.mxu0
    %227 = vmatprep.mubr.f32.mxu0 0.0
    %228 = vmatmul.mubr.f32.gmra.mxu0 %v156
    %v229 = vpop.f32.mrf.mxu0
    %v230 = vadd.f32 %v151, %v229
    %v231 = vpop.f32.mrf.mxu0
    %232 = vdwg.mxu0
    %v233 = vmul.f32 %v225, 0.5
    %v234 = vmul.f32 %v230, 0.5
    %v235 = vtanh.pop %v233
    %v236 = vtanh.pop %v234
    %v237 = vmul.f32 %v235, 0.5
    %v238 = vmul.f32 %v236, 0.5
    %v239 = vadd.f32 %v237, 0.5
    %v240 = vadd.f32 %v238, 0.5
    %v241 = vmul.f32 %v225, %v239
    %v242 = vmul.f32 %v230, %v240
    %v243 = vsel %vm27, %v241, 0.0
    %v244 = vrot.slane %v243, 4
    %v245 = vadd.f32 %v243, %v244
    %v246 = vrot.slane %v245, 2
    %v247 = vadd.f32 %v245, %v246
    %v248 = vrot.slane %v247, 1
    %v249 = vadd.f32 %v247, %v248
    %v250 = vmul.f32 %v249, %v35
    %v251 = vsel %vm27, %v242, 0.0
    %v252 = vrot.slane %v251, 4
    %v253 = vadd.f32 %v251, %v252
    %v254 = vrot.slane %v253, 2
    %v255 = vadd.f32 %v253, %v254
    %v256 = vrot.slane %v255, 1
    %v257 = vadd.f32 %v255, %v256
    %v258 = vmul.f32 %v257, %v35
    %v259 = vsel %vm45, %v250, %v258
    %v260 = vld [vmem:[#allocation2 + $0x170] sm:$0xff]
    %v261 = vld [vmem:[#allocation2 + $0x180] sm:$0xff]
    %v262 = vld [vmem:[#allocation2 + $0x190] sm:$0xff]
    %v263 = vld [vmem:[#allocation2 + $0x1a0] sm:$0xff]
    %v264 = vld [vmem:[#allocation2 + $0x1b0] sm:$0xff]
    %v265 = vld [vmem:[#allocation2 + $0x1c0] ss:$0 sm:$0xff]
    %v267 = vsel %vm27, %v259, 0
    %269 = vmatprep.subr.mxu0 0.0
    %270 = vmatpush1.msra.mxu0 0.0
    %271 = vmatprep.subr.mxu0 0.0
    %272 = vmatpush1.msra.mxu0 0.0
    %273 = vmatprep.subr.mxu0 0.0
    %274 = vmatpush1.msra.mxu0 0.0
    %275 = vmatprep.subr.mxu0 0.0
    %276 = vmatpush1.msra.mxu0 0.0
    %277 = vmatprep.subr.mxu0 0.0
    %278 = vmatpush1.msra.mxu0 0.0
    %279 = vmatprep.subr.mxu0 0.0
    %280 = vmatpush1.msra.mxu0 0.0
    %281 = vmatprep.subr.mxu0 0.0
    %282 = vmatpush1.msra.mxu0 0.0
    %283 = vmatprep.subr.mxu0 0.0
    %284 = vmatpush1.msra.mxu0 0.0
    %285 = vmatprep.subr.mxu0 0.0
    %286 = vmatpush1.msra.mxu0 0.0
    %287 = vmatprep.subr.mxu0 0.0
    %288 = vmatpush1.msra.mxu0 0.0
    %289 = vmatprep.subr.mxu0 0.0
    %290 = vmatpush1.msra.mxu0 0.0
    %291 = vmatprep.subr.mxu0 0.0
    %292 = vmatpush1.msra.mxu0 %v264
    %293 = vmatprep.subr.mxu0 0.0
    %294 = vmatpush1.msra.mxu0 %v263
    %295 = vmatprep.subr.mxu0 0.0
    %296 = vmatpush1.msra.mxu0 %v262
    %297 = vmatprep.subr.mxu0 0.0
    %298 = vmatpush1.msra.mxu0 %v261
    %299 = vmatprep.subr.mxu0 0.0
    %300 = vmatpush1.msra.mxu0 %v260
    %301 = vmatprep.subr.mxu0 0.0
    %302 = vmatpush2.msra.mxu0 0.0
    %303 = vmatprep.subr.mxu0 0.0
    %304 = vmatpush2.msra.mxu0 0.0
    %305 = vmatprep.subr.mxu0 0.0
    %306 = vmatpush2.msra.mxu0 0.0
    %307 = vmatprep.subr.mxu0 0.0
    %308 = vmatpush2.msra.mxu0 0.0
    %309 = vmatprep.subr.mxu0 0.0
    %310 = vmatpush2.msra.mxu0 0.0
    %311 = vmatprep.subr.mxu0 0.0
    %312 = vmatpush2.msra.mxu0 0.0
    %313 = vmatprep.subr.mxu0 0.0
    %314 = vmatpush2.msra.mxu0 0.0
    %315 = vmatprep.subr.mxu0 0.0
    %316 = vmatpush2.msra.mxu0 0.0
    %317 = vmatprep.subr.mxu0 0.0
    %318 = vmatpush2.msra.mxu0 0.0
    %319 = vmatprep.subr.mxu0 0.0
    %320 = vmatpush2.msra.mxu0 0.0
    %321 = vmatprep.subr.mxu0 0.0
    %322 = vmatpush2.msra.mxu0 0.0
    %323 = vmatprep.subr.mxu0 0.0
    %324 = vmatpush2.msra.mxu0 0.0
    %325 = vmatprep.subr.mxu0 0.0
    %326 = vmatpush2.msra.mxu0 0.0
    %327 = vmatprep.subr.mxu0 0.0
    %328 = vmatpush2.msra.mxu0 0.0
    %329 = vmatprep.subr.mxu0 0.0
    %330 = vmatpush2.msra.mxu0 0.0
    %331 = vmatprep.subr.mxu0 0.0
    %332 = vmatpush2.msra.mxu0 0.0
    %333 = vmatprep.mubr.f32.mxu0 0.0
    %334 = vmatmul.mubr.f32.gmra.mxu0 %v267
    %v335 = vpop.f32.mrf.mxu0
    %v336 = vadd.f32 %v265, %v335
    %v337 = vpop.f32.mrf.mxu0
    %338 = vdwg.mxu0
    %v339 = vmul.f32 %v336, 0.5
    %v340 = vtanh.pop %v339
    %v341 = vmul.f32 %v340, 0.5
    %v342 = vadd.f32 %v341, 0.5
    %v343 = vmul.f32 %v336, %v342
    %v344 = vld [vmem:[#allocation2 + $0x1d0] sm:$0xff]
    %v345 = vld [vmem:[#allocation2 + $0x1e0] sm:$0xff]
    %v346 = vld [vmem:[#allocation2 + $0x1f0] sm:$0xff]
    %v347 = vld [vmem:[#allocation2 + $0x200] sm:$0xff]
    %v348 = vld [vmem:[#allocation2 + $0x210] sm:$0xff]
    %v349 = vld [vmem:[#allocation2 + $0x220] ss:$0 sm:$0xff]
    %v351 = vsel %vm27, %v343, 0
    %353 = vmatprep.subr.mxu0 0.0
    %354 = vmatpush1.msra.mxu0 0.0
    %355 = vmatprep.subr.mxu0 0.0
    %356 = vmatpush1.msra.mxu0 0.0
    %357 = vmatprep.subr.mxu0 0.0
    %358 = vmatpush1.msra.mxu0 0.0
    %359 = vmatprep.subr.mxu0 0.0
    %360 = vmatpush1.msra.mxu0 0.0
    %361 = vmatprep.subr.mxu0 0.0
    %362 = vmatpush1.msra.mxu0 0.0
    %363 = vmatprep.subr.mxu0 0.0
    %364 = vmatpush1.msra.mxu0 0.0
    %365 = vmatprep.subr.mxu0 0.0
    %366 = vmatpush1.msra.mxu0 0.0
    %367 = vmatprep.subr.mxu0 0.0
    %368 = vmatpush1.msra.mxu0 0.0
    %369 = vmatprep.subr.mxu0 0.0
    %370 = vmatpush1.msra.mxu0 0.0
    %371 = vmatprep.subr.mxu0 0.0
    %372 = vmatpush1.msra.mxu0 0.0
    %373 = vmatprep.subr.mxu0 0.0
    %374 = vmatpush1.msra.mxu0 0.0
    %375 = vmatprep.subr.mxu0 0.0
    %376 = vmatpush1.msra.mxu0 %v348
    %377 = vmatprep.subr.mxu0 0.0
    %378 = vmatpush1.msra.mxu0 %v347
    %379 = vmatprep.subr.mxu0 0.0
    %380 = vmatpush1.msra.mxu0 %v346
    %381 = vmatprep.subr.mxu0 0.0
    %382 = vmatpush1.msra.mxu0 %v345
    %383 = vmatprep.subr.mxu0 0.0
    %384 = vmatpush1.msra.mxu0 %v344
    %385 = vmatprep.subr.mxu0 0.0
    %386 = vmatpush2.msra.mxu0 0.0
    %387 = vmatprep.subr.mxu0 0.0
    %388 = vmatpush2.msra.mxu0 0.0
    %389 = vmatprep.subr.mxu0 0.0
    %390 = vmatpush2.msra.mxu0 0.0
    %391 = vmatprep.subr.mxu0 0.0
    %392 = vmatpush2.msra.mxu0 0.0
    %393 = vmatprep.subr.mxu0 0.0
    %394 = vmatpush2.msra.mxu0 0.0
    %395 = vmatprep.subr.mxu0 0.0
    %396 = vmatpush2.msra.mxu0 0.0
    %397 = vmatprep.subr.mxu0 0.0
    %398 = vmatpush2.msra.mxu0 0.0
    %399 = vmatprep.subr.mxu0 0.0
    %400 = vmatpush2.msra.mxu0 0.0
    %401 = vmatprep.subr.mxu0 0.0
    %402 = vmatpush2.msra.mxu0 0.0
    %403 = vmatprep.subr.mxu0 0.0
    %404 = vmatpush2.msra.mxu0 0.0
    %405 = vmatprep.subr.mxu0 0.0
    %406 = vmatpush2.msra.mxu0 0.0
    %407 = vmatprep.subr.mxu0 0.0
    %408 = vmatpush2.msra.mxu0 0.0
    %409 = vmatprep.subr.mxu0 0.0
    %410 = vmatpush2.msra.mxu0 0.0
    %411 = vmatprep.subr.mxu0 0.0
    %412 = vmatpush2.msra.mxu0 0.0
    %413 = vmatprep.subr.mxu0 0.0
    %414 = vmatpush2.msra.mxu0 0.0
    %415 = vmatprep.subr.mxu0 0.0
    %416 = vmatpush2.msra.mxu0 0.0
    %417 = vmatprep.mubr.f32.mxu0 0.0
    %418 = vmatmul.mubr.f32.gmra.mxu0 %v351
    %v419 = vpop.f32.mrf.mxu0
    %v420 = vadd.f32 %v349, %v419
    %v421 = vpop.f32.mrf.mxu0
    %422 = vdwg.mxu0
    %423 = vst.msk [vmem:[%s2 + $0x2] sm:$0x3] %vm47, %v420
    %v424 = vld [vmem:[#allocation2 + $0x230] sm:$0xff]
    %v425 = vld [vmem:[#allocation2 + $0x240] sm:$0xff]
    %v426 = vld [vmem:[#allocation2 + $0x250] sm:$0xff]
    %v427 = vld [vmem:[#allocation2 + $0x260] sm:$0xff]
    %v428 = vld [vmem:[#allocation2 + $0x270] sm:$0xff]
    %v429 = vld [vmem:[#allocation2 + $0x280] ss:$0 sm:$0xff]
    %430 = vmatprep.subr.mxu0 0.0
    %431 = vmatpush1.msra.mxu0 0.0
    %432 = vmatprep.subr.mxu0 0.0
    %433 = vmatpush1.msra.mxu0 0.0
    %434 = vmatprep.subr.mxu0 0.0
    %435 = vmatpush1.msra.mxu0 0.0
    %436 = vmatprep.subr.mxu0 0.0
    %437 = vmatpush1.msra.mxu0 0.0
    %438 = vmatprep.subr.mxu0 0.0
    %439 = vmatpush1.msra.mxu0 0.0
    %440 = vmatprep.subr.mxu0 0.0
    %441 = vmatpush1.msra.mxu0 0.0
    %442 = vmatprep.subr.mxu0 0.0
    %443 = vmatpush1.msra.mxu0 0.0
    %444 = vmatprep.subr.mxu0 0.0
    %445 = vmatpush1.msra.mxu0 0.0
    %446 = vmatprep.subr.mxu0 0.0
    %447 = vmatpush1.msra.mxu0 0.0
    %448 = vmatprep.subr.mxu0 0.0
    %449 = vmatpush1.msra.mxu0 0.0
    %450 = vmatprep.subr.mxu0 0.0
    %451 = vmatpush1.msra.mxu0 0.0
    %452 = vmatprep.subr.mxu0 0.0
    %453 = vmatpush1.msra.mxu0 %v428
    %454 = vmatprep.subr.mxu0 0.0
    %455 = vmatpush1.msra.mxu0 %v427
    %456 = vmatprep.subr.mxu0 0.0
    %457 = vmatpush1.msra.mxu0 %v426
    %458 = vmatprep.subr.mxu0 0.0
    %459 = vmatpush1.msra.mxu0 %v425
    %460 = vmatprep.subr.mxu0 0.0
    %461 = vmatpush1.msra.mxu0 %v424
    %462 = vmatprep.subr.mxu0 0.0
    %463 = vmatpush2.msra.mxu0 0.0
    %464 = vmatprep.subr.mxu0 0.0
    %465 = vmatpush2.msra.mxu0 0.0
    %466 = vmatprep.subr.mxu0 0.0
    %467 = vmatpush2.msra.mxu0 0.0
    %468 = vmatprep.subr.mxu0 0.0
    %469 = vmatpush2.msra.mxu0 0.0
    %470 = vmatprep.subr.mxu0 0.0
    %471 = vmatpush2.msra.mxu0 0.0
    %472 = vmatprep.subr.mxu0 0.0
    %473 = vmatpush2.msra.mxu0 0.0
    %474 = vmatprep.subr.mxu0 0.0
    %475 = vmatpush2.msra.mxu0 0.0
    %476 = vmatprep.subr.mxu0 0.0
    %477 = vmatpush2.msra.mxu0 0.0
    %478 = vmatprep.subr.mxu0 0.0
    %479 = vmatpush2.msra.mxu0 0.0
    %480 = vmatprep.subr.mxu0 0.0
    %481 = vmatpush2.msra.mxu0 0.0
    %482 = vmatprep.subr.mxu0 0.0
    %483 = vmatpush2.msra.mxu0 0.0
    %484 = vmatprep.subr.mxu0 0.0
    %485 = vmatpush2.msra.mxu0 0.0
    %486 = vmatprep.subr.mxu0 0.0
    %487 = vmatpush2.msra.mxu0 0.0
    %488 = vmatprep.subr.mxu0 0.0
    %489 = vmatpush2.msra.mxu0 0.0
    %490 = vmatprep.subr.mxu0 0.0
    %491 = vmatpush2.msra.mxu0 0.0
    %492 = vmatprep.subr.mxu0 0.0
    %493 = vmatpush2.msra.mxu0 0.0
    %494 = vmatprep.mubr.f32.mxu0 0.0
    %495 = vmatmul.mubr.f32.gmra.mxu0 %v56
    %v496 = vpop.f32.mrf.mxu0
    %v497 = vadd.f32 %v429, %v496
    %v498 = vpop.f32.mrf.mxu0
    %499 = vmatprep.mubr.f32.mxu0 0.0
    %500 = vmatmul.mubr.f32.gmra.mxu0 %v59
    %v501 = vpop.f32.mrf.mxu0
    %v502 = vadd.f32 %v429, %v501
    %v503 = vpop.f32.mrf.mxu0
    %504 = vdwg.mxu0
    %v505 = vld [vmem:[#allocation2 + $0x290] sm:$0xff]
    %v506 = vld [vmem:[#allocation2 + $0x2a0] sm:$0xff]
    %v507 = vld [vmem:[#allocation2 + $0x2b0] sm:$0xff]
    %v508 = vld [vmem:[#allocation2 + $0x2c0] sm:$0xff]
    %v509 = vld [vmem:[#allocation2 + $0x2d0] sm:$0xff]
    %v510 = vld [vmem:[#allocation2 + $0x2e0] ss:$0 sm:$0xff]
    %511 = vmatprep.subr.mxu0 0.0
    %512 = vmatpush1.msra.mxu0 0.0
    %513 = vmatprep.subr.mxu0 0.0
    %514 = vmatpush1.msra.mxu0 0.0
    %515 = vmatprep.subr.mxu0 0.0
    %516 = vmatpush1.msra.mxu0 0.0
    %517 = vmatprep.subr.mxu0 0.0
    %518 = vmatpush1.msra.mxu0 0.0
    %519 = vmatprep.subr.mxu0 0.0
    %520 = vmatpush1.msra.mxu0 0.0
    %521 = vmatprep.subr.mxu0 0.0
    %522 = vmatpush1.msra.mxu0 0.0
    %523 = vmatprep.subr.mxu0 0.0
    %524 = vmatpush1.msra.mxu0 0.0
    %525 = vmatprep.subr.mxu0 0.0
    %526 = vmatpush1.msra.mxu0 0.0
    %527 = vmatprep.subr.mxu0 0.0
    %528 = vmatpush1.msra.mxu0 0.0
    %529 = vmatprep.subr.mxu0 0.0
    %530 = vmatpush1.msra.mxu0 0.0
    %531 = vmatprep.subr.mxu0 0.0
    %532 = vmatpush1.msra.mxu0 0.0
    %533 = vmatprep.subr.mxu0 0.0
    %534 = vmatpush1.msra.mxu0 %v509
    %535 = vmatprep.subr.mxu0 0.0
    %536 = vmatpush1.msra.mxu0 %v508
    %537 = vmatprep.subr.mxu0 0.0
    %538 = vmatpush1.msra.mxu0 %v507
    %539 = vmatprep.subr.mxu0 0.0
    %540 = vmatpush1.msra.mxu0 %v506
    %541 = vmatprep.subr.mxu0 0.0
    %542 = vmatpush1.msra.mxu0 %v505
    %543 = vmatprep.subr.mxu0 0.0
    %544 = vmatpush2.msra.mxu0 0.0
    %545 = vmatprep.subr.mxu0 0.0
    %546 = vmatpush2.msra.mxu0 0.0
    %547 = vmatprep.subr.mxu0 0.0
    %548 = vmatpush2.msra.mxu0 0.0
    %549 = vmatprep.subr.mxu0 0.0
    %550 = vmatpush2.msra.mxu0 0.0
    %551 = vmatprep.subr.mxu0 0.0
    %552 = vmatpush2.msra.mxu0 0.0
    %553 = vmatprep.subr.mxu0 0.0
    %554 = vmatpush2.msra.mxu0 0.0
    %555 = vmatprep.subr.mxu0 0.0
    %556 = vmatpush2.msra.mxu0 0.0
    %557 = vmatprep.subr.mxu0 0.0
    %558 = vmatpush2.msra.mxu0 0.0
    %559 = vmatprep.subr.mxu0 0.0
    %560 = vmatpush2.msra.mxu0 0.0
    %561 = vmatprep.subr.mxu0 0.0
    %562 = vmatpush2.msra.mxu0 0.0
    %563 = vmatprep.subr.mxu0 0.0
    %564 = vmatpush2.msra.mxu0 0.0
    %565 = vmatprep.subr.mxu0 0.0
    %566 = vmatpush2.msra.mxu0 0.0
    %567 = vmatprep.subr.mxu0 0.0
    %568 = vmatpush2.msra.mxu0 0.0
    %569 = vmatprep.subr.mxu0 0.0
    %570 = vmatpush2.msra.mxu0 0.0
    %571 = vmatprep.subr.mxu0 0.0
    %572 = vmatpush2.msra.mxu0 0.0
    %573 = vmatprep.subr.mxu0 0.0
    %574 = vmatpush2.msra.mxu0 0.0
    %575 = vmatprep.mubr.f32.mxu0 0.0
    %576 = vmatmul.mubr.f32.gmra.mxu0 %v56
    %v577 = vpop.f32.mrf.mxu0
    %v578 = vadd.f32 %v510, %v577
    %v579 = vpop.f32.mrf.mxu0
    %580 = vmatprep.mubr.f32.mxu0 0.0
    %581 = vmatmul.mubr.f32.gmra.mxu0 %v59
    %v582 = vpop.f32.mrf.mxu0
    %v583 = vadd.f32 %v510, %v582
    %v584 = vpop.f32.mrf.mxu0
    %585 = vdwg.mxu0
    %v586 = vsel %vm27, %v497, -inf
    %v587 = vsel %vm27, %v502, -inf
    %v588 = vmax.f32 %v586, %v587
    %v589 = vrot.slane %v588, 4
    %v590 = vmax.f32 %v588, %v589
    %v591 = vrot.slane %v590, 2
    %v592 = vmax.f32 %v590, %v591
    %v593 = vrot.slane %v592, 1
    %v594 = vmax.f32 %v592, %v593
    %v595 = vsub.f32 %v497, %v594
    %v596 = vsub.f32 %v502, %v594
    %v597 = vmul.f32 %v595, 1.442695
    %v598 = vpow.pop %v597
    %v599 = vmul.f32 %v596, 1.442695
    %v600 = vpow.pop %v599
    %v601 = vmul.f32 %v598, %v578
    %v602 = vmul.f32 %v600, %v583
    %v603 = vsel %vm27, %v601, 0.0
    %v604 = vrot.slane %v603, 4
    %v605 = vadd.f32 %v603, %v604
    %v606 = vrot.slane %v605, 2
    %v607 = vadd.f32 %v605, %v606
    %v608 = vrot.slane %v607, 1
    %v609 = vadd.f32 %v607, %v608
    %v610 = vsel %vm27, %v602, 0.0
    %v611 = vrot.slane %v610, 4
    %v612 = vadd.f32 %v610, %v611
    %v613 = vrot.slane %v612, 2
    %v614 = vadd.f32 %v612, %v613
    %v615 = vrot.slane %v614, 1
    %v616 = vadd.f32 %v614, %v615
    %v617 = vsel %vm45, %v609, %v616
    %v618 = vsel %vm27, %v598, 0.0
    %v619 = vrot.slane %v618, 4
    %v620 = vadd.f32 %v618, %v619
    %v621 = vrot.slane %v620, 2
    %v622 = vadd.f32 %v620, %v621
    %v623 = vrot.slane %v622, 1
    %v624 = vadd.f32 %v622, %v623
    %v625 = vsel %vm27, %v600, 0.0
    %v626 = vrot.slane %v625, 4
    %v627 = vadd.f32 %v625, %v626
    %v628 = vrot.slane %v627, 2
    %v629 = vadd.f32 %v627, %v628
    %v630 = vrot.slane %v629, 1
    %v631 = vadd.f32 %v629, %v630
    %v632 = vsel %vm45, %v624, %v631
    %v633 = vrcp.pop %v632
    %v634 = vmul.f32 %v617, %v633
    %v635 = vld [vmem:[#allocation2 + $0x2f0] sm:$0xff]
    %v636 = vld [vmem:[#allocation2 + $0x300] sm:$0xff]
    %v637 = vld [vmem:[#allocation2 + $0x310] sm:$0xff]
    %v638 = vld [vmem:[#allocation2 + $0x320] sm:$0xff]
    %v639 = vld [vmem:[#allocation2 + $0x330] sm:$0xff]
    %v640 = vld [vmem:[#allocation2 + $0x340] ss:$0 sm:$0xff]
    %v642 = vsel %vm27, %v634, 0
    %644 = vmatprep.subr.mxu0 0.0
    %645 = vmatpush1.msra.mxu0 0.0
    %646 = vmatprep.subr.mxu0 0.0
    %647 = vmatpush1.msra.mxu0 0.0
    %648 = vmatprep.subr.mxu0 0.0
    %649 = vmatpush1.msra.mxu0 0.0
    %650 = vmatprep.subr.mxu0 0.0
    %651 = vmatpush1.msra.mxu0 0.0
    %652 = vmatprep.subr.mxu0 0.0
    %653 = vmatpush1.msra.mxu0 0.0
    %654 = vmatprep.subr.mxu0 0.0
    %655 = vmatpush1.msra.mxu0 0.0
    %656 = vmatprep.subr.mxu0 0.0
    %657 = vmatpush1.msra.mxu0 0.0
    %658 = vmatprep.subr.mxu0 0.0
    %659 = vmatpush1.msra.mxu0 0.0
    %660 = vmatprep.subr.mxu0 0.0
    %661 = vmatpush1.msra.mxu0 0.0
    %662 = vmatprep.subr.mxu0 0.0
    %663 = vmatpush1.msra.mxu0 0.0
    %664 = vmatprep.subr.mxu0 0.0
    %665 = vmatpush1.msra.mxu0 0.0
    %666 = vmatprep.subr.mxu0 0.0
    %667 = vmatpush1.msra.mxu0 %v639
    %668 = vmatprep.subr.mxu0 0.0
    %669 = vmatpush1.msra.mxu0 %v638
    %670 = vmatprep.subr.mxu0 0.0
    %671 = vmatpush1.msra.mxu0 %v637
    %672 = vmatprep.subr.mxu0 0.0
    %673 = vmatpush1.msra.mxu0 %v636
    %674 = vmatprep.subr.mxu0 0.0
    %675 = vmatpush1.msra.mxu0 %v635
    %676 = vmatprep.subr.mxu0 0.0
    %677 = vmatpush2.msra.mxu0 0.0
    %678 = vmatprep.subr.mxu0 0.0
    %679 = vmatpush2.msra.mxu0 0.0
    %680 = vmatprep.subr.mxu0 0.0
    %681 = vmatpush2.msra.mxu0 0.0
    %682 = vmatprep.subr.mxu0 0.0
    %683 = vmatpush2.msra.mxu0 0.0
    %684 = vmatprep.subr.mxu0 0.0
    %685 = vmatpush2.msra.mxu0 0.0
    %686 = vmatprep.subr.mxu0 0.0
    %687 = vmatpush2.msra.mxu0 0.0
    %688 = vmatprep.subr.mxu0 0.0
    %689 = vmatpush2.msra.mxu0 0.0
    %690 = vmatprep.subr.mxu0 0.0
    %691 = vmatpush2.msra.mxu0 0.0
    %692 = vmatprep.subr.mxu0 0.0
    %693 = vmatpush2.msra.mxu0 0.0
    %694 = vmatprep.subr.mxu0 0.0
    %695 = vmatpush2.msra.mxu0 0.0
    %696 = vmatprep.subr.mxu0 0.0
    %697 = vmatpush2.msra.mxu0 0.0
    %698 = vmatprep.subr.mxu0 0.0
    %699 = vmatpush2.msra.mxu0 0.0
    %700 = vmatprep.subr.mxu0 0.0
    %701 = vmatpush2.msra.mxu0 0.0
    %702 = vmatprep.subr.mxu0 0.0
    %703 = vmatpush2.msra.mxu0 0.0
    %704 = vmatprep.subr.mxu0 0.0
    %705 = vmatpush2.msra.mxu0 0.0
    %706 = vmatprep.subr.mxu0 0.0
    %707 = vmatpush2.msra.mxu0 0.0
    %708 = vmatprep.mubr.f32.mxu0 0.0
    %709 = vmatmul.mubr.f32.gmra.mxu0 %v642
    %v710 = vpop.f32.mrf.mxu0
    %v711 = vadd.f32 %v640, %v710
    %v712 = vpop.f32.mrf.mxu0
    %713 = vdwg.mxu0
    %v714 = vmul.f32 %v711, 0.5
    %v715 = vtanh.pop %v714
    %v716 = vmul.f32 %v715, 0.5
    %v717 = vadd.f32 %v716, 0.5
    %v718 = vmul.f32 %v711, %v717
    %v719 = vld [vmem:[#allocation2 + $0x350] sm:$0xff]
    %v720 = vld [vmem:[#allocation2 + $0x360] sm:$0xff]
    %v721 = vld [vmem:[#allocation2 + $0x370] sm:$0xff]
    %v722 = vld [vmem:[#allocation2 + $0x380] sm:$0xff]
    %v723 = vld [vmem:[#allocation2 + $0x390] sm:$0xff]
    %v724 = vld [vmem:[#allocation2 + $0x3a0] ss:$0 sm:$0xff]
    %v726 = vsel %vm27, %v718, 0
    %728 = vmatprep.subr.mxu0 0.0
    %729 = vmatpush1.msra.mxu0 0.0
    %730 = vmatprep.subr.mxu0 0.0
    %731 = vmatpush1.msra.mxu0 0.0
    %732 = vmatprep.subr.mxu0 0.0
    %733 = vmatpush1.msra.mxu0 0.0
    %734 = vmatprep.subr.mxu0 0.0
    %735 = vmatpush1.msra.mxu0 0.0
    %736 = vmatprep.subr.mxu0 0.0
    %737 = vmatpush1.msra.mxu0 0.0
    %738 = vmatprep.subr.mxu0 0.0
    %739 = vmatpush1.msra.mxu0 0.0
    %740 = vmatprep.subr.mxu0 0.0
    %741 = vmatpush1.msra.mxu0 0.0
    %742 = vmatprep.subr.mxu0 0.0
    %743 = vmatpush1.msra.mxu0 0.0
    %744 = vmatprep.subr.mxu0 0.0
    %745 = vmatpush1.msra.mxu0 0.0
    %746 = vmatprep.subr.mxu0 0.0
    %747 = vmatpush1.msra.mxu0 0.0
    %748 = vmatprep.subr.mxu0 0.0
    %749 = vmatpush1.msra.mxu0 0.0
    %750 = vmatprep.subr.mxu0 0.0
    %751 = vmatpush1.msra.mxu0 %v723
    %752 = vmatprep.subr.mxu0 0.0
    %753 = vmatpush1.msra.mxu0 %v722
    %754 = vmatprep.subr.mxu0 0.0
    %755 = vmatpush1.msra.mxu0 %v721
    %756 = vmatprep.subr.mxu0 0.0
    %757 = vmatpush1.msra.mxu0 %v720
    %758 = vmatprep.subr.mxu0 0.0
    %759 = vmatpush1.msra.mxu0 %v719
    %760 = vmatprep.subr.mxu0 0.0
    %761 = vmatpush2.msra.mxu0 0.0
    %762 = vmatprep.subr.mxu0 0.0
    %763 = vmatpush2.msra.mxu0 0.0
    %764 = vmatprep.subr.mxu0 0.0
    %765 = vmatpush2.msra.mxu0 0.0
    %766 = vmatprep.subr.mxu0 0.0
    %767 = vmatpush2.msra.mxu0 0.0
    %768 = vmatprep.subr.mxu0 0.0
    %769 = vmatpush2.msra.mxu0 0.0
    %770 = vmatprep.subr.mxu0 0.0
    %771 = vmatpush2.msra.mxu0 0.0
    %772 = vmatprep.subr.mxu0 0.0
    %773 = vmatpush2.msra.mxu0 0.0
    %774 = vmatprep.subr.mxu0 0.0
    %775 = vmatpush2.msra.mxu0 0.0
    %776 = vmatprep.subr.mxu0 0.0
    %777 = vmatpush2.msra.mxu0 0.0
    %778 = vmatprep.subr.mxu0 0.0
    %779 = vmatpush2.msra.mxu0 0.0
    %780 = vmatprep.subr.mxu0 0.0
    %781 = vmatpush2.msra.mxu0 0.0
    %782 = vmatprep.subr.mxu0 0.0
    %783 = vmatpush2.msra.mxu0 0.0
    %784 = vmatprep.subr.mxu0 0.0
    %785 = vmatpush2.msra.mxu0 0.0
    %786 = vmatprep.subr.mxu0 0.0
    %787 = vmatpush2.msra.mxu0 0.0
    %788 = vmatprep.subr.mxu0 0.0
    %789 = vmatpush2.msra.mxu0 0.0
    %790 = vmatprep.subr.mxu0 0.0
    %791 = vmatpush2.msra.mxu0 0.0
    %792 = vmatprep.mubr.f32.mxu0 0.0
    %793 = vmatmul.mubr.f32.gmra.mxu0 %v726
    %v794 = vpop.f32.mrf.mxu0
    %v795 = vadd.f32 %v724, %v794
    %v796 = vpop.f32.mrf.mxu0
    %797 = vdwg.mxu0
    %798 = vst.msk [vmem:[%s2 + $0x4] sm:$0x3] %vm47, %v795
    %v799 = vld [vmem:[#allocation2 + $0x3b0] sm:$0xff]
    %v800 = vld [vmem:[#allocation2 + $0x3c0] sm:$0xff]
    %v801 = vld [vmem:[#allocation2 + $0x3d0] sm:$0xff]
    %v802 = vld [vmem:[#allocation2 + $0x3e0] sm:$0xff]
    %v803 = vld [vmem:[#allocation2 + $0x3f0] sm:$0xff]
    %v804 = vld [vmem:[#allocation2 + $0x400] ss:$0 sm:$0xff]
    %805 = vmatprep.subr.mxu0 0.0
    %806 = vmatpush1.msra.mxu0 0.0
    %807 = vmatprep.subr.mxu0 0.0
    %808 = vmatpush1.msra.mxu0 0.0
    %809 = vmatprep.subr.mxu0 0.0
    %810 = vmatpush1.msra.mxu0 0.0
    %811 = vmatprep.subr.mxu0 0.0
    %812 = vmatpush1.msra.mxu0 0.0
    %813 = vmatprep.subr.mxu0 0.0
    %814 = vmatpush1.msra.mxu0 0.0
    %815 = vmatprep.subr.mxu0 0.0
    %816 = vmatpush1.msra.mxu0 0.0
    %817 = vmatprep.subr.mxu0 0.0
    %818 = vmatpush1.msra.mxu0 0.0
    %819 = vmatprep.subr.mxu0 0.0
    %820 = vmatpush1.msra.mxu0 0.0
    %821 = vmatprep.subr.mxu0 0.0
    %822 = vmatpush1.msra.mxu0 0.0
    %823 = vmatprep.subr.mxu0 0.0
    %824 = vmatpush1.msra.mxu0 0.0
    %825 = vmatprep.subr.mxu0 0.0
    %826 = vmatpush1.msra.mxu0 0.0
    %827 = vmatprep.subr.mxu0 0.0
    %828 = vmatpush1.msra.mxu0 %v803
    %829 = vmatprep.subr.mxu0 0.0
    %830 = vmatpush1.msra.mxu0 %v802
    %831 = vmatprep.subr.mxu0 0.0
    %832 = vmatpush1.msra.mxu0 %v801
    %833 = vmatprep.subr.mxu0 0.0
    %834 = vmatpush1.msra.mxu0 %v800
    %835 = vmatprep.subr.mxu0 0.0
    %836 = vmatpush1.msra.mxu0 %v799
    %837 = vmatprep.subr.mxu0 0.0
    %838 = vmatpush2.msra.mxu0 0.0
    %839 = vmatprep.subr.mxu0 0.0
    %840 = vmatpush2.msra.mxu0 0.0
    %841 = vmatprep.subr.mxu0 0.0
    %842 = vmatpush2.msra.mxu0 0.0
    %843 = vmatprep.subr.mxu0 0.0
    %844 = vmatpush2.msra.mxu0 0.0
    %845 = vmatprep.subr.mxu0 0.0
    %846 = vmatpush2.msra.mxu0 0.0
    %847 = vmatprep.subr.mxu0 0.0
    %848 = vmatpush2.msra.mxu0 0.0
    %849 = vmatprep.subr.mxu0 0.0
    %850 = vmatpush2.msra.mxu0 0.0
    %851 = vmatprep.subr.mxu0 0.0
    %852 = vmatpush2.msra.mxu0 0.0
    %853 = vmatprep.subr.mxu0 0.0
    %854 = vmatpush2.msra.mxu0 0.0
    %855 = vmatprep.subr.mxu0 0.0
    %856 = vmatpush2.msra.mxu0 0.0
    %857 = vmatprep.subr.mxu0 0.0
    %858 = vmatpush2.msra.mxu0 0.0
    %859 = vmatprep.subr.mxu0 0.0
    %860 = vmatpush2.msra.mxu0 0.0
    %861 = vmatprep.subr.mxu0 0.0
    %862 = vmatpush2.msra.mxu0 0.0
    %863 = vmatprep.subr.mxu0 0.0
    %864 = vmatpush2.msra.mxu0 0.0
    %865 = vmatprep.subr.mxu0 0.0
    %866 = vmatpush2.msra.mxu0 0.0
    %867 = vmatprep.subr.mxu0 0.0
    %868 = vmatpush2.msra.mxu0 0.0
    %869 = vmatprep.mubr.f32.mxu0 0.0
    %870 = vmatmul.mubr.f32.gmra.mxu0 %v56
    %v871 = vpop.f32.mrf.mxu0
    %v872 = vadd.f32 %v804, %v871
    %v873 = vpop.f32.mrf.mxu0
    %874 = vmatprep.mubr.f32.mxu0 0.0
    %875 = vmatmul.mubr.f32.gmra.mxu0 %v59
    %v876 = vpop.f32.mrf.mxu0
    %v877 = vadd.f32 %v804, %v876
    %v878 = vpop.f32.mrf.mxu0
    %879 = vdwg.mxu0
    %v880 = vmul.f32 %v872, 0.5
    %v881 = vmul.f32 %v877, 0.5
    %v882 = vtanh.pop %v880
    %v883 = vtanh.pop %v881
    %v884 = vmul.f32 %v882, 0.5
    %v885 = vmul.f32 %v883, 0.5
    %v886 = vadd.f32 %v884, 0.5
    %v887 = vadd.f32 %v885, 0.5
    %v888 = vmul.f32 %v872, %v886
    %v889 = vmul.f32 %v877, %v887
    %v890 = vld [vmem:[#allocation2 + $0x410] sm:$0xff]
    %v891 = vld [vmem:[#allocation2 + $0x420] sm:$0xff]
    %v892 = vld [vmem:[#allocation2 + $0x430] sm:$0xff]
    %v893 = vld [vmem:[#allocation2 + $0x440] sm:$0xff]
    %v894 = vld [vmem:[#allocation2 + $0x450] sm:$0xff]
    %v895 = vld [vmem:[#allocation2 + $0x460] sm:$0xff]
    %v896 = vld [vmem:[#allocation2 + $0x470] sm:$0xff]
    %v897 = vld [vmem:[#allocation2 + $0x480] sm:$0xff]
    %v898 = vld [vmem:[#allocation2 + $0x490] sm:$0xff]
    %v899 = vld [vmem:[#allocation2 + $0x4a0] sm:$0xff]
    %v900 = vld [vmem:[#allocation2 + $0x4b0] ss:$0 sm:$0xff]
    %vm901 = vcmask 654336
    %v903 = vsel %vm901, %v888, 0
    %v906 = vsel %vm901, %v889, 0
    %908 = vmatprep.subr.mxu0 0.0
    %909 = vmatpush1.msra.mxu0 0.0
    %910 = vmatprep.subr.mxu0 0.0
    %911 = vmatpush1.msra.mxu0 0.0
    %912 = vmatprep.subr.mxu0 0.0
    %913 = vmatpush1.msra.mxu0 0.0
    %914 = vmatprep.subr.mxu0 0.0
    %915 = vmatpush1.msra.mxu0 0.0
    %916 = vmatprep.subr.mxu0 0.0
    %917 = vmatpush1.msra.mxu0 0.0
    %918 = vmatprep.subr.mxu0 0.0
    %919 = vmatpush1.msra.mxu0 0.0
    %920 = vmatprep.subr.mxu0 0.0
    %921 = vmatpush1.msra.mxu0 %v899
    %922 = vmatprep.subr.mxu0 0.0
    %923 = vmatpush1.msra.mxu0 %v898
    %924 = vmatprep.subr.mxu0 0.0
    %925 = vmatpush1.msra.mxu0 %v897
    %926 = vmatprep.subr.mxu0 0.0
    %927 = vmatpush1.msra.mxu0 %v896
    %928 = vmatprep.subr.mxu0 0.0
    %929 = vmatpush1.msra.mxu0 %v895
    %930 = vmatprep.subr.mxu0 0.0
    %931 = vmatpush1.msra.mxu0 %v894
    %932 = vmatprep.subr.mxu0 0.0
    %933 = vmatpush1.msra.mxu0 %v893
    %934 = vmatprep.subr.mxu0 0.0
    %935 = vmatpush1.msra.mxu0 %v892
    %936 = vmatprep.subr.mxu0 0.0
    %937 = vmatpush1.msra.mxu0 %v891
    %938 = vmatprep.subr.mxu0 0.0
    %939 = vmatpush1.msra.mxu0 %v890
    %940 = vmatprep.subr.mxu0 0.0
    %941 = vmatpush2.msra.mxu0 0.0
    %942 = vmatprep.subr.mxu0 0.0
    %943 = vmatpush2.msra.mxu0 0.0
    %944 = vmatprep.subr.mxu0 0.0
    %945 = vmatpush2.msra.mxu0 0.0
    %946 = vmatprep.subr.mxu0 0.0
    %947 = vmatpush2.msra.mxu0 0.0
    %948 = vmatprep.subr.mxu0 0.0
    %949 = vmatpush2.msra.mxu0 0.0
    %950 = vmatprep.subr.mxu0 0.0
    %951 = vmatpush2.msra.mxu0 0.0
    %952 = vmatprep.subr.mxu0 0.0
    %953 = vmatpush2.msra.mxu0 0.0
    %954 = vmatprep.subr.mxu0 0.0
    %955 = vmatpush2.msra.mxu0 0.0
    %956 = vmatprep.subr.mxu0 0.0
    %957 = vmatpush2.msra.mxu0 0.0
    %958 = vmatprep.subr.mxu0 0.0
    %959 = vmatpush2.msra.mxu0 0.0
    %960 = vmatprep.subr.mxu0 0.0
    %961 = vmatpush2.msra.mxu0 0.0
    %962 = vmatprep.subr.mxu0 0.0
    %963 = vmatpush2.msra.mxu0 0.0
    %964 = vmatprep.subr.mxu0 0.0
    %965 = vmatpush2.msra.mxu0 0.0
    %966 = vmatprep.subr.mxu0 0.0
    %967 = vmatpush2.msra.mxu0 0.0
    %968 = vmatprep.subr.mxu0 0.0
    %969 = vmatpush2.msra.mxu0 0.0
    %970 = vmatprep.subr.mxu0 0.0
    %971 = vmatpush2.msra.mxu0 0.0
    %972 = vmatprep.mubr.f32.mxu0 0.0
    %973 = vmatmul.mubr.f32.gmra.mxu0 %v903
    %v974 = vpop.f32.mrf.mxu0
    %v975 = vadd.f32 %v900, %v974
    %v976 = vpop.f32.mrf.mxu0
    %977 = vmatprep.mubr.f32.mxu0 0.0
    %978 = vmatmul.mubr.f32.gmra.mxu0 %v906
    %v979 = vpop.f32.mrf.mxu0
    %v980 = vadd.f32 %v900, %v979
    %v981 = vpop.f32.mrf.mxu0
    %982 = vdwg.mxu0
    %v983 = vmul.f32 %v975, 0.5
    %v984 = vmul.f32 %v980, 0.5
    %v985 = vtanh.pop %v983
    %v986 = vtanh.pop %v984
    %v987 = vmul.f32 %v985, 0.5
    %v988 = vmul.f32 %v986, 0.5
    %v989 = vadd.f32 %v987, 0.5
    %v990 = vadd.f32 %v988, 0.5
    %v991 = vmul.f32 %v975, %v989
    %v992 = vmul.f32 %v980, %v990
    %v993 = vld [vmem:[#allocation2 + $0x4c0] sm:$0xff]
    %v994 = vld [vmem:[#allocation2 + $0x4d0] sm:$0xff]
    %v995 = vld [vmem:[#allocation2 + $0x4e0] sm:$0xff]
    %v996 = vld [vmem:[#allocation2 + $0x4f0] sm:$0xff]
    %v997 = vld [vmem:[#allocation2 + $0x500] sm:$0xff]
    %v998 = vld [vmem:[#allocation2 + $0x510] sm:$0xff]
    %v999 = vld [vmem:[#allocation2 + $0x520] sm:$0xff]
    %v1000 = vld [vmem:[#allocation2 + $0x530] sm:$0xff]
    %v1001 = vld [vmem:[#allocation2 + $0x540] sm:$0xff]
    %v1002 = vld [vmem:[#allocation2 + $0x550] sm:$0xff]
    %v1003 = vld [vmem:[#allocation2 + $0x560] ss:$0 sm:$0xff]
    %v1005 = vsel %vm901, %v991, 0
    %v1008 = vsel %vm901, %v992, 0
    %1010 = vmatprep.subr.mxu0 0.0
    %1011 = vmatpush1.msra.mxu0 0.0
    %1012 = vmatprep.subr.mxu0 0.0
    %1013 = vmatpush1.msra.mxu0 0.0
    %1014 = vmatprep.subr.mxu0 0.0
    %1015 = vmatpush1.msra.mxu0 0.0
    %1016 = vmatprep.subr.mxu0 0.0
    %1017 = vmatpush1.msra.mxu0 0.0
    %1018 = vmatprep.subr.mxu0 0.0
    %1019 = vmatpush1.msra.mxu0 0.0
    %1020 = vmatprep.subr.mxu0 0.0
    %1021 = vmatpush1.msra.mxu0 0.0
    %1022 = vmatprep.subr.mxu0 0.0
    %1023 = vmatpush1.msra.mxu0 %v1002
    %1024 = vmatprep.subr.mxu0 0.0
    %1025 = vmatpush1.msra.mxu0 %v1001
    %1026 = vmatprep.subr.mxu0 0.0
    %1027 = vmatpush1.msra.mxu0 %v1000
    %1028 = vmatprep.subr.mxu0 0.0
    %1029 = vmatpush1.msra.mxu0 %v999
    %1030 = vmatprep.subr.mxu0 0.0
    %1031 = vmatpush1.msra.mxu0 %v998
    %1032 = vmatprep.subr.mxu0 0.0
    %1033 = vmatpush1.msra.mxu0 %v997
    %1034 = vmatprep.subr.mxu0 0.0
    %1035 = vmatpush1.msra.mxu0 %v996
    %1036 = vmatprep.subr.mxu0 0.0
    %1037 = vmatpush1.msra.mxu0 %v995
    %1038 = vmatprep.subr.mxu0 0.0
    %1039 = vmatpush1.msra.mxu0 %v994
    %1040 = vmatprep.subr.mxu0 0.0
    %1041 = vmatpush1.msra.mxu0 %v993
    %1042 = vmatprep.subr.mxu0 0.0
    %1043 = vmatpush2.msra.mxu0 0.0
    %1044 = vmatprep.subr.mxu0 0.0
    %1045 = vmatpush2.msra.mxu0 0.0
    %1046 = vmatprep.subr.mxu0 0.0
    %1047 = vmatpush2.msra.mxu0 0.0
    %1048 = vmatprep.subr.mxu0 0.0
    %1049 = vmatpush2.msra.mxu0 0.0
    %1050 = vmatprep.subr.mxu0 0.0
    %1051 = vmatpush2.msra.mxu0 0.0
    %1052 = vmatprep.subr.mxu0 0.0
    %1053 = vmatpush2.msra.mxu0 0.0
    %1054 = vmatprep.subr.mxu0 0.0
    %1055 = vmatpush2.msra.mxu0 0.0
    %1056 = vmatprep.subr.mxu0 0.0
    %1057 = vmatpush2.msra.mxu0 0.0
    %1058 = vmatprep.subr.mxu0 0.0
    %1059 = vmatpush2.msra.mxu0 0.0
    %1060 = vmatprep.subr.mxu0 0.0
    %1061 = vmatpush2.msra.mxu0 0.0
    %1062 = vmatprep.subr.mxu0 0.0
    %1063 = vmatpush2.msra.mxu0 0.0
    %1064 = vmatprep.subr.mxu0 0.0
    %1065 = vmatpush2.msra.mxu0 0.0
    %1066 = vmatprep.subr.mxu0 0.0
    %1067 = vmatpush2.msra.mxu0 0.0
    %1068 = vmatprep.subr.mxu0 0.0
    %1069 = vmatpush2.msra.mxu0 0.0
    %1070 = vmatprep.subr.mxu0 0.0
    %1071 = vmatpush2.msra.mxu0 0.0
    %1072 = vmatprep.subr.mxu0 0.0
    %1073 = vmatpush2.msra.mxu0 0.0
    %1074 = vmatprep.mubr.f32.mxu0 0.0
    %1075 = vmatmul.mubr.f32.gmra.mxu0 %v1005
    %v1076 = vpop.f32.mrf.mxu0
    %v1077 = vadd.f32 %v1003, %v1076
    %v1078 = vpop.f32.mrf.mxu0
    %1079 = vmatprep.mubr.f32.mxu0 0.0
    %1080 = vmatmul.mubr.f32.gmra.mxu0 %v1008
    %v1081 = vpop.f32.mrf.mxu0
    %v1082 = vadd.f32 %v1003, %v1081
    %v1083 = vpop.f32.mrf.mxu0
    %1084 = vdwg.mxu0
    %v1085 = vmul.f32 %v1077, 0.5
    %v1086 = vmul.f32 %v1082, 0.5
    %v1087 = vtanh.pop %v1085
    %v1088 = vtanh.pop %v1086
    %v1089 = vmul.f32 %v1087, 0.5
    %v1090 = vmul.f32 %v1088, 0.5
    %v1091 = vadd.f32 %v1089, 0.5
    %v1092 = vadd.f32 %v1090, 0.5
    %v1093 = vmul.f32 %v1077, %v1091
    %v1094 = vmul.f32 %v1082, %v1092
    %v1095 = vld [vmem:[#allocation2 + $0x60] sm:$0xff]
    %v1096 = vld [vmem:[#allocation2 + $0x70] sm:$0xff]
    %v1097 = vld [vmem:[#allocation2 + $0x80] sm:$0xff]
    %v1098 = vld [vmem:[#allocation2 + $0x90] sm:$0xff]
    %v1099 = vld [vmem:[#allocation2 + $0xa0] sm:$0xff]
    %v1101 = vsel %vm27, %v1093, 0
    %v1104 = vsel %vm27, %v1094, 0
    %1106 = vmatprep.subr.mxu0 0.0
    %1107 = vmatpush1.msra.mxu0 0.0
    %1108 = vmatprep.subr.mxu0 0.0
    %1109 = vmatpush1.msra.mxu0 0.0
    %1110 = vmatprep.subr.mxu0 0.0
    %1111 = vmatpush1.msra.mxu0 0.0
    %1112 = vmatprep.subr.mxu0 0.0
    %1113 = vmatpush1.msra.mxu0 0.0
    %1114 = vmatprep.subr.mxu0 0.0
    %1115 = vmatpush1.msra.mxu0 0.0
    %1116 = vmatprep.subr.mxu0 0.0
    %1117 = vmatpush1.msra.mxu0 0.0
    %1118 = vmatprep.subr.mxu0 0.0
    %1119 = vmatpush1.msra.mxu0 0.0
    %1120 = vmatprep.subr.mxu0 0.0
    %1121 = vmatpush1.msra.mxu0 0.0
    %1122 = vmatprep.subr.mxu0 0.0
    %1123 = vmatpush1.msra.mxu0 0.0
    %1124 = vmatprep.subr.mxu0 0.0
    %1125 = vmatpush1.msra.mxu0 0.0
    %1126 = vmatprep.subr.mxu0 0.0
    %1127 = vmatpush1.msra.mxu0 0.0
    %1128 = vmatprep.subr.mxu0 0.0
    %1129 = vmatpush1.msra.mxu0 %v1099
    %1130 = vmatprep.subr.mxu0 0.0
    %1131 = vmatpush1.msra.mxu0 %v1098
    %1132 = vmatprep.subr.mxu0 0.0
    %1133 = vmatpush1.msra.mxu0 %v1097
    %1134 = vmatprep.subr.mxu0 0.0
    %1135 = vmatpush1.msra.mxu0 %v1096
    %1136 = vmatprep.subr.mxu0 0.0
    %1137 = vmatpush1.msra.mxu0 %v1095
    %1138 = vmatprep.subr.mxu0 0.0
    %1139 = vmatpush2.msra.mxu0 0.0
    %1140 = vmatprep.subr.mxu0 0.0
    %1141 = vmatpush2.msra.mxu0 0.0
    %1142 = vmatprep.subr.mxu0 0.0
    %1143 = vmatpush2.msra.mxu0 0.0
    %1144 = vmatprep.subr.mxu0 0.0
    %1145 = vmatpush2.msra.mxu0 0.0
    %1146 = vmatprep.subr.mxu0 0.0
    %1147 = vmatpush2.msra.mxu0 0.0
    %1148 = vmatprep.subr.mxu0 0.0
    %1149 = vmatpush2.msra.mxu0 0.0
    %1150 = vmatprep.subr.mxu0 0.0
    %1151 = vmatpush2.msra.mxu0 0.0
    %1152 = vmatprep.subr.mxu0 0.0
    %1153 = vmatpush2.msra.mxu0 0.0
    %1154 = vmatprep.subr.mxu0 0.0
    %1155 = vmatpush2.msra.mxu0 0.0
    %1156 = vmatprep.subr.mxu0 0.0
    %1157 = vmatpush2.msra.mxu0 0.0
    %1158 = vmatprep.subr.mxu0 0.0
    %1159 = vmatpush2.msra.mxu0 0.0
    %1160 = vmatprep.subr.mxu0 0.0
    %1161 = vmatpush2.msra.mxu0 0.0
    %1162 = vmatprep.subr.mxu0 0.0
    %1163 = vmatpush2.msra.mxu0 0.0
    %1164 = vmatprep.subr.mxu0 0.0
    %1165 = vmatpush2.msra.mxu0 0.0
    %1166 = vmatprep.subr.mxu0 0.0
    %1167 = vmatpush2.msra.mxu0 0.0
    %1168 = vmatprep.subr.mxu0 0.0
    %1169 = vmatpush2.msra.mxu0 0.0
    %1170 = vmatprep.mubr.f32.mxu0 0.0
    %1171 = vmatmul.mubr.f32.gmra.mxu0 %v1101
    %v1172 = vpop.f32.mrf.mxu0
    %v1173 = vadd.f32 0.0, %v1172
    %v1174 = vpop.f32.mrf.mxu0
    %1175 = vmatprep.mubr.f32.mxu0 0.0
    %1176 = vmatmul.mubr.f32.gmra.mxu0 %v1104
    %v1177 = vpop.f32.mrf.mxu0
    %v1178 = vadd.f32 0.0, %v1177
    %v1179 = vpop.f32.mrf.mxu0
    %1180 = vdwg.mxu0
    %v1181 = vsub.f32 %v1093, %v1173
    %v1182 = vsub.f32 %v1094, %v1178
    %v1183 = vmul.f32 %v1181, %v1181
    %v1184 = vmul.f32 %v1182, %v1182
    %v1186 = vsel %vm27, %v1183, 0
    %v1189 = vsel %vm27, %v1184, 0
    %1191 = vmatprep.subr.mxu0 0.0
    %1192 = vmatpush1.msra.mxu0 0.0
    %1193 = vmatprep.subr.mxu0 0.0
    %1194 = vmatpush1.msra.mxu0 0.0
    %1195 = vmatprep.subr.mxu0 0.0
    %1196 = vmatpush1.msra.mxu0 0.0
    %1197 = vmatprep.subr.mxu0 0.0
    %1198 = vmatpush1.msra.mxu0 0.0
    %1199 = vmatprep.subr.mxu0 0.0
    %1200 = vmatpush1.msra.mxu0 0.0
    %1201 = vmatprep.subr.mxu0 0.0
    %1202 = vmatpush1.msra.mxu0 0.0
    %1203 = vmatprep.subr.mxu0 0.0
    %1204 = vmatpush1.msra.mxu0 0.0
    %1205 = vmatprep.subr.mxu0 0.0
    %1206 = vmatpush1.msra.mxu0 0.0
    %1207 = vmatprep.subr.mxu0 0.0
    %1208 = vmatpush1.msra.mxu0 0.0
    %1209 = vmatprep.subr.mxu0 0.0
    %1210 = vmatpush1.msra.mxu0 0.0
    %1211 = vmatprep.subr.mxu0 0.0
    %1212 = vmatpush1.msra.mxu0 0.0
    %1213 = vmatprep.subr.mxu0 0.0
    %1214 = vmatpush1.msra.mxu0 %v1099
    %1215 = vmatprep.subr.mxu0 0.0
    %1216 = vmatpush1.msra.mxu0 %v1098
    %1217 = vmatprep.subr.mxu0 0.0
    %1218 = vmatpush1.msra.mxu0 %v1097
    %1219 = vmatprep.subr.mxu0 0.0
    %1220 = vmatpush1.msra.mxu0 %v1096
    %1221 = vmatprep.subr.mxu0 0.0
    %1222 = vmatpush1.msra.mxu0 %v1095
    %1223 = vmatprep.subr.mxu0 0.0
    %1224 = vmatpush2.msra.mxu0 0.0
    %1225 = vmatprep.subr.mxu0 0.0
    %1226 = vmatpush2.msra.mxu0 0.0
    %1227 = vmatprep.subr.mxu0 0.0
    %1228 = vmatpush2.msra.mxu0 0.0
    %1229 = vmatprep.subr.mxu0 0.0
    %1230 = vmatpush2.msra.mxu0 0.0
    %1231 = vmatprep.subr.mxu0 0.0
    %1232 = vmatpush2.msra.mxu0 0.0
    %1233 = vmatprep.subr.mxu0 0.0
    %1234 = vmatpush2.msra.mxu0 0.0
    %1235 = vmatprep.subr.mxu0 0.0
    %1236 = vmatpush2.msra.mxu0 0.0
    %1237 = vmatprep.subr.mxu0 0.0
    %1238 = vmatpush2.msra.mxu0 0.0
    %1239 = vmatprep.subr.mxu0 0.0
    %1240 = vmatpush2.msra.mxu0 0.0
    %1241 = vmatprep.subr.mxu0 0.0
    %1242 = vmatpush2.msra.mxu0 0.0
    %1243 = vmatprep.subr.mxu0 0.0
    %1244 = vmatpush2.msra.mxu0 0.0
    %1245 = vmatprep.subr.mxu0 0.0
    %1246 = vmatpush2.msra.mxu0 0.0
    %1247 = vmatprep.subr.mxu0 0.0
    %1248 = vmatpush2.msra.mxu0 0.0
    %1249 = vmatprep.subr.mxu0 0.0
    %1250 = vmatpush2.msra.mxu0 0.0
    %1251 = vmatprep.subr.mxu0 0.0
    %1252 = vmatpush2.msra.mxu0 0.0
    %1253 = vmatprep.subr.mxu0 0.0
    %1254 = vmatpush2.msra.mxu0 0.0
    %1255 = vmatprep.mubr.f32.mxu0 0.0
    %1256 = vmatmul.mubr.f32.gmra.mxu0 %v1186
    %v1257 = vpop.f32.mrf.mxu0
    %v1258 = vadd.f32 1e-05, %v1257
    %v1259 = vpop.f32.mrf.mxu0
    %1260 = vmatprep.mubr.f32.mxu0 0.0
    %1261 = vmatmul.mubr.f32.gmra.mxu0 %v1189
    %v1262 = vpop.f32.mrf.mxu0
    %v1263 = vadd.f32 1e-05, %v1262
    %v1264 = vpop.f32.mrf.mxu0
    %1265 = vdwg.mxu0
    %v1266 = vrsqrt.pop %v1258
    %v1267 = vrsqrt.pop %v1263
    %v1268 = vmul.f32 %v1181, %v1266
    %v1269 = vmul.f32 %v1182, %v1267
    %v1270 = vld [vmem:[#allocation2 + $0x570] ss:$0 sm:$0xff]
    %v1271 = vmul.f32 %v1268, %v1270
    %v1272 = vmul.f32 %v1269, %v1270
    %v1273 = vld [vmem:[#allocation2 + $0x580] ss:$0 sm:$0xff]
    %v1274 = vadd.f32 %v1271, %v1273
    %v1275 = vadd.f32 %v1272, %v1273
    %v1276 = vsel %vm27, %v1274, 0.0
    %v1277 = vrot.slane %v1276, 4
    %v1278 = vadd.f32 %v1276, %v1277
    %v1279 = vrot.slane %v1278, 2
    %v1280 = vadd.f32 %v1278, %v1279
    %v1281 = vrot.slane %v1280, 1
    %v1282 = vadd.f32 %v1280, %v1281
    %v1283 = vmul.f32 %v1282, %v35
    %v1284 = vsel %vm27, %v1275, 0.0
    %v1285 = vrot.slane %v1284, 4
    %v1286 = vadd.f32 %v1284, %v1285
    %v1287 = vrot.slane %v1286, 2
    %v1288 = vadd.f32 %v1286, %v1287
    %v1289 = vrot.slane %v1288, 1
    %v1290 = vadd.f32 %v1288, %v1289
    %v1291 = vmul.f32 %v1290, %v35
    %v1292 = vsel %vm45, %v1283, %v1291
    %v1293 = vld [vmem:[#allocation2 + $0x590] sm:$0xff]
    %v1294 = vld [vmem:[#allocation2 + $0x5a0] sm:$0xff]
    %v1295 = vld [vmem:[#allocation2 + $0x5b0] sm:$0xff]
    %v1296 = vld [vmem:[#allocation2 + $0x5c0] sm:$0xff]
    %v1297 = vld [vmem:[#allocation2 + $0x5d0] sm:$0xff]
    %v1298 = vld [vmem:[#allocation2 + $0x5e0] ss:$0 sm:$0xff]
    %v1300 = vsel %vm27, %v1292, 0
    %1302 = vmatprep.subr.mxu0 0.0
    %1303 = vmatpush1.msra.mxu0 0.0
    %1304 = vmatprep.subr.mxu0 0.0
    %1305 = vmatpush1.msra.mxu0 0.0
    %1306 = vmatprep.subr.mxu0 0.0
    %1307 = vmatpush1.msra.mxu0 0.0
    %1308 = vmatprep.subr.mxu0 0.0
    %1309 = vmatpush1.msra.mxu0 0.0
    %1310 = vmatprep.subr.mxu0 0.0
    %1311 = vmatpush1.msra.mxu0 0.0
    %1312 = vmatprep.subr.mxu0 0.0
    %1313 = vmatpush1.msra.mxu0 0.0
    %1314 = vmatprep.subr.mxu0 0.0
    %1315 = vmatpush1.msra.mxu0 0.0
    %1316 = vmatprep.subr.mxu0 0.0
    %1317 = vmatpush1.msra.mxu0 0.0
    %1318 = vmatprep.subr.mxu0 0.0
    %1319 = vmatpush1.msra.mxu0 0.0
    %1320 = vmatprep.subr.mxu0 0.0
    %1321 = vmatpush1.msra.mxu0 0.0
    %1322 = vmatprep.subr.mxu0 0.0
    %1323 = vmatpush1.msra.mxu0 0.0
    %1324 = vmatprep.subr.mxu0 0.0
    %1325 = vmatpush1.msra.mxu0 %v1297
    %1326 = vmatprep.subr.mxu0 0.0
    %1327 = vmatpush1.msra.mxu0 %v1296
    %1328 = vmatprep.subr.mxu0 0.0
    %1329 = vmatpush1.msra.mxu0 %v1295
    %1330 = vmatprep.subr.mxu0 0.0
    %1331 = vmatpush1.msra.mxu0 %v1294
    %1332 = vmatprep.subr.mxu0 0.0
    %1333 = vmatpush1.msra.mxu0 %v1293
    %1334 = vmatprep.subr.mxu0 0.0
    %1335 = vmatpush2.msra.mxu0 0.0
    %1336 = vmatprep.subr.mxu0 0.0
    %1337 = vmatpush2.msra.mxu0 0.0
    %1338 = vmatprep.subr.mxu0 0.0
    %1339 = vmatpush2.msra.mxu0 0.0
    %1340 = vmatprep.subr.mxu0 0.0
    %1341 = vmatpush2.msra.mxu0 0.0
    %1342 = vmatprep.subr.mxu0 0.0
    %1343 = vmatpush2.msra.mxu0 0.0
    %1344 = vmatprep.subr.mxu0 0.0
    %1345 = vmatpush2.msra.mxu0 0.0
    %1346 = vmatprep.subr.mxu0 0.0
    %1347 = vmatpush2.msra.mxu0 0.0
    %1348 = vmatprep.subr.mxu0 0.0
    %1349 = vmatpush2.msra.mxu0 0.0
    %1350 = vmatprep.subr.mxu0 0.0
    %1351 = vmatpush2.msra.mxu0 0.0
    %1352 = vmatprep.subr.mxu0 0.0
    %1353 = vmatpush2.msra.mxu0 0.0
    %1354 = vmatprep.subr.mxu0 0.0
    %1355 = vmatpush2.msra.mxu0 0.0
    %1356 = vmatprep.subr.mxu0 0.0
    %1357 = vmatpush2.msra.mxu0 0.0
    %1358 = vmatprep.subr.mxu0 0.0
    %1359 = vmatpush2.msra.mxu0 0.0
    %1360 = vmatprep.subr.mxu0 0.0
    %1361 = vmatpush2.msra.mxu0 0.0
    %1362 = vmatprep.subr.mxu0 0.0
    %1363 = vmatpush2.msra.mxu0 0.0
    %1364 = vmatprep.subr.mxu0 0.0
    %1365 = vmatpush2.msra.mxu0 0.0
    %1366 = vmatprep.mubr.f32.mxu0 0.0
    %1367 = vmatmul.mubr.f32.gmra.mxu0 %v1300
    %v1368 = vpop.f32.mrf.mxu0
    %v1369 = vadd.f32 %v1298, %v1368
    %v1370 = vpop.f32.mrf.mxu0
    %1371 = vdwg.mxu0
    %v1372 = vmul.f32 %v1369, 0.5
    %v1373 = vtanh.pop %v1372
    %v1374 = vmul.f32 %v1373, 0.5
    %v1375 = vadd.f32 %v1374, 0.5
    %v1376 = vmul.f32 %v1369, %v1375
    %v1377 = vld [vmem:[#allocation2 + $0x5f0] sm:$0xff]
    %v1378 = vld [vmem:[#allocation2 + $0x600] sm:$0xff]
    %v1379 = vld [vmem:[#allocation2 + $0x610] sm:$0xff]
    %v1380 = vld [vmem:[#allocation2 + $0x620] sm:$0xff]
    %v1381 = vld [vmem:[#allocation2 + $0x630] sm:$0xff]
    %v1382 = vld [vmem:[#allocation2 + $0x640] sm:$0xff]
    %v1383 = vld [vmem:[#allocation2 + $0x650] sm:$0xff]
    %v1384 = vld [vmem:[#allocation2 + $0x660] sm:$0xff]
    %v1385 = vld [vmem:[#allocation2 + $0x670] sm:$0xff]
    %v1386 = vld [vmem:[#allocation2 + $0x680] sm:$0xff]
    %v1387 = vld [vmem:[#allocation2 + $0x690] ss:$0 sm:$0xff]
    %v1389 = vsel %vm901, %v1376, 0
    %1391 = vmatprep.subr.mxu0 0.0
    %1392 = vmatpush1.msra.mxu0 0.0
    %1393 = vmatprep.subr.mxu0 0.0
    %1394 = vmatpush1.msra.mxu0 0.0
    %1395 = vmatprep.subr.mxu0 0.0
    %1396 = vmatpush1.msra.mxu0 0.0
    %1397 = vmatprep.subr.mxu0 0.0
    %1398 = vmatpush1.msra.mxu0 0.0
    %1399 = vmatprep.subr.mxu0 0.0
    %1400 = vmatpush1.msra.mxu0 0.0
    %1401 = vmatprep.subr.mxu0 0.0
    %1402 = vmatpush1.msra.mxu0 0.0
    %1403 = vmatprep.subr.mxu0 0.0
    %1404 = vmatpush1.msra.mxu0 %v1386
    %1405 = vmatprep.subr.mxu0 0.0
    %1406 = vmatpush1.msra.mxu0 %v1385
    %1407 = vmatprep.subr.mxu0 0.0
    %1408 = vmatpush1.msra.mxu0 %v1384
    %1409 = vmatprep.subr.mxu0 0.0
    %1410 = vmatpush1.msra.mxu0 %v1383
    %1411 = vmatprep.subr.mxu0 0.0
    %1412 = vmatpush1.msra.mxu0 %v1382
    %1413 = vmatprep.subr.mxu0 0.0
    %1414 = vmatpush1.msra.mxu0 %v1381
    %1415 = vmatprep.subr.mxu0 0.0
    %1416 = vmatpush1.msra.mxu0 %v1380
    %1417 = vmatprep.subr.mxu0 0.0
    %1418 = vmatpush1.msra.mxu0 %v1379
    %1419 = vmatprep.subr.mxu0 0.0
    %1420 = vmatpush1.msra.mxu0 %v1378
    %1421 = vmatprep.subr.mxu0 0.0
    %1422 = vmatpush1.msra.mxu0 %v1377
    %1423 = vmatprep.subr.mxu0 0.0
    %1424 = vmatpush2.msra.mxu0 0.0
    %1425 = vmatprep.subr.mxu0 0.0
    %1426 = vmatpush2.msra.mxu0 0.0
    %1427 = vmatprep.subr.mxu0 0.0
    %1428 = vmatpush2.msra.mxu0 0.0
    %1429 = vmatprep.subr.mxu0 0.0
    %1430 = vmatpush2.msra.mxu0 0.0
    %1431 = vmatprep.subr.mxu0 0.0
    %1432 = vmatpush2.msra.mxu0 0.0
    %1433 = vmatprep.subr.mxu0 0.0
    %1434 = vmatpush2.msra.mxu0 0.0
    %1435 = vmatprep.subr.mxu0 0.0
    %1436 = vmatpush2.msra.mxu0 0.0
    %1437 = vmatprep.subr.mxu0 0.0
    %1438 = vmatpush2.msra.mxu0 0.0
    %1439 = vmatprep.subr.mxu0 0.0
    %1440 = vmatpush2.msra.mxu0 0.0
    %1441 = vmatprep.subr.mxu0 0.0
    %1442 = vmatpush2.msra.mxu0 0.0
    %1443 = vmatprep.subr.mxu0 0.0
    %1444 = vmatpush2.msra.mxu0 0.0
    %1445 = vmatprep.subr.mxu0 0.0
    %1446 = vmatpush2.msra.mxu0 0.0
    %1447 = vmatprep.subr.mxu0 0.0
    %1448 = vmatpush2.msra.mxu0 0.0
    %1449 = vmatprep.subr.mxu0 0.0
    %1450 = vmatpush2.msra.mxu0 0.0
    %1451 = vmatprep.subr.mxu0 0.0
    %1452 = vmatpush2.msra.mxu0 0.0
    %1453 = vmatprep.subr.mxu0 0.0
    %1454 = vmatpush2.msra.mxu0 0.0
    %1455 = vmatprep.mubr.f32.mxu0 0.0
    %1456 = vmatmul.mubr.f32.gmra.mxu0 %v1389
    %v1457 = vpop.f32.mrf.mxu0
    %v1458 = vadd.f32 %v1387, %v1457
    %v1459 = vpop.f32.mrf.mxu0
    %1460 = vdwg.mxu0
    %v1461 = vmul.f32 %v1458, 0.5
    %v1462 = vtanh.pop %v1461
    %v1463 = vmul.f32 %v1462, 0.5
    %v1464 = vadd.f32 %v1463, 0.5
    %v1465 = vmul.f32 %v1458, %v1464
    %v1466 = vld [vmem:[#allocation2 + $0x6a0] sm:$0xff]
    %v1467 = vld [vmem:[#allocation2 + $0x6b0] sm:$0xff]
    %v1468 = vld [vmem:[#allocation2 + $0x6c0] sm:$0xff]
    %v1469 = vld [vmem:[#allocation2 + $0x6d0] sm:$0xff]
    %v1470 = vld [vmem:[#allocation2 + $0x6e0] sm:$0xff]
    %v1471 = vld [vmem:[#allocation2 + $0x6f0] sm:$0xff]
    %v1472 = vld [vmem:[#allocation2 + $0x700] sm:$0xff]
    %v1473 = vld [vmem:[#allocation2 + $0x710] sm:$0xff]
    %v1474 = vld [vmem:[#allocation2 + $0x720] sm:$0xff]
    %v1475 = vld [vmem:[#allocation2 + $0x730] sm:$0xff]
    %v1476 = vld [vmem:[#allocation2 + $0x740] ss:$0 sm:$0xff]
    %v1478 = vsel %vm901, %v1465, 0
    %1480 = vmatprep.subr.mxu0 0.0
    %1481 = vmatpush1.msra.mxu0 0.0
    %1482 = vmatprep.subr.mxu0 0.0
    %1483 = vmatpush1.msra.mxu0 0.0
    %1484 = vmatprep.subr.mxu0 0.0
    %1485 = vmatpush1.msra.mxu0 0.0
    %1486 = vmatprep.subr.mxu0 0.0
    %1487 = vmatpush1.msra.mxu0 0.0
    %1488 = vmatprep.subr.mxu0 0.0
    %1489 = vmatpush1.msra.mxu0 0.0
    %1490 = vmatprep.subr.mxu0 0.0
    %1491 = vmatpush1.msra.mxu0 0.0
    %1492 = vmatprep.subr.mxu0 0.0
    %1493 = vmatpush1.msra.mxu0 %v1475
    %1494 = vmatprep.subr.mxu0 0.0
    %1495 = vmatpush1.msra.mxu0 %v1474
    %1496 = vmatprep.subr.mxu0 0.0
    %1497 = vmatpush1.msra.mxu0 %v1473
    %1498 = vmatprep.subr.mxu0 0.0
    %1499 = vmatpush1.msra.mxu0 %v1472
    %1500 = vmatprep.subr.mxu0 0.0
    %1501 = vmatpush1.msra.mxu0 %v1471
    %1502 = vmatprep.subr.mxu0 0.0
    %1503 = vmatpush1.msra.mxu0 %v1470
    %1504 = vmatprep.subr.mxu0 0.0
    %1505 = vmatpush1.msra.mxu0 %v1469
    %1506 = vmatprep.subr.mxu0 0.0
    %1507 = vmatpush1.msra.mxu0 %v1468
    %1508 = vmatprep.subr.mxu0 0.0
    %1509 = vmatpush1.msra.mxu0 %v1467
    %1510 = vmatprep.subr.mxu0 0.0
    %1511 = vmatpush1.msra.mxu0 %v1466
    %1512 = vmatprep.subr.mxu0 0.0
    %1513 = vmatpush2.msra.mxu0 0.0
    %1514 = vmatprep.subr.mxu0 0.0
    %1515 = vmatpush2.msra.mxu0 0.0
    %1516 = vmatprep.subr.mxu0 0.0
    %1517 = vmatpush2.msra.mxu0 0.0
    %1518 = vmatprep.subr.mxu0 0.0
    %1519 = vmatpush2.msra.mxu0 0.0
    %1520 = vmatprep.subr.mxu0 0.0
    %1521 = vmatpush2.msra.mxu0 0.0
    %1522 = vmatprep.subr.mxu0 0.0
    %1523 = vmatpush2.msra.mxu0 0.0
    %1524 = vmatprep.subr.mxu0 0.0
    %1525 = vmatpush2.msra.mxu0 0.0
    %1526 = vmatprep.subr.mxu0 0.0
    %1527 = vmatpush2.msra.mxu0 0.0
    %1528 = vmatprep.subr.mxu0 0.0
    %1529 = vmatpush2.msra.mxu0 0.0
    %1530 = vmatprep.subr.mxu0 0.0
    %1531 = vmatpush2.msra.mxu0 0.0
    %1532 = vmatprep.subr.mxu0 0.0
    %1533 = vmatpush2.msra.mxu0 0.0
    %1534 = vmatprep.subr.mxu0 0.0
    %1535 = vmatpush2.msra.mxu0 0.0
    %1536 = vmatprep.subr.mxu0 0.0
    %1537 = vmatpush2.msra.mxu0 0.0
    %1538 = vmatprep.subr.mxu0 0.0
    %1539 = vmatpush2.msra.mxu0 0.0
    %1540 = vmatprep.subr.mxu0 0.0
    %1541 = vmatpush2.msra.mxu0 0.0
    %1542 = vmatprep.subr.mxu0 0.0
    %1543 = vmatpush2.msra.mxu0 0.0
    %1544 = vmatprep.mubr.f32.mxu0 0.0
    %1545 = vmatmul.mubr.f32.gmra.mxu0 %v1478
    %v1546 = vpop.f32.mrf.mxu0
    %v1547 = vadd.f32 %v1476, %v1546
    %v1548 = vpop.f32.mrf.mxu0
    %1549 = vdwg.mxu0
    %1550 = vst.msk [vmem:[%s2 + $0x6] sm:$0x3] %vm47, %v1547
    %v1551 = vld [vmem:[#allocation2 + $0x750] sm:$0xff]
    %v1552 = vld [vmem:[#allocation2 + $0x760] sm:$0xff]
    %v1553 = vld [vmem:[#allocation2 + $0x770] sm:$0xff]
    %v1554 = vld [vmem:[#allocation2 + $0x780] sm:$0xff]
    %v1555 = vld [vmem:[#allocation2 + $0x790] sm:$0xff]
    %v1556 = vld [vmem:[#allocation2 + $0x7a0] ss:$0 sm:$0xff]
    %1557 = vmatprep.subr.mxu0 0.0
    %1558 = vmatpush1.msra.mxu0 0.0
    %1559 = vmatprep.subr.mxu0 0.0
    %1560 = vmatpush1.msra.mxu0 0.0
    %1561 = vmatprep.subr.mxu0 0.0
    %1562 = vmatpush1.msra.mxu0 0.0
    %1563 = vmatprep.subr.mxu0 0.0
    %1564 = vmatpush1.msra.mxu0 0.0
    %1565 = vmatprep.subr.mxu0 0.0
    %1566 = vmatpush1.msra.mxu0 0.0
    %1567 = vmatprep.subr.mxu0 0.0
    %1568 = vmatpush1.msra.mxu0 0.0
    %1569 = vmatprep.subr.mxu0 0.0
    %1570 = vmatpush1.msra.mxu0 0.0
    %1571 = vmatprep.subr.mxu0 0.0
    %1572 = vmatpush1.msra.mxu0 0.0
    %1573 = vmatprep.subr.mxu0 0.0
    %1574 = vmatpush1.msra.mxu0 0.0
    %1575 = vmatprep.subr.mxu0 0.0
    %1576 = vmatpush1.msra.mxu0 0.0
    %1577 = vmatprep.subr.mxu0 0.0
    %1578 = vmatpush1.msra.mxu0 0.0
    %1579 = vmatprep.subr.mxu0 0.0
    %1580 = vmatpush1.msra.mxu0 %v1555
    %1581 = vmatprep.subr.mxu0 0.0
    %1582 = vmatpush1.msra.mxu0 %v1554
    %1583 = vmatprep.subr.mxu0 0.0
    %1584 = vmatpush1.msra.mxu0 %v1553
    %1585 = vmatprep.subr.mxu0 0.0
    %1586 = vmatpush1.msra.mxu0 %v1552
    %1587 = vmatprep.subr.mxu0 0.0
    %1588 = vmatpush1.msra.mxu0 %v1551
    %1589 = vmatprep.subr.mxu0 0.0
    %1590 = vmatpush2.msra.mxu0 0.0
    %1591 = vmatprep.subr.mxu0 0.0
    %1592 = vmatpush2.msra.mxu0 0.0
    %1593 = vmatprep.subr.mxu0 0.0
    %1594 = vmatpush2.msra.mxu0 0.0
    %1595 = vmatprep.subr.mxu0 0.0
    %1596 = vmatpush2.msra.mxu0 0.0
    %1597 = vmatprep.subr.mxu0 0.0
    %1598 = vmatpush2.msra.mxu0 0.0
    %1599 = vmatprep.subr.mxu0 0.0
    %1600 = vmatpush2.msra.mxu0 0.0
    %1601 = vmatprep.subr.mxu0 0.0
    %1602 = vmatpush2.msra.mxu0 0.0
    %1603 = vmatprep.subr.mxu0 0.0
    %1604 = vmatpush2.msra.mxu0 0.0
    %1605 = vmatprep.subr.mxu0 0.0
    %1606 = vmatpush2.msra.mxu0 0.0
    %1607 = vmatprep.subr.mxu0 0.0
    %1608 = vmatpush2.msra.mxu0 0.0
    %1609 = vmatprep.subr.mxu0 0.0
    %1610 = vmatpush2.msra.mxu0 0.0
    %1611 = vmatprep.subr.mxu0 0.0
    %1612 = vmatpush2.msra.mxu0 0.0
    %1613 = vmatprep.subr.mxu0 0.0
    %1614 = vmatpush2.msra.mxu0 0.0
    %1615 = vmatprep.subr.mxu0 0.0
    %1616 = vmatpush2.msra.mxu0 0.0
    %1617 = vmatprep.subr.mxu0 0.0
    %1618 = vmatpush2.msra.mxu0 0.0
    %1619 = vmatprep.subr.mxu0 0.0
    %1620 = vmatpush2.msra.mxu0 0.0
    %1621 = vmatprep.mubr.f32.mxu0 0.0
    %1622 = vmatmul.mubr.f32.gmra.mxu0 %v56
    %v1623 = vpop.f32.mrf.mxu0
    %v1624 = vadd.f32 %v1556, %v1623
    %v1625 = vpop.f32.mrf.mxu0
    %1626 = vmatprep.mubr.f32.mxu0 0.0
    %1627 = vmatmul.mubr.f32.gmra.mxu0 %v59
    %v1628 = vpop.f32.mrf.mxu0
    %v1629 = vadd.f32 %v1556, %v1628
    %v1630 = vpop.f32.mrf.mxu0
    %1631 = vdwg.mxu0
    %v1632 = vld [vmem:[#allocation2 + $0x7b0] sm:$0xff]
    %v1633 = vld [vmem:[#allocation2 + $0x7c0] sm:$0xff]
    %v1634 = vld [vmem:[#allocation2 + $0x7d0] sm:$0xff]
    %v1635 = vld [vmem:[#allocation2 + $0x7e0] sm:$0xff]
    %v1636 = vld [vmem:[#allocation2 + $0x7f0] sm:$0xff]
    %v1637 = vld [vmem:[#allocation2 + $0x800] ss:$0 sm:$0xff]
    %1638 = vmatprep.subr.mxu0 0.0
    %1639 = vmatpush1.msra.mxu0 0.0
    %1640 = vmatprep.subr.mxu0 0.0
    %1641 = vmatpush1.msra.mxu0 0.0
    %1642 = vmatprep.subr.mxu0 0.0
    %1643 = vmatpush1.msra.mxu0 0.0
    %1644 = vmatprep.subr.mxu0 0.0
    %1645 = vmatpush1.msra.mxu0 0.0
    %1646 = vmatprep.subr.mxu0 0.0
    %1647 = vmatpush1.msra.mxu0 0.0
    %1648 = vmatprep.subr.mxu0 0.0
    %1649 = vmatpush1.msra.mxu0 0.0
    %1650 = vmatprep.subr.mxu0 0.0
    %1651 = vmatpush1.msra.mxu0 0.0
    %1652 = vmatprep.subr.mxu0 0.0
    %1653 = vmatpush1.msra.mxu0 0.0
    %1654 = vmatprep.subr.mxu0 0.0
    %1655 = vmatpush1.msra.mxu0 0.0
    %1656 = vmatprep.subr.mxu0 0.0
    %1657 = vmatpush1.msra.mxu0 0.0
    %1658 = vmatprep.subr.mxu0 0.0
    %1659 = vmatpush1.msra.mxu0 0.0
    %1660 = vmatprep.subr.mxu0 0.0
    %1661 = vmatpush1.msra.mxu0 %v1636
    %1662 = vmatprep.subr.mxu0 0.0
    %1663 = vmatpush1.msra.mxu0 %v1635
    %1664 = vmatprep.subr.mxu0 0.0
    %1665 = vmatpush1.msra.mxu0 %v1634
    %1666 = vmatprep.subr.mxu0 0.0
    %1667 = vmatpush1.msra.mxu0 %v1633
    %1668 = vmatprep.subr.mxu0 0.0
    %1669 = vmatpush1.msra.mxu0 %v1632
    %1670 = vmatprep.subr.mxu0 0.0
    %1671 = vmatpush2.msra.mxu0 0.0
    %1672 = vmatprep.subr.mxu0 0.0
    %1673 = vmatpush2.msra.mxu0 0.0
    %1674 = vmatprep.subr.mxu0 0.0
    %1675 = vmatpush2.msra.mxu0 0.0
    %1676 = vmatprep.subr.mxu0 0.0
    %1677 = vmatpush2.msra.mxu0 0.0
    %1678 = vmatprep.subr.mxu0 0.0
    %1679 = vmatpush2.msra.mxu0 0.0
    %1680 = vmatprep.subr.mxu0 0.0
    %1681 = vmatpush2.msra.mxu0 0.0
    %1682 = vmatprep.subr.mxu0 0.0
    %1683 = vmatpush2.msra.mxu0 0.0
    %1684 = vmatprep.subr.mxu0 0.0
    %1685 = vmatpush2.msra.mxu0 0.0
    %1686 = vmatprep.subr.mxu0 0.0
    %1687 = vmatpush2.msra.mxu0 0.0
    %1688 = vmatprep.subr.mxu0 0.0
    %1689 = vmatpush2.msra.mxu0 0.0
    %1690 = vmatprep.subr.mxu0 0.0
    %1691 = vmatpush2.msra.mxu0 0.0
    %1692 = vmatprep.subr.mxu0 0.0
    %1693 = vmatpush2.msra.mxu0 0.0
    %1694 = vmatprep.subr.mxu0 0.0
    %1695 = vmatpush2.msra.mxu0 0.0
    %1696 = vmatprep.subr.mxu0 0.0
    %1697 = vmatpush2.msra.mxu0 0.0
    %1698 = vmatprep.subr.mxu0 0.0
    %1699 = vmatpush2.msra.mxu0 0.0
    %1700 = vmatprep.subr.mxu0 0.0
    %1701 = vmatpush2.msra.mxu0 0.0
    %1702 = vmatprep.mubr.f32.mxu0 0.0
    %1703 = vmatmul.mubr.f32.gmra.mxu0 %v56
    %v1704 = vpop.f32.mrf.mxu0
    %v1705 = vadd.f32 %v1637, %v1704
    %v1706 = vpop.f32.mrf.mxu0
    %1707 = vmatprep.mubr.f32.mxu0 0.0
    %1708 = vmatmul.mubr.f32.gmra.mxu0 %v59
    %v1709 = vpop.f32.mrf.mxu0
    %v1710 = vadd.f32 %v1637, %v1709
    %v1711 = vpop.f32.mrf.mxu0
    %1712 = vdwg.mxu0
    %v1713 = vld [vmem:[#allocation2 + $0x810] sm:$0xff]
    %v1714 = vld [vmem:[#allocation2 + $0x820] sm:$0xff]
    %v1715 = vld [vmem:[#allocation2 + $0x830] sm:$0xff]
    %v1716 = vld [vmem:[#allocation2 + $0x840] sm:$0xff]
    %v1717 = vld [vmem:[#allocation2 + $0x850] sm:$0xff]
    %v1718 = vld [vmem:[#allocation2 + $0x860] ss:$0 sm:$0xff]
    %1719 = vmatprep.subr.mxu0 0.0
    %1720 = vmatpush1.msra.mxu0 0.0
    %1721 = vmatprep.subr.mxu0 0.0
    %1722 = vmatpush1.msra.mxu0 0.0
    %1723 = vmatprep.subr.mxu0 0.0
    %1724 = vmatpush1.msra.mxu0 0.0
    %1725 = vmatprep.subr.mxu0 0.0
    %1726 = vmatpush1.msra.mxu0 0.0
    %1727 = vmatprep.subr.mxu0 0.0
    %1728 = vmatpush1.msra.mxu0 0.0
    %1729 = vmatprep.subr.mxu0 0.0
    %1730 = vmatpush1.msra.mxu0 0.0
    %1731 = vmatprep.subr.mxu0 0.0
    %1732 = vmatpush1.msra.mxu0 0.0
    %1733 = vmatprep.subr.mxu0 0.0
    %1734 = vmatpush1.msra.mxu0 0.0
    %1735 = vmatprep.subr.mxu0 0.0
    %1736 = vmatpush1.msra.mxu0 0.0
    %1737 = vmatprep.subr.mxu0 0.0
    %1738 = vmatpush1.msra.mxu0 0.0
    %1739 = vmatprep.subr.mxu0 0.0
    %1740 = vmatpush1.msra.mxu0 0.0
    %1741 = vmatprep.subr.mxu0 0.0
    %1742 = vmatpush1.msra.mxu0 %v1717
    %1743 = vmatprep.subr.mxu0 0.0
    %1744 = vmatpush1.msra.mxu0 %v1716
    %1745 = vmatprep.subr.mxu0 0.0
    %1746 = vmatpush1.msra.mxu0 %v1715
    %1747 = vmatprep.subr.mxu0 0.0
    %1748 = vmatpush1.msra.mxu0 %v1714
    %1749 = vmatprep.subr.mxu0 0.0
    %1750 = vmatpush1.msra.mxu0 %v1713
    %1751 = vmatprep.subr.mxu0 0.0
    %1752 = vmatpush2.msra.mxu0 0.0
    %1753 = vmatprep.subr.mxu0 0.0
    %1754 = vmatpush2.msra.mxu0 0.0
    %1755 = vmatprep.subr.mxu0 0.0
    %1756 = vmatpush2.msra.mxu0 0.0
    %1757 = vmatprep.subr.mxu0 0.0
    %1758 = vmatpush2.msra.mxu0 0.0
    %1759 = vmatprep.subr.mxu0 0.0
    %1760 = vmatpush2.msra.mxu0 0.0
    %1761 = vmatprep.subr.mxu0 0.0
    %1762 = vmatpush2.msra.mxu0 0.0
    %1763 = vmatprep.subr.mxu0 0.0
    %1764 = vmatpush2.msra.mxu0 0.0
    %1765 = vmatprep.subr.mxu0 0.0
    %1766 = vmatpush2.msra.mxu0 0.0
    %1767 = vmatprep.subr.mxu0 0.0
    %1768 = vmatpush2.msra.mxu0 0.0
    %1769 = vmatprep.subr.mxu0 0.0
    %1770 = vmatpush2.msra.mxu0 0.0
    %1771 = vmatprep.subr.mxu0 0.0
    %1772 = vmatpush2.msra.mxu0 0.0
    %1773 = vmatprep.subr.mxu0 0.0
    %1774 = vmatpush2.msra.mxu0 0.0
    %1775 = vmatprep.subr.mxu0 0.0
    %1776 = vmatpush2.msra.mxu0 0.0
    %1777 = vmatprep.subr.mxu0 0.0
    %1778 = vmatpush2.msra.mxu0 0.0
    %1779 = vmatprep.subr.mxu0 0.0
    %1780 = vmatpush2.msra.mxu0 0.0
    %1781 = vmatprep.subr.mxu0 0.0
    %1782 = vmatpush2.msra.mxu0 0.0
    %1783 = vmatprep.mubr.f32.mxu0 0.0
    %1784 = vmatmul.mubr.f32.gmra.mxu0 %v56
    %v1785 = vpop.f32.mrf.mxu0
    %v1786 = vadd.f32 %v1718, %v1785
    %v1787 = vpop.f32.mrf.mxu0
    %1788 = vmatprep.mubr.f32.mxu0 0.0
    %1789 = vmatmul.mubr.f32.gmra.mxu0 %v59
    %v1790 = vpop.f32.mrf.mxu0
    %v1791 = vadd.f32 %v1718, %v1790
    %v1792 = vpop.f32.mrf.mxu0
    %1793 = vdwg.mxu0
    %v1794 = vld [vmem:[#allocation2] sm:$0xff]
    %v1795 = vld [vmem:[#allocation2 + $0x10] sm:$0xff]
    %v1796 = vld [vmem:[#allocation2 + $0x20] sm:$0xff]
    %v1797 = vld [vmem:[#allocation2 + $0x30] sm:$0xff]
    %v1798 = vld [vmem:[#allocation2 + $0x40] sm:$0xff]
    %v1799 = vld [vmem:[#allocation2 + $0x50] sm:$0xf]
    %v1800 = vmul.f32 %v1624, %v1705
    %v1801 = vmul.f32 %v1624, %v1710
    %v1802 = vmul.f32 %v1629, %v1705
    %v1803 = vmul.f32 %v1629, %v1710
    %v1805 = vsel %vm27, %v1800, 0
    %v1808 = vsel %vm27, %v1801, 0
    %v1811 = vsel %vm27, %v1802, 0
    %v1814 = vsel %vm27, %v1803, 0
    %1816 = vmatprep.subr.mxu0 0.0
    %1817 = vmatpush1.msra.mxu0 0.0
    %1818 = vmatprep.subr.mxu0 0.0
    %1819 = vmatpush1.msra.mxu0 0.0
    %1820 = vmatprep.subr.mxu0 0.0
    %1821 = vmatpush1.msra.mxu0 0.0
    %1822 = vmatprep.subr.mxu0 0.0
    %1823 = vmatpush1.msra.mxu0 0.0
    %1824 = vmatprep.subr.mxu0 0.0
    %1825 = vmatpush1.msra.mxu0 0.0
    %1826 = vmatprep.subr.mxu0 0.0
    %1827 = vmatpush1.msra.mxu0 0.0
    %1828 = vmatprep.subr.mxu0 0.0
    %1829 = vmatpush1.msra.mxu0 0.0
    %1830 = vmatprep.subr.mxu0 0.0
    %1831 = vmatpush1.msra.mxu0 0.0
    %1832 = vmatprep.subr.mxu0 0.0
    %1833 = vmatpush1.msra.mxu0 0.0
    %1834 = vmatprep.subr.mxu0 0.0
    %1835 = vmatpush1.msra.mxu0 0.0
    %1836 = vmatprep.subr.mxu0 0.0
    %1837 = vmatpush1.msra.mxu0 0.0
    %1838 = vmatprep.subr.mxu0 0.0
    %1839 = vmatpush1.msra.mxu0 %v1798
    %1840 = vmatprep.subr.mxu0 0.0
    %1841 = vmatpush1.msra.mxu0 %v1797
    %1842 = vmatprep.subr.mxu0 0.0
    %1843 = vmatpush1.msra.mxu0 %v1796
    %1844 = vmatprep.subr.mxu0 0.0
    %1845 = vmatpush1.msra.mxu0 %v1795
    %1846 = vmatprep.subr.mxu0 0.0
    %1847 = vmatpush1.msra.mxu0 %v1794
    %1848 = vmatprep.subr.mxu0 0.0
    %1849 = vmatpush2.msra.mxu0 0.0
    %1850 = vmatprep.subr.mxu0 0.0
    %1851 = vmatpush2.msra.mxu0 0.0
    %1852 = vmatprep.subr.mxu0 0.0
    %1853 = vmatpush2.msra.mxu0 0.0
    %1854 = vmatprep.subr.mxu0 0.0
    %1855 = vmatpush2.msra.mxu0 0.0
    %1856 = vmatprep.subr.mxu0 0.0
    %1857 = vmatpush2.msra.mxu0 0.0
    %1858 = vmatprep.subr.mxu0 0.0
    %1859 = vmatpush2.msra.mxu0 0.0
    %1860 = vmatprep.subr.mxu0 0.0
    %1861 = vmatpush2.msra.mxu0 0.0
    %1862 = vmatprep.subr.mxu0 0.0
    %1863 = vmatpush2.msra.mxu0 0.0
    %1864 = vmatprep.subr.mxu0 0.0
    %1865 = vmatpush2.msra.mxu0 0.0
    %1866 = vmatprep.subr.mxu0 0.0
    %1867 = vmatpush2.msra.mxu0 0.0
    %1868 = vmatprep.subr.mxu0 0.0
    %1869 = vmatpush2.msra.mxu0 0.0
    %1870 = vmatprep.subr.mxu0 0.0
    %1871 = vmatpush2.msra.mxu0 0.0
    %1872 = vmatprep.subr.mxu0 0.0
    %1873 = vmatpush2.msra.mxu0 0.0
    %1874 = vmatprep.subr.mxu0 0.0
    %1875 = vmatpush2.msra.mxu0 0.0
    %1876 = vmatprep.subr.mxu0 0.0
    %1877 = vmatpush2.msra.mxu0 0.0
    %1878 = vmatprep.subr.mxu0 0.0
    %1879 = vmatpush2.msra.mxu0 0.0
    %1880 = vmatprep.mubr.f32.mxu0 0.0
    %1881 = vmatmul.mubr.f32.gmra.mxu0 %v1805
    %v1882 = vpop.f32.mrf.mxu0
    %v1883 = vadd.f32 0.0, %v1882
    %v1884 = vpop.f32.mrf.mxu0
    %1885 = vmatprep.mubr.f32.mxu0 0.0
    %1886 = vmatmul.mubr.f32.gmra.mxu0 %v1808
    %v1887 = vpop.f32.mrf.mxu0
    %v1888 = vadd.f32 0.0, %v1887
    %v1889 = vpop.f32.mrf.mxu0
    %1890 = vmatprep.mubr.f32.mxu0 0.0
    %1891 = vmatmul.mubr.f32.gmra.mxu0 %v1811
    %v1892 = vpop.f32.mrf.mxu0
    %v1893 = vadd.f32 0.0, %v1892
    %v1894 = vpop.f32.mrf.mxu0
    %1895 = vmatprep.mubr.f32.mxu0 0.0
    %1896 = vmatmul.mubr.f32.gmra.mxu0 %v1814
    %v1897 = vpop.f32.mrf.mxu0
    %v1898 = vadd.f32 0.0, %v1897
    %v1899 = vpop.f32.mrf.mxu0
    %1900 = vdwg.mxu0
    %v1901 = vmax.f32 %v1883, %v1888
    %v1902 = vsub.f32 %v1883, %v1901
    %v1903 = vmul.f32 %v1902, 1.442695
    %v1904 = vpow.pop %v1903
    %v1905 = vsub.f32 %v1888, %v1901
    %v1906 = vmul.f32 %v1905, 1.442695
    %v1907 = vpow.pop %v1906
    %v1908 = vadd.f32 %v1904, %v1907
    %v1909 = vrcp.pop %v1908
    %v1910 = vmul.f32 1.0, %v1909
    %v1911 = vmul.f32 %v1904, %v1910
    %v1912 = vmul.f32 %v1907, %v1910
    %v1913 = vmax.f32 %v1893, %v1898
    %v1914 = vsub.f32 %v1893, %v1913
    %v1915 = vmul.f32 %v1914, 1.442695
    %v1916 = vpow.pop %v1915
    %v1917 = vsub.f32 %v1898, %v1913
    %v1918 = vmul.f32 %v1917, 1.442695
    %v1919 = vpow.pop %v1918
    %v1920 = vadd.f32 %v1916, %v1919
    %v1921 = vrcp.pop %v1920
    %v1922 = vmul.f32 1.0, %v1921
    %v1923 = vmul.f32 %v1916, %v1922
    %v1924 = vmul.f32 %v1919, %v1922
    %vm1925 = vcmask 31744
    %v1927 = vsel %vm1925, %v1911, 0
    %v1930 = vsel %vm1925, %v1912, 0
    %v1933 = vsel %vm1925, %v1923, 0
    %v1936 = vsel %vm1925, %v1924, 0
    %vm1938 = vcmask 1043456
    %v1940 = vsel %vm1938, %v1799, 0
    %1942 = vmatprep.subr.mxu0 0.0
    %1943 = vmatpush1.msra.mxu0 0.0
    %1944 = vmatprep.subr.mxu0 0.0
    %1945 = vmatpush1.msra.mxu0 0.0
    %1946 = vmatprep.subr.mxu0 0.0
    %1947 = vmatpush1.msra.mxu0 0.0
    %1948 = vmatprep.subr.mxu0 0.0
    %1949 = vmatpush1.msra.mxu0 0.0
    %1950 = vmatprep.subr.mxu0 0.0
    %1951 = vmatpush1.msra.mxu0 0.0
    %1952 = vmatprep.subr.mxu0 0.0
    %1953 = vmatpush1.msra.mxu0 0.0
    %1954 = vmatprep.subr.mxu0 0.0
    %1955 = vmatpush1.msra.mxu0 0.0
    %1956 = vmatprep.subr.mxu0 0.0
    %1957 = vmatpush1.msra.mxu0 0.0
    %1958 = vmatprep.subr.mxu0 0.0
    %1959 = vmatpush1.msra.mxu0 0.0
    %1960 = vmatprep.subr.mxu0 0.0
    %1961 = vmatpush1.msra.mxu0 0.0
    %1962 = vmatprep.subr.mxu0 0.0
    %1963 = vmatpush1.msra.mxu0 0.0
    %1964 = vmatprep.subr.mxu0 0.0
    %1965 = vmatpush1.msra.mxu0 0.0
    %1966 = vmatprep.subr.mxu0 0.0
    %1967 = vmatpush1.msra.mxu0 0.0
    %1968 = vmatprep.subr.mxu0 0.0
    %1969 = vmatpush1.msra.mxu0 0.0
    %1970 = vmatprep.subr.mxu0 0.0
    %1971 = vmatpush1.msra.mxu0 0.0
    %1972 = vmatprep.subr.mxu0 0.0
    %1973 = vmatpush1.msra.mxu0 %v1940
    %1974 = vmatprep.subr.mxu0 0.0
    %1975 = vmatpush2.msra.mxu0 0.0
    %1976 = vmatprep.subr.mxu0 0.0
    %1977 = vmatpush2.msra.mxu0 0.0
    %1978 = vmatprep.subr.mxu0 0.0
    %1979 = vmatpush2.msra.mxu0 0.0
    %1980 = vmatprep.subr.mxu0 0.0
    %1981 = vmatpush2.msra.mxu0 0.0
    %1982 = vmatprep.subr.mxu0 0.0
    %1983 = vmatpush2.msra.mxu0 0.0
    %1984 = vmatprep.subr.mxu0 0.0
    %1985 = vmatpush2.msra.mxu0 0.0
    %1986 = vmatprep.subr.mxu0 0.0
    %1987 = vmatpush2.msra.mxu0 0.0
    %1988 = vmatprep.subr.mxu0 0.0
    %1989 = vmatpush2.msra.mxu0 0.0
    %1990 = vmatprep.subr.mxu0 0.0
    %1991 = vmatpush2.msra.mxu0 0.0
    %1992 = vmatprep.subr.mxu0 0.0
    %1993 = vmatpush2.msra.mxu0 0.0
    %1994 = vmatprep.subr.mxu0 0.0
    %1995 = vmatpush2.msra.mxu0 0.0
    %1996 = vmatprep.subr.mxu0 0.0
    %1997 = vmatpush2.msra.mxu0 0.0
    %1998 = vmatprep.subr.mxu0 0.0
    %1999 = vmatpush2.msra.mxu0 0.0
    %2000 = vmatprep.subr.mxu0 0.0
    %2001 = vmatpush2.msra.mxu0 0.0
    %2002 = vmatprep.subr.mxu0 0.0
    %2003 = vmatpush2.msra.mxu0 0.0
    %2004 = vmatprep.subr.mxu0 0.0
    %2005 = vmatpush2.msra.mxu0 0.0
    %2006 = vmatprep.mubr.f32.mxu0 0.0
    %2007 = vmatmul.mubr.f32.gmra.mxu0 %v1927
    %v2008 = vpop.f32.mrf.mxu0
    %v2009 = vadd.f32 0.0, %v2008
    %v2010 = vpop.f32.mrf.mxu0
    %2011 = vmatprep.mubr.f32.mxu0 0.0
    %2012 = vmatmul.mubr.f32.gmra.mxu0 %v1930
    %v2013 = vpop.f32.mrf.mxu0
    %v2014 = vadd.f32 0.0, %v2013
    %v2015 = vpop.f32.mrf.mxu0
    %2016 = vmatprep.mubr.f32.mxu0 0.0
    %2017 = vmatmul.mubr.f32.gmra.mxu0 %v1933
    %v2018 = vpop.f32.mrf.mxu0
    %v2019 = vadd.f32 0.0, %v2018
    %v2020 = vpop.f32.mrf.mxu0
    %2021 = vmatprep.mubr.f32.mxu0 0.0
    %2022 = vmatmul.mubr.f32.gmra.mxu0 %v1936
    %v2023 = vpop.f32.mrf.mxu0
    %v2024 = vadd.f32 0.0, %v2023
    %v2025 = vpop.f32.mrf.mxu0
    %2026 = vdwg.mxu0
    %v2027 = vmul.f32 %v2009, %v1786
    %v2028 = vmul.f32 %v2014, %v1791
    %v2029 = vmul.f32 %v2019, %v1786
    %v2030 = vmul.f32 %v2024, %v1791
    %v2031 = vadd.f32 %v2027, %v2028
    %v2032 = vadd.f32 %v2029, %v2030
    %v2033 = vld [vmem:[#allocation2 + $0x870] sm:$0xff]
    %v2034 = vld [vmem:[#allocation2 + $0x880] sm:$0xff]
    %v2035 = vld [vmem:[#allocation2 + $0x890] sm:$0xff]
    %v2036 = vld [vmem:[#allocation2 + $0x8a0] sm:$0xff]
    %v2037 = vld [vmem:[#allocation2 + $0x8b0] sm:$0xff]
    %v2038 = vld [vmem:[#allocation2 + $0x8c0] ss:$0 sm:$0xff]
    %v2040 = vsel %vm27, %v2031, 0
    %v2043 = vsel %vm27, %v2032, 0
    %2045 = vmatprep.subr.mxu0 0.0
    %2046 = vmatpush1.msra.mxu0 0.0
    %2047 = vmatprep.subr.mxu0 0.0
    %2048 = vmatpush1.msra.mxu0 0.0
    %2049 = vmatprep.subr.mxu0 0.0
    %2050 = vmatpush1.msra.mxu0 0.0
    %2051 = vmatprep.subr.mxu0 0.0
    %2052 = vmatpush1.msra.mxu0 0.0
    %2053 = vmatprep.subr.mxu0 0.0
    %2054 = vmatpush1.msra.mxu0 0.0
    %2055 = vmatprep.subr.mxu0 0.0
    %2056 = vmatpush1.msra.mxu0 0.0
    %2057 = vmatprep.subr.mxu0 0.0
    %2058 = vmatpush1.msra.mxu0 0.0
    %2059 = vmatprep.subr.mxu0 0.0
    %2060 = vmatpush1.msra.mxu0 0.0
    %2061 = vmatprep.subr.mxu0 0.0
    %2062 = vmatpush1.msra.mxu0 0.0
    %2063 = vmatprep.subr.mxu0 0.0
    %2064 = vmatpush1.msra.mxu0 0.0
    %2065 = vmatprep.subr.mxu0 0.0
    %2066 = vmatpush1.msra.mxu0 0.0
    %2067 = vmatprep.subr.mxu0 0.0
    %2068 = vmatpush1.msra.mxu0 %v2037
    %2069 = vmatprep.subr.mxu0 0.0
    %2070 = vmatpush1.msra.mxu0 %v2036
    %2071 = vmatprep.subr.mxu0 0.0
    %2072 = vmatpush1.msra.mxu0 %v2035
    %2073 = vmatprep.subr.mxu0 0.0
    %2074 = vmatpush1.msra.mxu0 %v2034
    %2075 = vmatprep.subr.mxu0 0.0
    %2076 = vmatpush1.msra.mxu0 %v2033
    %2077 = vmatprep.subr.mxu0 0.0
    %2078 = vmatpush2.msra.mxu0 0.0
    %2079 = vmatprep.subr.mxu0 0.0
    %2080 = vmatpush2.msra.mxu0 0.0
    %2081 = vmatprep.subr.mxu0 0.0
    %2082 = vmatpush2.msra.mxu0 0.0
    %2083 = vmatprep.subr.mxu0 0.0
    %2084 = vmatpush2.msra.mxu0 0.0
    %2085 = vmatprep.subr.mxu0 0.0
    %2086 = vmatpush2.msra.mxu0 0.0
    %2087 = vmatprep.subr.mxu0 0.0
    %2088 = vmatpush2.msra.mxu0 0.0
    %2089 = vmatprep.subr.mxu0 0.0
    %2090 = vmatpush2.msra.mxu0 0.0
    %2091 = vmatprep.subr.mxu0 0.0
    %2092 = vmatpush2.msra.mxu0 0.0
    %2093 = vmatprep.subr.mxu0 0.0
    %2094 = vmatpush2.msra.mxu0 0.0
    %2095 = vmatprep.subr.mxu0 0.0
    %2096 = vmatpush2.msra.mxu0 0.0
    %2097 = vmatprep.subr.mxu0 0.0
    %2098 = vmatpush2.msra.mxu0 0.0
    %2099 = vmatprep.subr.mxu0 0.0
    %2100 = vmatpush2.msra.mxu0 0.0
    %2101 = vmatprep.subr.mxu0 0.0
    %2102 = vmatpush2.msra.mxu0 0.0
    %2103 = vmatprep.subr.mxu0 0.0
    %2104 = vmatpush2.msra.mxu0 0.0
    %2105 = vmatprep.subr.mxu0 0.0
    %2106 = vmatpush2.msra.mxu0 0.0
    %2107 = vmatprep.subr.mxu0 0.0
    %2108 = vmatpush2.msra.mxu0 0.0
    %2109 = vmatprep.mubr.f32.mxu0 0.0
    %2110 = vmatmul.mubr.f32.gmra.mxu0 %v2040
    %v2111 = vpop.f32.mrf.mxu0
    %v2112 = vadd.f32 %v2038, %v2111
    %v2113 = vpop.f32.mrf.mxu0
    %2114 = vmatprep.mubr.f32.mxu0 0.0
    %2115 = vmatmul.mubr.f32.gmra.mxu0 %v2043
    %v2116 = vpop.f32.mrf.mxu0
    %v2117 = vadd.f32 %v2038, %v2116
    %v2118 = vpop.f32.mrf.mxu0
    %2119 = vdwg.mxu0
    %v2120 = vadd.f32 %v2112, %v25
    %v2121 = vadd.f32 %v2117, %v26
    %v2122 = vld [vmem:[#allocation2 + $0x8d0] ss:$0 sm:$0xff]
    %v2123 = vld [vmem:[#allocation2 + $0x8e0] ss:$0 sm:$0xff]
    %v2124 = vsel %vm27, %v2120, 0.0
    %2125 = vadd.xlane.f32.xlu0 %v2124
    %v2126 = vpop.xlane.xlu0 %2125
    %v2127 = vsel %vm27, %v2121, 0.0
    %2128 = vadd.xlane.f32.xlu0 %v2127
    %v2129 = vpop.xlane.xlu0 %2128
    %v2130 = vrcp.pop 40.0
    %v2131 = vmul.f32 %v2126, %v2130
    %v2132 = vmul.f32 %v2129, %v2130
    %v2133 = vsub.f32 %v2120, %v2131
    %v2134 = vsub.f32 %v2121, %v2132
    %v2135 = vmul.f32 %v2133, %v2133
    %v2136 = vmul.f32 %v2134, %v2134
    %v2137 = vsel %vm27, %v2135, 0.0
    %2138 = vadd.xlane.f32.xlu0 %v2137
    %v2139 = vpop.xlane.xlu0 %2138
    %v2140 = vsel %vm27, %v2136, 0.0
    %2141 = vadd.xlane.f32.xlu0 %v2140
    %v2142 = vpop.xlane.xlu0 %2141
    %v2143 = vmul.f32 %v2139, %v2130
    %v2144 = vmul.f32 %v2142, %v2130
    %v2145 = vadd.f32 %v2143, 1e-05
    %v2146 = vadd.f32 %v2144, 1e-05
    %v2147 = vrsqrt.pop %v2145
    %v2148 = vrsqrt.pop %v2146
    %v2149 = vmul.f32 %v2133, %v2147
    %v2150 = vmul.f32 %v2134, %v2148
    %v2151 = vmul.f32 %v2149, %v2122
    %v2152 = vmul.f32 %v2150, %v2122
    %v2153 = vadd.f32 %v2151, %v2123
    %v2154 = vadd.f32 %v2152, %v2123
    %v2155 = vld [vmem:[#allocation2 + $0x910] sm:$0xff]
    %v2156 = vld [vmem:[#allocation2 + $0x918] sm:$0xff]
    %v2157 = vld [vmem:[#allocation2 + $0x920] sm:$0xff]
    %v2158 = vld [vmem:[#allocation2 + $0x928] sm:$0xff]
    %v2159 = vld [vmem:[#allocation2 + $0x930] sm:$0xff]
    %v2160 = vld [vmem:[#allocation2 + $0x938] sm:$0xff]
    %v2161 = vld [vmem:[#allocation2 + $0x940] sm:$0xff]
    %v2162 = vld [vmem:[#allocation2 + $0x948] sm:$0xff]
    %v2163 = vld [vmem:[#allocation2 + $0x950] sm:$0xff]
    %v2164 = vld [vmem:[#allocation2 + $0x958] sm:$0xff]
    %s2165 = scalar_lea.vmem [#allocation2], 2400
    %v2166 = vld [vmem:[%s2165] ss:$8 sm:$0x3]
    %v2168 = vlaneseq
    %v2169 = vshrl.u32 %v2168, 7
    %v2170 = vsub.s32 0, %v2169
    %v2171 = vrot.slane %v2166, %v2170
    %v2172 = vlaneseq
    %v2173 = vshrl.u32 %v2172, 7
    %v2174 = vsub.s32 1, %v2173
    %v2175 = vrot.slane %v2166, %v2174
    %v2179 = vsel %vm27, %v2153, 0
    %v2182 = vsel %vm27, %v2154, 0
    %2184 = vmatprep.subr.mxu0 0.0
    %2185 = vmatpush1.msra.mxu0 0.0
    %2186 = vmatprep.subr.mxu0 0.0
    %2187 = vmatpush1.msra.mxu0 0.0
    %2188 = vmatprep.subr.mxu0 0.0
    %2189 = vmatpush1.msra.mxu0 0.0
    %2190 = vmatprep.subr.mxu0 0.0
    %2191 = vmatpush1.msra.mxu0 0.0
    %2192 = vmatprep.subr.mxu0 0.0
    %2193 = vmatpush1.msra.mxu0 0.0
    %2194 = vmatprep.subr.mxu0 0.0
    %2195 = vmatpush1.msra.mxu0 0.0
    %2196 = vmatprep.subr.mxu0 0.0
    %2197 = vmatpush1.msra.mxu0 0.0
    %2198 = vmatprep.subr.mxu0 0.0
    %2199 = vmatpush1.msra.mxu0 0.0
    %2200 = vmatprep.subr.mxu0 0.0
    %2201 = vmatpush1.msra.mxu0 0.0
    %2202 = vmatprep.subr.mxu0 0.0
    %2203 = vmatpush1.msra.mxu0 0.0
    %2204 = vmatprep.subr.mxu0 0.0
    %2205 = vmatpush1.msra.mxu0 0.0
    %2206 = vmatprep.subr.mxu0 %v2164
    %2207 = vmatpush1.msra.mxu0 %v2163
    %2208 = vmatprep.subr.mxu0 %v2162
    %2209 = vmatpush1.msra.mxu0 %v2161
    %2210 = vmatprep.subr.mxu0 %v2160
    %2211 = vmatpush1.msra.mxu0 %v2159
    %2212 = vmatprep.subr.mxu0 %v2158
    %2213 = vmatpush1.msra.mxu0 %v2157
    %2214 = vmatprep.subr.mxu0 %v2156
    %2215 = vmatpush1.msra.mxu0 %v2155
    %2216 = vmatprep.subr.mxu0 0.0
    %2217 = vmatpush2.msra.mxu0 0.0
    %2218 = vmatprep.subr.mxu0 0.0
    %2219 = vmatpush2.msra.mxu0 0.0
    %2220 = vmatprep.subr.mxu0 0.0
    %2221 = vmatpush2.msra.mxu0 0.0
    %2222 = vmatprep.subr.mxu0 0.0
    %2223 = vmatpush2.msra.mxu0 0.0
    %2224 = vmatprep.subr.mxu0 0.0
    %2225 = vmatpush2.msra.mxu0 0.0
    %2226 = vmatprep.subr.mxu0 0.0
    %2227 = vmatpush2.msra.mxu0 0.0
    %2228 = vmatprep.subr.mxu0 0.0
    %2229 = vmatpush2.msra.mxu0 0.0
    %2230 = vmatprep.subr.mxu0 0.0
    %2231 = vmatpush2.msra.mxu0 0.0
    %2232 = vmatprep.subr.mxu0 0.0
    %2233 = vmatpush2.msra.mxu0 0.0
    %2234 = vmatprep.subr.mxu0 0.0
    %2235 = vmatpush2.msra.mxu0 0.0
    %2236 = vmatprep.subr.mxu0 0.0
    %2237 = vmatpush2.msra.mxu0 0.0
    %2238 = vmatprep.subr.mxu0 0.0
    %2239 = vmatpush2.msra.mxu0 0.0
    %2240 = vmatprep.subr.mxu0 0.0
    %2241 = vmatpush2.msra.mxu0 0.0
    %2242 = vmatprep.subr.mxu0 0.0
    %2243 = vmatpush2.msra.mxu0 0.0
    %2244 = vmatprep.subr.mxu0 0.0
    %2245 = vmatpush2.msra.mxu0 0.0
    %2246 = vmatprep.subr.mxu0 0.0
    %2247 = vmatpush2.msra.mxu0 0.0
    %2248 = vmatprep.mubr.f32.mxu0 0.0
    %2249 = vmatmul.mubr.f32.gmra.mxu0 %v2179
    %v2250 = vpop.f32.mrf.mxu0
    %v2251 = vadd.f32 %v2171, %v2250
    %v2252 = vpop.f32.mrf.mxu0
    %v2253 = vadd.f32 %v2175, %v2252
    %2254 = vmatprep.mubr.f32.mxu0 0.0
    %2255 = vmatmul.mubr.f32.gmra.mxu0 %v2182
    %v2256 = vpop.f32.mrf.mxu0
    %v2257 = vadd.f32 %v2171, %v2256
    %v2258 = vpop.f32.mrf.mxu0
    %v2259 = vadd.f32 %v2175, %v2258
    %2260 = vdwg.mxu0
    %v2261 = vmul.f32 %v2251, 0.5
    %v2262 = vmul.f32 %v2253, 0.5
    %v2263 = vmul.f32 %v2257, 0.5
    %v2264 = vmul.f32 %v2259, 0.5
    %v2265 = vtanh.pop %v2261
    %v2266 = vtanh.pop %v2262
    %v2267 = vtanh.pop %v2263
    %v2268 = vtanh.pop %v2264
    %v2269 = vmul.f32 %v2265, 0.5
    %v2270 = vmul.f32 %v2266, 0.5
    %v2271 = vmul.f32 %v2267, 0.5
    %v2272 = vmul.f32 %v2268, 0.5
    %v2273 = vadd.f32 %v2269, 0.5
    %v2274 = vadd.f32 %v2270, 0.5
    %v2275 = vadd.f32 %v2271, 0.5
    %v2276 = vadd.f32 %v2272, 0.5
    %v2277 = vmul.f32 %v2251, %v2273
    %v2278 = vmul.f32 %v2253, %v2274
    %v2279 = vmul.f32 %v2257, %v2275
    %v2280 = vmul.f32 %v2259, %v2276
    %v2281 = vld [vmem:[#allocation2 + $0x970] sm:$0xff]
    %v2282 = vld [vmem:[#allocation2 + $0x980] sm:$0xff]
    %v2283 = vld [vmem:[#allocation2 + $0x990] sm:$0xff]
    %v2284 = vld [vmem:[#allocation2 + $0x9a0] sm:$0xff]
    %v2285 = vld [vmem:[#allocation2 + $0x9b0] sm:$0xff]
    %v2286 = vld [vmem:[#allocation2 + $0x9c0] sm:$0xff]
    %v2287 = vld [vmem:[#allocation2 + $0x9d0] sm:$0xff]
    %v2288 = vld [vmem:[#allocation2 + $0x9e0] sm:$0xff]
    %v2289 = vld [vmem:[#allocation2 + $0x9f0] sm:$0xff]
    %v2290 = vld [vmem:[#allocation2 + $0xa00] sm:$0xff]
    %v2291 = vld [vmem:[#allocation2 + $0xa10] sm:$0xff]
    %v2292 = vld [vmem:[#allocation2 + $0xa20] sm:$0xff]
    %v2293 = vld [vmem:[#allocation2 + $0xa30] sm:$0xff]
    %v2294 = vld [vmem:[#allocation2 + $0xa40] sm:$0xff]
    %v2295 = vld [vmem:[#allocation2 + $0xa50] sm:$0xff]
    %v2296 = vld [vmem:[#allocation2 + $0xa60] sm:$0xff]
    %v2297 = vld [vmem:[#allocation2 + $0xa70] sm:$0xff]
    %v2298 = vld [vmem:[#allocation2 + $0xa80] sm:$0xff]
    %v2299 = vld [vmem:[#allocation2 + $0xa90] sm:$0xff]
    %v2300 = vld [vmem:[#allocation2 + $0xaa0] sm:$0xff]
    %v2301 = vld [vmem:[#allocation2 + $0xab0] ss:$0 sm:$0xff]
    %vm2302 = vcmask 261120
    %v2304 = vsel %vm2302, %v2278, 0
    %v2307 = vsel %vm2302, %v2280, 0
    %2309 = vmatprep.subr.mxu0 0.0
    %2310 = vmatpush1.msra.mxu0 %v2296
    %2311 = vmatprep.subr.mxu0 0.0
    %2312 = vmatpush1.msra.mxu0 %v2295
    %2313 = vmatprep.subr.mxu0 0.0
    %2314 = vmatpush1.msra.mxu0 %v2294
    %2315 = vmatprep.subr.mxu0 0.0
    %2316 = vmatpush1.msra.mxu0 %v2293
    %2317 = vmatprep.subr.mxu0 0.0
    %2318 = vmatpush1.msra.mxu0 %v2292
    %2319 = vmatprep.subr.mxu0 0.0
    %2320 = vmatpush1.msra.mxu0 %v2291
    %2321 = vmatprep.subr.mxu0 0.0
    %2322 = vmatpush1.msra.mxu0 %v2290
    %2323 = vmatprep.subr.mxu0 0.0
    %2324 = vmatpush1.msra.mxu0 %v2289
    %2325 = vmatprep.subr.mxu0 0.0
    %2326 = vmatpush1.msra.mxu0 %v2288
    %2327 = vmatprep.subr.mxu0 0.0
    %2328 = vmatpush1.msra.mxu0 %v2287
    %2329 = vmatprep.subr.mxu0 0.0
    %2330 = vmatpush1.msra.mxu0 %v2286
    %2331 = vmatprep.subr.mxu0 0.0
    %2332 = vmatpush1.msra.mxu0 %v2285
    %2333 = vmatprep.subr.mxu0 0.0
    %2334 = vmatpush1.msra.mxu0 %v2284
    %2335 = vmatprep.subr.mxu0 0.0
    %2336 = vmatpush1.msra.mxu0 %v2283
    %2337 = vmatprep.subr.mxu0 0.0
    %2338 = vmatpush1.msra.mxu0 %v2282
    %2339 = vmatprep.subr.mxu0 0.0
    %2340 = vmatpush1.msra.mxu0 %v2281
    %2341 = vmatprep.subr.mxu0 0.0
    %2342 = vmatpush2.msra.mxu0 0.0
    %2343 = vmatprep.subr.mxu0 0.0
    %2344 = vmatpush2.msra.mxu0 0.0
    %2345 = vmatprep.subr.mxu0 0.0
    %2346 = vmatpush2.msra.mxu0 0.0
    %2347 = vmatprep.subr.mxu0 0.0
    %2348 = vmatpush2.msra.mxu0 0.0
    %2349 = vmatprep.subr.mxu0 0.0
    %2350 = vmatpush2.msra.mxu0 0.0
    %2351 = vmatprep.subr.mxu0 0.0
    %2352 = vmatpush2.msra.mxu0 0.0
    %2353 = vmatprep.subr.mxu0 0.0
    %2354 = vmatpush2.msra.mxu0 0.0
    %2355 = vmatprep.subr.mxu0 0.0
    %2356 = vmatpush2.msra.mxu0 0.0
    %2357 = vmatprep.subr.mxu0 0.0
    %2358 = vmatpush2.msra.mxu0 0.0
    %2359 = vmatprep.subr.mxu0 0.0
    %2360 = vmatpush2.msra.mxu0 0.0
    %2361 = vmatprep.subr.mxu0 0.0
    %2362 = vmatpush2.msra.mxu0 0.0
    %2363 = vmatprep.subr.mxu0 0.0
    %2364 = vmatpush2.msra.mxu0 0.0
    %2365 = vmatprep.subr.mxu0 0.0
    %2366 = vmatpush2.msra.mxu0 %v2300
    %2367 = vmatprep.subr.mxu0 0.0
    %2368 = vmatpush2.msra.mxu0 %v2299
    %2369 = vmatprep.subr.mxu0 0.0
    %2370 = vmatpush2.msra.mxu0 %v2298
    %2371 = vmatprep.subr.mxu0 0.0
    %2372 = vmatpush2.msra.mxu0 %v2297
    %2373 = vmatprep.mubr.f32.mxu0 %v2304
    %2374 = vmatmul.mubr.f32.gmra.mxu0 %v2277
    %v2375 = vpop.f32.mrf.mxu0
    %v2376 = vadd.f32 %v2301, %v2375
    %v2377 = vpop.f32.mrf.mxu0
    %2378 = vmatprep.mubr.f32.mxu0 %v2307
    %2379 = vmatmul.mubr.f32.gmra.mxu0 %v2279
    %v2380 = vpop.f32.mrf.mxu0
    %v2381 = vadd.f32 %v2301, %v2380
    %v2382 = vpop.f32.mrf.mxu0
    %2383 = vdwg.mxu0
    %v2384 = vadd.f32 %v2376, %v2153
    %v2385 = vadd.f32 %v2381, %v2154
    %v2386 = vld [vmem:[#allocation2 + $0x8f0] ss:$0 sm:$0xff]
    %v2387 = vld [vmem:[#allocation2 + $0x900] ss:$0 sm:$0xff]
    %v2388 = vsel %vm27, %v2384, 0.0
    %2389 = vadd.xlane.f32.xlu0 %v2388
    %v2390 = vpop.xlane.xlu0 %2389
    %v2391 = vsel %vm27, %v2385, 0.0
    %2392 = vadd.xlane.f32.xlu0 %v2391
    %v2393 = vpop.xlane.xlu0 %2392
    %v2394 = vmul.f32 %v2390, %v2130
    %v2395 = vmul.f32 %v2393, %v2130
    %v2396 = vsub.f32 %v2384, %v2394
    %v2397 = vsub.f32 %v2385, %v2395
    %v2398 = vmul.f32 %v2396, %v2396
    %v2399 = vmul.f32 %v2397, %v2397
    %v2400 = vsel %vm27, %v2398, 0.0
    %2401 = vadd.xlane.f32.xlu0 %v2400
    %v2402 = vpop.xlane.xlu0 %2401
    %v2403 = vsel %vm27, %v2399, 0.0
    %2404 = vadd.xlane.f32.xlu0 %v2403
    %v2405 = vpop.xlane.xlu0 %2404
    %v2406 = vmul.f32 %v2402, %v2130
    %v2407 = vmul.f32 %v2405, %v2130
    %v2408 = vadd.f32 %v2406, 1e-05
    %v2409 = vadd.f32 %v2407, 1e-05
    %v2410 = vrsqrt.pop %v2408
    %v2411 = vrsqrt.pop %v2409
    %v2412 = vmul.f32 %v2396, %v2410
    %v2413 = vmul.f32 %v2397, %v2411
    %v2414 = vmul.f32 %v2412, %v2386
    %v2415 = vmul.f32 %v2413, %v2386
    %v2416 = vadd.f32 %v2414, %v2387
    %v2417 = vadd.f32 %v2415, %v2387
    %v2418 = vsel %vm27, %v2416, 0.0
    %v2419 = vrot.slane %v2418, 4
    %v2420 = vadd.f32 %v2418, %v2419
    %v2421 = vrot.slane %v2420, 2
    %v2422 = vadd.f32 %v2420, %v2421
    %v2423 = vrot.slane %v2422, 1
    %v2424 = vadd.f32 %v2422, %v2423
    %v2425 = vmul.f32 %v2424, %v35
    %v2426 = vsel %vm27, %v2417, 0.0
    %v2427 = vrot.slane %v2426, 4
    %v2428 = vadd.f32 %v2426, %v2427
    %v2429 = vrot.slane %v2428, 2
    %v2430 = vadd.f32 %v2428, %v2429
    %v2431 = vrot.slane %v2430, 1
    %v2432 = vadd.f32 %v2430, %v2431
    %v2433 = vmul.f32 %v2432, %v35
    %v2434 = vsel %vm45, %v2425, %v2433
    %v2435 = vld [vmem:[#allocation2 + $0xac0] sm:$0xff]
    %v2436 = vld [vmem:[#allocation2 + $0xad0] sm:$0xff]
    %v2437 = vld [vmem:[#allocation2 + $0xae0] sm:$0xff]
    %v2438 = vld [vmem:[#allocation2 + $0xaf0] sm:$0xff]
    %v2439 = vld [vmem:[#allocation2 + $0xb00] sm:$0xff]
    %v2440 = vld [vmem:[#allocation2 + $0xb10] ss:$0 sm:$0xff]
    %v2442 = vsel %vm27, %v2434, 0
    %2444 = vmatprep.subr.mxu0 0.0
    %2445 = vmatpush1.msra.mxu0 0.0
    %2446 = vmatprep.subr.mxu0 0.0
    %2447 = vmatpush1.msra.mxu0 0.0
    %2448 = vmatprep.subr.mxu0 0.0
    %2449 = vmatpush1.msra.mxu0 0.0
    %2450 = vmatprep.subr.mxu0 0.0
    %2451 = vmatpush1.msra.mxu0 0.0
    %2452 = vmatprep.subr.mxu0 0.0
    %2453 = vmatpush1.msra.mxu0 0.0
    %2454 = vmatprep.subr.mxu0 0.0
    %2455 = vmatpush1.msra.mxu0 0.0
    %2456 = vmatprep.subr.mxu0 0.0
    %2457 = vmatpush1.msra.mxu0 0.0
    %2458 = vmatprep.subr.mxu0 0.0
    %2459 = vmatpush1.msra.mxu0 0.0
    %2460 = vmatprep.subr.mxu0 0.0
    %2461 = vmatpush1.msra.mxu0 0.0
    %2462 = vmatprep.subr.mxu0 0.0
    %2463 = vmatpush1.msra.mxu0 0.0
    %2464 = vmatprep.subr.mxu0 0.0
    %2465 = vmatpush1.msra.mxu0 0.0
    %2466 = vmatprep.subr.mxu0 0.0
    %2467 = vmatpush1.msra.mxu0 %v2439
    %2468 = vmatprep.subr.mxu0 0.0
    %2469 = vmatpush1.msra.mxu0 %v2438
    %2470 = vmatprep.subr.mxu0 0.0
    %2471 = vmatpush1.msra.mxu0 %v2437
    %2472 = vmatprep.subr.mxu0 0.0
    %2473 = vmatpush1.msra.mxu0 %v2436
    %2474 = vmatprep.subr.mxu0 0.0
    %2475 = vmatpush1.msra.mxu0 %v2435
    %2476 = vmatprep.subr.mxu0 0.0
    %2477 = vmatpush2.msra.mxu0 0.0
    %2478 = vmatprep.subr.mxu0 0.0
    %2479 = vmatpush2.msra.mxu0 0.0
    %2480 = vmatprep.subr.mxu0 0.0
    %2481 = vmatpush2.msra.mxu0 0.0
    %2482 = vmatprep.subr.mxu0 0.0
    %2483 = vmatpush2.msra.mxu0 0.0
    %2484 = vmatprep.subr.mxu0 0.0
    %2485 = vmatpush2.msra.mxu0 0.0
    %2486 = vmatprep.subr.mxu0 0.0
    %2487 = vmatpush2.msra.mxu0 0.0
    %2488 = vmatprep.subr.mxu0 0.0
    %2489 = vmatpush2.msra.mxu0 0.0
    %2490 = vmatprep.subr.mxu0 0.0
    %2491 = vmatpush2.msra.mxu0 0.0
    %2492 = vmatprep.subr.mxu0 0.0
    %2493 = vmatpush2.msra.mxu0 0.0
    %2494 = vmatprep.subr.mxu0 0.0
    %2495 = vmatpush2.msra.mxu0 0.0
    %2496 = vmatprep.subr.mxu0 0.0
    %2497 = vmatpush2.msra.mxu0 0.0
    %2498 = vmatprep.subr.mxu0 0.0
    %2499 = vmatpush2.msra.mxu0 0.0
    %2500 = vmatprep.subr.mxu0 0.0
    %2501 = vmatpush2.msra.mxu0 0.0
    %2502 = vmatprep.subr.mxu0 0.0
    %2503 = vmatpush2.msra.mxu0 0.0
    %2504 = vmatprep.subr.mxu0 0.0
    %2505 = vmatpush2.msra.mxu0 0.0
    %2506 = vmatprep.subr.mxu0 0.0
    %2507 = vmatpush2.msra.mxu0 0.0
    %2508 = vmatprep.mubr.f32.mxu0 0.0
    %2509 = vmatmul.mubr.f32.gmra.mxu0 %v2442
    %v2510 = vpop.f32.mrf.mxu0
    %v2511 = vadd.f32 %v2440, %v2510
    %v2512 = vpop.f32.mrf.mxu0
    %2513 = vdwg.mxu0
    %v2514 = vmul.f32 %v2511, 0.5
    %v2515 = vtanh.pop %v2514
    %v2516 = vmul.f32 %v2515, 0.5
    %v2517 = vadd.f32 %v2516, 0.5
    %v2518 = vmul.f32 %v2511, %v2517
    %v2519 = vld [vmem:[#allocation2 + $0xb20] sm:$0xff]
    %v2520 = vld [vmem:[#allocation2 + $0xb30] sm:$0xff]
    %v2521 = vld [vmem:[#allocation2 + $0xb40] sm:$0xff]
    %v2522 = vld [vmem:[#allocation2 + $0xb50] sm:$0xff]
    %v2523 = vld [vmem:[#allocation2 + $0xb60] sm:$0xff]
    %v2524 = vld [vmem:[#allocation2 + $0xb70] sm:$0xff]
    %v2525 = vld [vmem:[#allocation2 + $0xb80] sm:$0xff]
    %v2526 = vld [vmem:[#allocation2 + $0xb90] sm:$0xff]
    %v2527 = vld [vmem:[#allocation2 + $0xba0] sm:$0xff]
    %v2528 = vld [vmem:[#allocation2 + $0xbb0] sm:$0xff]
    %v2529 = vld [vmem:[#allocation2 + $0xbc0] ss:$0 sm:$0xff]
    %v2531 = vsel %vm901, %v2518, 0
    %2533 = vmatprep.subr.mxu0 0.0
    %2534 = vmatpush1.msra.mxu0 0.0
    %2535 = vmatprep.subr.mxu0 0.0
    %2536 = vmatpush1.msra.mxu0 0.0
    %2537 = vmatprep.subr.mxu0 0.0
    %2538 = vmatpush1.msra.mxu0 0.0
    %2539 = vmatprep.subr.mxu0 0.0
    %2540 = vmatpush1.msra.mxu0 0.0
    %2541 = vmatprep.subr.mxu0 0.0
    %2542 = vmatpush1.msra.mxu0 0.0
    %2543 = vmatprep.subr.mxu0 0.0
    %2544 = vmatpush1.msra.mxu0 0.0
    %2545 = vmatprep.subr.mxu0 0.0
    %2546 = vmatpush1.msra.mxu0 %v2528
    %2547 = vmatprep.subr.mxu0 0.0
    %2548 = vmatpush1.msra.mxu0 %v2527
    %2549 = vmatprep.subr.mxu0 0.0
    %2550 = vmatpush1.msra.mxu0 %v2526
    %2551 = vmatprep.subr.mxu0 0.0
    %2552 = vmatpush1.msra.mxu0 %v2525
    %2553 = vmatprep.subr.mxu0 0.0
    %2554 = vmatpush1.msra.mxu0 %v2524
    %2555 = vmatprep.subr.mxu0 0.0
    %2556 = vmatpush1.msra.mxu0 %v2523
    %2557 = vmatprep.subr.mxu0 0.0
    %2558 = vmatpush1.msra.mxu0 %v2522
    %2559 = vmatprep.subr.mxu0 0.0
    %2560 = vmatpush1.msra.mxu0 %v2521
    %2561 = vmatprep.subr.mxu0 0.0
    %2562 = vmatpush1.msra.mxu0 %v2520
    %2563 = vmatprep.subr.mxu0 0.0
    %2564 = vmatpush1.msra.mxu0 %v2519
    %2565 = vmatprep.subr.mxu0 0.0
    %2566 = vmatpush2.msra.mxu0 0.0
    %2567 = vmatprep.subr.mxu0 0.0
    %2568 = vmatpush2.msra.mxu0 0.0
    %2569 = vmatprep.subr.mxu0 0.0
    %2570 = vmatpush2.msra.mxu0 0.0
    %2571 = vmatprep.subr.mxu0 0.0
    %2572 = vmatpush2.msra.mxu0 0.0
    %2573 = vmatprep.subr.mxu0 0.0
    %2574 = vmatpush2.msra.mxu0 0.0
    %2575 = vmatprep.subr.mxu0 0.0
    %2576 = vmatpush2.msra.mxu0 0.0
    %2577 = vmatprep.subr.mxu0 0.0
    %2578 = vmatpush2.msra.mxu0 0.0
    %2579 = vmatprep.subr.mxu0 0.0
    %2580 = vmatpush2.msra.mxu0 0.0
    %2581 = vmatprep.subr.mxu0 0.0
    %2582 = vmatpush2.msra.mxu0 0.0
    %2583 = vmatprep.subr.mxu0 0.0
    %2584 = vmatpush2.msra.mxu0 0.0
    %2585 = vmatprep.subr.mxu0 0.0
    %2586 = vmatpush2.msra.mxu0 0.0
    %2587 = vmatprep.subr.mxu0 0.0
    %2588 = vmatpush2.msra.mxu0 0.0
    %2589 = vmatprep.subr.mxu0 0.0
    %2590 = vmatpush2.msra.mxu0 0.0
    %2591 = vmatprep.subr.mxu0 0.0
    %2592 = vmatpush2.msra.mxu0 0.0
    %2593 = vmatprep.subr.mxu0 0.0
    %2594 = vmatpush2.msra.mxu0 0.0
    %2595 = vmatprep.subr.mxu0 0.0
    %2596 = vmatpush2.msra.mxu0 0.0
    %2597 = vmatprep.mubr.f32.mxu0 0.0
    %2598 = vmatmul.mubr.f32.gmra.mxu0 %v2531
    %v2599 = vpop.f32.mrf.mxu0
    %v2600 = vadd.f32 %v2529, %v2599
    %v2601 = vpop.f32.mrf.mxu0
    %2602 = vdwg.mxu0
    %2603 = vst.msk [vmem:[%s2 + $0x8] sm:$0x3] %vm47, %v2600
    // Predicated region
    $region14: #{forward.1} parent=1 // pred_check
      _
    $region15: #{forward.1} parent=1 // pred_check_branch
      %2605 = sbr.rel (0) target = $region17
    $region16: #{forward.1} parent=1 // pred_region
      _
    $region17: #{forward.1} parent=1 // pred_fallthru
      _
    // Predicated region
    $region18: #{forward.1} parent=1 // pred_check
      _
    $region19: #{forward.1} parent=1 // pred_check_branch
      %2607 = sbr.rel (0) target = $region21
    $region20: #{forward.1} parent=1 // pred_region
      _
    $region21: #{forward.1} parent=1 // pred_fallthru
      _
    %2608 = vsyncpa [#allocation3], 1

</llo_original>
